<compile_context>
chip_gen: v7x
topology: tpu7x:2x2x1
jax: 0.10.0
libtpu: 0.0.40
codegen_flags: <defaults>
</compile_context>

<pallas_src>
import functools

import jax
import jax.numpy as jnp
from jax.experimental import pallas as pl
from jax.experimental.pallas import tpu as pltpu


# ---------------------------------------------------------------------------
# Fused kernel: encoder LSTM stack -> decoder LSTM stack -> output head.
# ---------------------------------------------------------------------------
def _fused_seq2seq_kernel(*refs, n_layers, t_enc, t_dec, b_pad, hidden,
                          out_dim, min_std):
    H = hidden
    n_w = 3 * n_layers

    enc_x_ref = refs[0]                                    # (t_enc*b_pad, D_enc)
    dec_x_ref = refs[1]                                    # (t_dec*b_pad, D_dec)
    enc_w = [refs[2 + 3 * l: 5 + 3 * l] for l in range(n_layers)]
    dec_w = [refs[2 + n_w + 3 * l: 5 + n_w + 3 * l] for l in range(n_layers)]
    head_w_ref = refs[2 + 2 * n_w]                         # (H, 2*O)
    head_b_ref = refs[3 + 2 * n_w]                         # (1, 2*O)
    out_ref = refs[4 + 2 * n_w]                            # (t_dec*b_pad, 2*O)
    zx_s = refs[5 + 2 * n_w]                               # (TB_max, 4H) scratch
    y_s = refs[6 + 2 * n_w]                                # (TB_max, H)  scratch

    def run_stack(x_ref, t_steps, weights, state):
        """Multi-layer LSTM over a time-major flattened sequence.

        `state` is a list of (h, c) values (one per layer).  Layer outputs for
        all time steps are left in y_s[:t_steps*b_pad].  Returns final states.
        """
        n_rows = t_steps * b_pad
        new_state = []
        for l, (w_ih_ref, w_hh_ref, b_ref) in enumerate(weights):
            # Hoisted input projection: one batched MXU matmul for all steps.
            x_in = x_ref[...] if l == 0 else y_s[0:n_rows, :]
            zx_s[0:n_rows, :] = (
                jnp.dot(x_in, w_ih_ref[...],
                        preferred_element_type=jnp.float32) + b_ref[...])

            w_hh = w_hh_ref[...]
            h, c = state[l]
            for t in range(t_steps):          # static unroll; aligned slices
                r = t * b_pad
                z = zx_s[r:r + b_pad, :] + jnp.dot(
                    h, w_hh, preferred_element_type=jnp.float32)
                # PyTorch gate order: i, f, g, o
                i_g = jax.nn.sigmoid(z[:, 0 * H:1 * H])
                f_g = jax.nn.sigmoid(z[:, 1 * H:2 * H])
                g_g = jnp.tanh(z[:, 2 * H:3 * H])
                o_g = jax.nn.sigmoid(z[:, 3 * H:4 * H])
                c = f_g * c + i_g * g_g
                h = o_g * jnp.tanh(c)
                y_s[r:r + b_pad, :] = h
            new_state.append((h, c))
        return new_state

    zeros = jnp.zeros((b_pad, H), jnp.float32)
    enc_final = run_stack(enc_x_ref, t_enc, enc_w, [(zeros, zeros)] * n_layers)
    run_stack(dec_x_ref, t_dec, dec_w, enc_final)

    # Merged mean/std head: single matmul, single lane-masked softplus + store.
    n_out = t_dec * b_pad
    y = y_s[0:n_out, :]
    ms = jnp.dot(y, head_w_ref[...],
                 preferred_element_type=jnp.float32) + head_b_ref[...]
    sp = jnp.maximum(ms, 0.0) + jnp.log1p(jnp.exp(-jnp.abs(ms)))  # softplus
    col = jax.lax.broadcasted_iota(jnp.int32, ms.shape, 1)
    out_ref[...] = jnp.where(col < out_dim, ms,
                             min_std + (1.0 - min_std) * sp)


# ---------------------------------------------------------------------------
# Wrapper (weight prep + single pallas_call).
# ---------------------------------------------------------------------------
def _to_time_major_flat(x_btd, b_pad):
    B, T, D = x_btd.shape
    x = jnp.transpose(x_btd, (1, 0, 2)).astype(jnp.float32)   # (T, B, D)
    if b_pad > B:
        x = jnp.pad(x, ((0, 0), (0, b_pad - B), (0, 0)))
    return x.reshape(T * b_pad, D)


def _prep_lstm_weights(layers, hidden):
    flat = []
    for w_ih, w_hh, b_ih, b_hh in layers:
        flat += [
            jnp.asarray(w_ih, jnp.float32).T,                    # (D, 4H)
            jnp.asarray(w_hh, jnp.float32).T,                    # (H, 4H)
            (b_ih + b_hh).reshape(1, 4 * hidden).astype(jnp.float32),
        ]
    return flat


def lstm_seq2seq_forward(params, past_x, past_y, future_x,
                         hidden_size=32, lstm_layers=2, min_std=0.05):
    B, t_past, _ = past_x.shape
    t_fut = future_x.shape[1]
    out_size = params["mean_w"].shape[0]
    H = hidden_size
    b_pad = ((B + 7) // 8) * 8            # pad batch to the 8-sublane tile

    enc_x = _to_time_major_flat(
        jnp.concatenate([past_x, past_y], axis=-1), b_pad)
    dec_x = _to_time_major_flat(future_x, b_pad)

    head_w = jnp.concatenate([params["mean_w"], params["std_w"]],
                             axis=0).T.astype(jnp.float32)           # (H, 2O)
    head_b = jnp.concatenate([params["mean_b"], params["std_b"]],
                             axis=0).reshape(1, 2 * out_size).astype(jnp.float32)

    inputs = ([enc_x, dec_x]
              + _prep_lstm_weights(params["encoder"], H)
              + _prep_lstm_weights(params["decoder"], H)
              + [head_w, head_b])

    tb_max = max(t_past, t_fut) * b_pad
    kernel = functools.partial(
        _fused_seq2seq_kernel,
        n_layers=lstm_layers, t_enc=t_past, t_dec=t_fut, b_pad=b_pad,
        hidden=H, out_dim=out_size, min_std=float(min_std))

    vmem = pl.BlockSpec(memory_space=pltpu.MemorySpace.VMEM)
    out_flat = pl.pallas_call(
        kernel,
        out_shape=jax.ShapeDtypeStruct((t_fut * b_pad, 2 * out_size),
                                       jnp.float32),
        in_specs=[vmem] * len(inputs),
        out_specs=vmem,
        scratch_shapes=[
            pltpu.VMEM((tb_max, 4 * H), jnp.float32),  # hoisted x-projections
            pltpu.VMEM((tb_max, H), jnp.float32),      # per-layer outputs
        ],
    )(*inputs)

    out = out_flat.reshape(t_fut, b_pad, 2 * out_size)[:, :B, :]
    out = jnp.transpose(out, (1, 0, 2))               # (B, T_fut, 2O)
    mean = out[..., :out_size]
    sigma = out[..., out_size:]
    # TODO(synk): torch.distributions.Normal has no Pallas equivalent;
    # the distribution is represented by its (mean, sigma) arrays.
    return (mean, sigma), {}


# ---------------------------------------------------------------------------
# Parameter init (same uniform(-1/sqrt(H), 1/sqrt(H)) as PyTorch LSTM/Linear).
# ---------------------------------------------------------------------------
def init_params(key, input_size, output_size, hidden_size, lstm_layers):
    H = hidden_size
    bound = 1.0 / jnp.sqrt(H)

    def u(key, shape):
        return jax.random.uniform(key, shape, jnp.float32, -bound, bound)

    keys = iter(jax.random.split(key, 64))

    def lstm_stack(in_size):
        layers = []
        for l in range(lstm_layers):
            d = in_size if l == 0 else H
            layers.append((
                u(next(keys), (4 * H, d)),
                u(next(keys), (4 * H, H)),
                u(next(keys), (4 * H,)),
                u(next(keys), (4 * H,)),
            ))
        return layers

    return {
        "encoder": lstm_stack(input_size + output_size),
        "decoder": lstm_stack(input_size),
        "mean_w": u(next(keys), (output_size, H)),
        "mean_b": u(next(keys), (output_size,)),
        "std_w": u(next(keys), (output_size, H)),
        "std_b": u(next(keys), (output_size,)),
    }


# ---------------------------------------------------------------------------
# Pure-JAX reference (for a correctness check).
# ---------------------------------------------------------------------------
def _ref_lstm_stack(x_btd, layers, h0, c0):
    x = x_btd
    hT, cT = [], []
    for l, (w_ih, w_hh, b_ih, b_hh) in enumerate(layers):
        H = w_hh.shape[1]

        def step(carry, xt):
            h, c = carry
            z = xt @ w_ih.T + h @ w_hh.T + b_ih + b_hh
            i, f, g, o = (jax.nn.sigmoid(z[:, :H]),
                          jax.nn.sigmoid(z[:, H:2 * H]),
                          jnp.tanh(z[:, 2 * H:3 * H]),
                          jax.nn.sigmoid(z[:, 3 * H:]))
            c = f * c + i * g
            h = o * jnp.tanh(c)
            return (h, c), h

        (h_f, c_f), ys = jax.lax.scan(step, (h0[l], c0[l]),
                                      jnp.transpose(x, (1, 0, 2)))
        x = jnp.transpose(ys, (1, 0, 2))
        hT.append(h_f)
        cT.append(c_f)
    return x, jnp.stack(hT), jnp.stack(cT)


def _ref_forward(params, past_x, past_y, future_x, H=32, L=2, min_std=0.05):
    B = past_x.shape[0]
    x = jnp.concatenate([past_x, past_y], -1)
    zeros = jnp.zeros((L, B, H), jnp.float32)
    _, h_out, cell = _ref_lstm_stack(x, params["encoder"], zeros, zeros)
    outs, _, _ = _ref_lstm_stack(future_x, params["decoder"], h_out, cell)
    mean = outs @ params["mean_w"].T + params["mean_b"]
    log_sigma = outs @ params["std_w"].T + params["std_b"]
    sigma = min_std + (1 - min_std) * jax.nn.softplus(log_sigma)
    return mean, sigma


if __name__ == "__main__":
    input_size, output_size = 4, 2
    hidden_size, lstm_layers = 32, 2
    B, T_past, T_future = 2, 8, 8

    key = jax.random.PRNGKey(0)
    kp, kx1, ky1, kx2 = jax.random.split(key, 4)
    params = init_params(kp, input_size, output_size, hidden_size, lstm_layers)

    past_x = jax.random.normal(kx1, (B, T_past, input_size), jnp.float32)
    past_y = jax.random.normal(ky1, (B, T_past, output_size), jnp.float32)
    future_x = jax.random.normal(kx2, (B, T_future, input_size), jnp.float32)

    fwd = jax.jit(functools.partial(
        lstm_seq2seq_forward, hidden_size=hidden_size,
        lstm_layers=lstm_layers, min_std=0.05))
    (mean, sigma), _ = fwd(params, past_x, past_y, future_x)
    mean = jax.block_until_ready(mean)
    sigma = jax.block_until_ready(sigma)

    ref_mean, ref_sigma = _ref_forward(params, past_x, past_y, future_x,
                                       H=hidden_size, L=lstm_layers)
    assert mean.shape == (B, T_future, output_size)
    assert sigma.shape == (B, T_future, output_size)
    assert jnp.allclose(mean, ref_mean, atol=1e-4, rtol=1e-4)
    assert jnp.allclose(sigma, ref_sigma, atol=1e-4, rtol=1e-4)

    print("KERNEL_OK")
</pallas_src>

<mosaic_0001>
module attributes {stable_mosaic.version = 11 : i64} {
  func.func @_fused_seq2seq_kernel(%arg0: memref<64x6xf32, #tpu.memory_space<vmem>>, %arg1: memref<64x4xf32, #tpu.memory_space<vmem>>, %arg2: memref<6x128xf32, #tpu.memory_space<vmem>>, %arg3: memref<32x128xf32, #tpu.memory_space<vmem>>, %arg4: memref<1x128xf32, #tpu.memory_space<vmem>>, %arg5: memref<32x128xf32, #tpu.memory_space<vmem>>, %arg6: memref<32x128xf32, #tpu.memory_space<vmem>>, %arg7: memref<1x128xf32, #tpu.memory_space<vmem>>, %arg8: memref<4x128xf32, #tpu.memory_space<vmem>>, %arg9: memref<32x128xf32, #tpu.memory_space<vmem>>, %arg10: memref<1x128xf32, #tpu.memory_space<vmem>>, %arg11: memref<32x128xf32, #tpu.memory_space<vmem>>, %arg12: memref<32x128xf32, #tpu.memory_space<vmem>>, %arg13: memref<1x128xf32, #tpu.memory_space<vmem>>, %arg14: memref<32x4xf32, #tpu.memory_space<vmem>>, %arg15: memref<1x4xf32, #tpu.memory_space<vmem>>, %arg16: memref<64x4xf32, #tpu.memory_space<vmem>>, %arg17: memref<64x128xf32, #tpu.memory_space<vmem>>, %arg18: memref<64x32xf32, #tpu.memory_space<vmem>>) attributes {dimension_semantics = [], scalar_prefetch = 0 : i64, scratch_operands = 2 : i64, tpu.core_type = #tpu.core_type<tc>} {
    %cst = arith.constant 0.000000e+00 : f32
    %0 = vector.broadcast %cst : f32 to vector<8x32xf32>
    %c0 = arith.constant 0 : index
    %c0_0 = arith.constant 0 : index
    %1 = vector.load %arg0[%c0, %c0_0] : memref<64x6xf32, #tpu.memory_space<vmem>>, vector<64x6xf32>
    %c0_1 = arith.constant 0 : index
    %c0_2 = arith.constant 0 : index
    %2 = vector.load %arg2[%c0_1, %c0_2] : memref<6x128xf32, #tpu.memory_space<vmem>>, vector<6x128xf32>
    %cst_3 = arith.constant dense<0.000000e+00> : vector<64x128xf32>
    %3 = tpu.matmul %1, %2, %cst_3 {dimension_numbers = #tpu.dot_dimension_numbers<[1], [0], [0], [1], [0, 0, 1, 1], [], []>} : vector<64x6xf32>, vector<6x128xf32>, vector<64x128xf32> -> vector<64x128xf32>
    %c0_4 = arith.constant 0 : index
    %c0_5 = arith.constant 0 : index
    %4 = vector.load %arg4[%c0_4, %c0_5] : memref<1x128xf32, #tpu.memory_space<vmem>>, vector<1x128xf32>
    %5 = vector.broadcast %4 : vector<1x128xf32> to vector<64x128xf32>
    %6 = arith.addf %3, %5 : vector<64x128xf32>
    %c0_6 = arith.constant 0 : index
    %c0_7 = arith.constant 0 : index
    %7 = vector.load %arg17[%c0_6, %c0_7] : memref<64x128xf32, #tpu.memory_space<vmem>>, vector<64x128xf32>
    tpu.vector_store %arg17[%c0_6, %c0_7], %6 {strides = array<i32>} : memref<64x128xf32, #tpu.memory_space<vmem>>, vector<64x128xf32>,
    %c0_8 = arith.constant 0 : index
    %c0_9 = arith.constant 0 : index
    %8 = vector.load %arg3[%c0_8, %c0_9] : memref<32x128xf32, #tpu.memory_space<vmem>>, vector<32x128xf32>
    %c0_10 = arith.constant 0 : index
    %c0_11 = arith.constant 0 : index
    %9 = vector.load %arg17[%c0_10, %c0_11] : memref<64x128xf32, #tpu.memory_space<vmem>>, vector<8x128xf32>
    %cst_12 = arith.constant dense<0.000000e+00> : vector<8x128xf32>
    %10 = tpu.matmul %0, %8, %cst_12 {dimension_numbers = #tpu.dot_dimension_numbers<[1], [0], [0], [1], [0, 0, 1, 1], [], []>} : vector<8x32xf32>, vector<32x128xf32>, vector<8x128xf32> -> vector<8x128xf32>
    %11 = arith.addf %9, %10 : vector<8x128xf32>
    %12 = vector.extract_strided_slice %11 {offsets = [0, 0], sizes = [8, 32], strides = [1, 1]} : vector<8x128xf32> to vector<8x32xf32>
    %13 = arith.negf %12 : vector<8x32xf32>
    %14 = math.exp %13 : vector<8x32xf32>
    %cst_13 = arith.constant 1.000000e+00 : f32
    %15 = vector.broadcast %cst_13 : f32 to vector<8x32xf32>
    %16 = arith.addf %15, %14 : vector<8x32xf32>
    %17 = arith.divf %15, %16 : vector<8x32xf32>
    %18 = vector.extract_strided_slice %11 {offsets = [0, 32], sizes = [8, 32], strides = [1, 1]} : vector<8x128xf32> to vector<8x32xf32>
    %19 = arith.negf %18 : vector<8x32xf32>
    %20 = math.exp %19 : vector<8x32xf32>
    %cst_14 = arith.constant 1.000000e+00 : f32
    %21 = vector.broadcast %cst_14 : f32 to vector<8x32xf32>
    %22 = arith.addf %21, %20 : vector<8x32xf32>
    %23 = arith.divf %21, %22 : vector<8x32xf32>
    %24 = vector.extract_strided_slice %11 {offsets = [0, 64], sizes = [8, 32], strides = [1, 1]} : vector<8x128xf32> to vector<8x32xf32>
    %25 = math.tanh %24 : vector<8x32xf32>
    %26 = vector.extract_strided_slice %11 {offsets = [0, 96], sizes = [8, 32], strides = [1, 1]} : vector<8x128xf32> to vector<8x32xf32>
    %27 = arith.negf %26 : vector<8x32xf32>
    %28 = math.exp %27 : vector<8x32xf32>
    %cst_15 = arith.constant 1.000000e+00 : f32
    %29 = vector.broadcast %cst_15 : f32 to vector<8x32xf32>
    %30 = arith.addf %29, %28 : vector<8x32xf32>
    %31 = arith.divf %29, %30 : vector<8x32xf32>
    %32 = arith.mulf %23, %0 : vector<8x32xf32>
    %33 = arith.mulf %17, %25 : vector<8x32xf32>
    %34 = arith.addf %32, %33 : vector<8x32xf32>
    %35 = math.tanh %34 : vector<8x32xf32>
    %36 = arith.mulf %31, %35 : vector<8x32xf32>
    %c0_16 = arith.constant 0 : index
    %c0_17 = arith.constant 0 : index
    %37 = vector.load %arg18[%c0_16, %c0_17] : memref<64x32xf32, #tpu.memory_space<vmem>>, vector<8x32xf32>
    tpu.vector_store %arg18[%c0_16, %c0_17], %36 {strides = array<i32>} : memref<64x32xf32, #tpu.memory_space<vmem>>, vector<8x32xf32>,
    %c8 = arith.constant 8 : index
    %c0_18 = arith.constant 0 : index
    %38 = vector.load %arg17[%c8, %c0_18] : memref<64x128xf32, #tpu.memory_space<vmem>>, vector<8x128xf32>
    %cst_19 = arith.constant dense<0.000000e+00> : vector<8x128xf32>
    %39 = tpu.matmul %36, %8, %cst_19 {dimension_numbers = #tpu.dot_dimension_numbers<[1], [0], [0], [1], [0, 0, 1, 1], [], []>} : vector<8x32xf32>, vector<32x128xf32>, vector<8x128xf32> -> vector<8x128xf32>
    %40 = arith.addf %38, %39 : vector<8x128xf32>
    %41 = vector.extract_strided_slice %40 {offsets = [0, 0], sizes = [8, 32], strides = [1, 1]} : vector<8x128xf32> to vector<8x32xf32>
    %42 = arith.negf %41 : vector<8x32xf32>
    %43 = math.exp %42 : vector<8x32xf32>
    %cst_20 = arith.constant 1.000000e+00 : f32
    %44 = vector.broadcast %cst_20 : f32 to vector<8x32xf32>
    %45 = arith.addf %44, %43 : vector<8x32xf32>
    %46 = arith.divf %44, %45 : vector<8x32xf32>
    %47 = vector.extract_strided_slice %40 {offsets = [0, 32], sizes = [8, 32], strides = [1, 1]} : vector<8x128xf32> to vector<8x32xf32>
    %48 = arith.negf %47 : vector<8x32xf32>
    %49 = math.exp %48 : vector<8x32xf32>
    %cst_21 = arith.constant 1.000000e+00 : f32
    %50 = vector.broadcast %cst_21 : f32 to vector<8x32xf32>
    %51 = arith.addf %50, %49 : vector<8x32xf32>
    %52 = arith.divf %50, %51 : vector<8x32xf32>
    %53 = vector.extract_strided_slice %40 {offsets = [0, 64], sizes = [8, 32], strides = [1, 1]} : vector<8x128xf32> to vector<8x32xf32>
    %54 = math.tanh %53 : vector<8x32xf32>
    %55 = vector.extract_strided_slice %40 {offsets = [0, 96], sizes = [8, 32], strides = [1, 1]} : vector<8x128xf32> to vector<8x32xf32>
    %56 = arith.negf %55 : vector<8x32xf32>
    %57 = math.exp %56 : vector<8x32xf32>
    %cst_22 = arith.constant 1.000000e+00 : f32
    %58 = vector.broadcast %cst_22 : f32 to vector<8x32xf32>
    %59 = arith.addf %58, %57 : vector<8x32xf32>
    %60 = arith.divf %58, %59 : vector<8x32xf32>
    %61 = arith.mulf %52, %34 : vector<8x32xf32>
    %62 = arith.mulf %46, %54 : vector<8x32xf32>
    %63 = arith.addf %61, %62 : vector<8x32xf32>
    %64 = math.tanh %63 : vector<8x32xf32>
    %65 = arith.mulf %60, %64 : vector<8x32xf32>
    %c8_23 = arith.constant 8 : index
    %c0_24 = arith.constant 0 : index
    %66 = vector.load %arg18[%c8_23, %c0_24] : memref<64x32xf32, #tpu.memory_space<vmem>>, vector<8x32xf32>
    tpu.vector_store %arg18[%c8_23, %c0_24], %65 {strides = array<i32>} : memref<64x32xf32, #tpu.memory_space<vmem>>, vector<8x32xf32>,
    %c16 = arith.constant 16 : index
    %c0_25 = arith.constant 0 : index
    %67 = vector.load %arg17[%c16, %c0_25] : memref<64x128xf32, #tpu.memory_space<vmem>>, vector<8x128xf32>
    %cst_26 = arith.constant dense<0.000000e+00> : vector<8x128xf32>
    %68 = tpu.matmul %65, %8, %cst_26 {dimension_numbers = #tpu.dot_dimension_numbers<[1], [0], [0], [1], [0, 0, 1, 1], [], []>} : vector<8x32xf32>, vector<32x128xf32>, vector<8x128xf32> -> vector<8x128xf32>
    %69 = arith.addf %67, %68 : vector<8x128xf32>
    %70 = vector.extract_strided_slice %69 {offsets = [0, 0], sizes = [8, 32], strides = [1, 1]} : vector<8x128xf32> to vector<8x32xf32>
    %71 = arith.negf %70 : vector<8x32xf32>
    %72 = math.exp %71 : vector<8x32xf32>
    %cst_27 = arith.constant 1.000000e+00 : f32
    %73 = vector.broadcast %cst_27 : f32 to vector<8x32xf32>
    %74 = arith.addf %73, %72 : vector<8x32xf32>
    %75 = arith.divf %73, %74 : vector<8x32xf32>
    %76 = vector.extract_strided_slice %69 {offsets = [0, 32], sizes = [8, 32], strides = [1, 1]} : vector<8x128xf32> to vector<8x32xf32>
    %77 = arith.negf %76 : vector<8x32xf32>
    %78 = math.exp %77 : vector<8x32xf32>
    %cst_28 = arith.constant 1.000000e+00 : f32
    %79 = vector.broadcast %cst_28 : f32 to vector<8x32xf32>
    %80 = arith.addf %79, %78 : vector<8x32xf32>
    %81 = arith.divf %79, %80 : vector<8x32xf32>
    %82 = vector.extract_strided_slice %69 {offsets = [0, 64], sizes = [8, 32], strides = [1, 1]} : vector<8x128xf32> to vector<8x32xf32>
    %83 = math.tanh %82 : vector<8x32xf32>
    %84 = vector.extract_strided_slice %69 {offsets = [0, 96], sizes = [8, 32], strides = [1, 1]} : vector<8x128xf32> to vector<8x32xf32>
    %85 = arith.negf %84 : vector<8x32xf32>
    %86 = math.exp %85 : vector<8x32xf32>
    %cst_29 = arith.constant 1.000000e+00 : f32
    %87 = vector.broadcast %cst_29 : f32 to vector<8x32xf32>
    %88 = arith.addf %87, %86 : vector<8x32xf32>
    %89 = arith.divf %87, %88 : vector<8x32xf32>
    %90 = arith.mulf %81, %63 : vector<8x32xf32>
    %91 = arith.mulf %75, %83 : vector<8x32xf32>
    %92 = arith.addf %90, %91 : vector<8x32xf32>
    %93 = math.tanh %92 : vector<8x32xf32>
    %94 = arith.mulf %89, %93 : vector<8x32xf32>
    %c16_30 = arith.constant 16 : index
    %c0_31 = arith.constant 0 : index
    %95 = vector.load %arg18[%c16_30, %c0_31] : memref<64x32xf32, #tpu.memory_space<vmem>>, vector<8x32xf32>
    tpu.vector_store %arg18[%c16_30, %c0_31], %94 {strides = array<i32>} : memref<64x32xf32, #tpu.memory_space<vmem>>, vector<8x32xf32>,
    %c24 = arith.constant 24 : index
    %c0_32 = arith.constant 0 : index
    %96 = vector.load %arg17[%c24, %c0_32] : memref<64x128xf32, #tpu.memory_space<vmem>>, vector<8x128xf32>
    %cst_33 = arith.constant dense<0.000000e+00> : vector<8x128xf32>
    %97 = tpu.matmul %94, %8, %cst_33 {dimension_numbers = #tpu.dot_dimension_numbers<[1], [0], [0], [1], [0, 0, 1, 1], [], []>} : vector<8x32xf32>, vector<32x128xf32>, vector<8x128xf32> -> vector<8x128xf32>
    %98 = arith.addf %96, %97 : vector<8x128xf32>
    %99 = vector.extract_strided_slice %98 {offsets = [0, 0], sizes = [8, 32], strides = [1, 1]} : vector<8x128xf32> to vector<8x32xf32>
    %100 = arith.negf %99 : vector<8x32xf32>
    %101 = math.exp %100 : vector<8x32xf32>
    %cst_34 = arith.constant 1.000000e+00 : f32
    %102 = vector.broadcast %cst_34 : f32 to vector<8x32xf32>
    %103 = arith.addf %102, %101 : vector<8x32xf32>
    %104 = arith.divf %102, %103 : vector<8x32xf32>
    %105 = vector.extract_strided_slice %98 {offsets = [0, 32], sizes = [8, 32], strides = [1, 1]} : vector<8x128xf32> to vector<8x32xf32>
    %106 = arith.negf %105 : vector<8x32xf32>
    %107 = math.exp %106 : vector<8x32xf32>
    %cst_35 = arith.constant 1.000000e+00 : f32
    %108 = vector.broadcast %cst_35 : f32 to vector<8x32xf32>
    %109 = arith.addf %108, %107 : vector<8x32xf32>
    %110 = arith.divf %108, %109 : vector<8x32xf32>
    %111 = vector.extract_strided_slice %98 {offsets = [0, 64], sizes = [8, 32], strides = [1, 1]} : vector<8x128xf32> to vector<8x32xf32>
    %112 = math.tanh %111 : vector<8x32xf32>
    %113 = vector.extract_strided_slice %98 {offsets = [0, 96], sizes = [8, 32], strides = [1, 1]} : vector<8x128xf32> to vector<8x32xf32>
    %114 = arith.negf %113 : vector<8x32xf32>
    %115 = math.exp %114 : vector<8x32xf32>
    %cst_36 = arith.constant 1.000000e+00 : f32
    %116 = vector.broadcast %cst_36 : f32 to vector<8x32xf32>
    %117 = arith.addf %116, %115 : vector<8x32xf32>
    %118 = arith.divf %116, %117 : vector<8x32xf32>
    %119 = arith.mulf %110, %92 : vector<8x32xf32>
    %120 = arith.mulf %104, %112 : vector<8x32xf32>
    %121 = arith.addf %119, %120 : vector<8x32xf32>
    %122 = math.tanh %121 : vector<8x32xf32>
    %123 = arith.mulf %118, %122 : vector<8x32xf32>
    %c24_37 = arith.constant 24 : index
    %c0_38 = arith.constant 0 : index
    %124 = vector.load %arg18[%c24_37, %c0_38] : memref<64x32xf32, #tpu.memory_space<vmem>>, vector<8x32xf32>
    tpu.vector_store %arg18[%c24_37, %c0_38], %123 {strides = array<i32>} : memref<64x32xf32, #tpu.memory_space<vmem>>, vector<8x32xf32>,
    %c32 = arith.constant 32 : index
    %c0_39 = arith.constant 0 : index
    %125 = vector.load %arg17[%c32, %c0_39] : memref<64x128xf32, #tpu.memory_space<vmem>>, vector<8x128xf32>
    %cst_40 = arith.constant dense<0.000000e+00> : vector<8x128xf32>
    %126 = tpu.matmul %123, %8, %cst_40 {dimension_numbers = #tpu.dot_dimension_numbers<[1], [0], [0], [1], [0, 0, 1, 1], [], []>} : vector<8x32xf32>, vector<32x128xf32>, vector<8x128xf32> -> vector<8x128xf32>
    %127 = arith.addf %125, %126 : vector<8x128xf32>
    %128 = vector.extract_strided_slice %127 {offsets = [0, 0], sizes = [8, 32], strides = [1, 1]} : vector<8x128xf32> to vector<8x32xf32>
    %129 = arith.negf %128 : vector<8x32xf32>
    %130 = math.exp %129 : vector<8x32xf32>
    %cst_41 = arith.constant 1.000000e+00 : f32
    %131 = vector.broadcast %cst_41 : f32 to vector<8x32xf32>
    %132 = arith.addf %131, %130 : vector<8x32xf32>
    %133 = arith.divf %131, %132 : vector<8x32xf32>
    %134 = vector.extract_strided_slice %127 {offsets = [0, 32], sizes = [8, 32], strides = [1, 1]} : vector<8x128xf32> to vector<8x32xf32>
    %135 = arith.negf %134 : vector<8x32xf32>
    %136 = math.exp %135 : vector<8x32xf32>
    %cst_42 = arith.constant 1.000000e+00 : f32
    %137 = vector.broadcast %cst_42 : f32 to vector<8x32xf32>
    %138 = arith.addf %137, %136 : vector<8x32xf32>
    %139 = arith.divf %137, %138 : vector<8x32xf32>
    %140 = vector.extract_strided_slice %127 {offsets = [0, 64], sizes = [8, 32], strides = [1, 1]} : vector<8x128xf32> to vector<8x32xf32>
    %141 = math.tanh %140 : vector<8x32xf32>
    %142 = vector.extract_strided_slice %127 {offsets = [0, 96], sizes = [8, 32], strides = [1, 1]} : vector<8x128xf32> to vector<8x32xf32>
    %143 = arith.negf %142 : vector<8x32xf32>
    %144 = math.exp %143 : vector<8x32xf32>
    %cst_43 = arith.constant 1.000000e+00 : f32
    %145 = vector.broadcast %cst_43 : f32 to vector<8x32xf32>
    %146 = arith.addf %145, %144 : vector<8x32xf32>
    %147 = arith.divf %145, %146 : vector<8x32xf32>
    %148 = arith.mulf %139, %121 : vector<8x32xf32>
    %149 = arith.mulf %133, %141 : vector<8x32xf32>
    %150 = arith.addf %148, %149 : vector<8x32xf32>
    %151 = math.tanh %150 : vector<8x32xf32>
    %152 = arith.mulf %147, %151 : vector<8x32xf32>
    %c32_44 = arith.constant 32 : index
    %c0_45 = arith.constant 0 : index
    %153 = vector.load %arg18[%c32_44, %c0_45] : memref<64x32xf32, #tpu.memory_space<vmem>>, vector<8x32xf32>
    tpu.vector_store %arg18[%c32_44, %c0_45], %152 {strides = array<i32>} : memref<64x32xf32, #tpu.memory_space<vmem>>, vector<8x32xf32>,
    %c40 = arith.constant 40 : index
    %c0_46 = arith.constant 0 : index
    %154 = vector.load %arg17[%c40, %c0_46] : memref<64x128xf32, #tpu.memory_space<vmem>>, vector<8x128xf32>
    %cst_47 = arith.constant dense<0.000000e+00> : vector<8x128xf32>
    %155 = tpu.matmul %152, %8, %cst_47 {dimension_numbers = #tpu.dot_dimension_numbers<[1], [0], [0], [1], [0, 0, 1, 1], [], []>} : vector<8x32xf32>, vector<32x128xf32>, vector<8x128xf32> -> vector<8x128xf32>
    %156 = arith.addf %154, %155 : vector<8x128xf32>
    %157 = vector.extract_strided_slice %156 {offsets = [0, 0], sizes = [8, 32], strides = [1, 1]} : vector<8x128xf32> to vector<8x32xf32>
    %158 = arith.negf %157 : vector<8x32xf32>
    %159 = math.exp %158 : vector<8x32xf32>
    %cst_48 = arith.constant 1.000000e+00 : f32
    %160 = vector.broadcast %cst_48 : f32 to vector<8x32xf32>
    %161 = arith.addf %160, %159 : vector<8x32xf32>
    %162 = arith.divf %160, %161 : vector<8x32xf32>
    %163 = vector.extract_strided_slice %156 {offsets = [0, 32], sizes = [8, 32], strides = [1, 1]} : vector<8x128xf32> to vector<8x32xf32>
    %164 = arith.negf %163 : vector<8x32xf32>
    %165 = math.exp %164 : vector<8x32xf32>
    %cst_49 = arith.constant 1.000000e+00 : f32
    %166 = vector.broadcast %cst_49 : f32 to vector<8x32xf32>
    %167 = arith.addf %166, %165 : vector<8x32xf32>
    %168 = arith.divf %166, %167 : vector<8x32xf32>
    %169 = vector.extract_strided_slice %156 {offsets = [0, 64], sizes = [8, 32], strides = [1, 1]} : vector<8x128xf32> to vector<8x32xf32>
    %170 = math.tanh %169 : vector<8x32xf32>
    %171 = vector.extract_strided_slice %156 {offsets = [0, 96], sizes = [8, 32], strides = [1, 1]} : vector<8x128xf32> to vector<8x32xf32>
    %172 = arith.negf %171 : vector<8x32xf32>
    %173 = math.exp %172 : vector<8x32xf32>
    %cst_50 = arith.constant 1.000000e+00 : f32
    %174 = vector.broadcast %cst_50 : f32 to vector<8x32xf32>
    %175 = arith.addf %174, %173 : vector<8x32xf32>
    %176 = arith.divf %174, %175 : vector<8x32xf32>
    %177 = arith.mulf %168, %150 : vector<8x32xf32>
    %178 = arith.mulf %162, %170 : vector<8x32xf32>
    %179 = arith.addf %177, %178 : vector<8x32xf32>
    %180 = math.tanh %179 : vector<8x32xf32>
    %181 = arith.mulf %176, %180 : vector<8x32xf32>
    %c40_51 = arith.constant 40 : index
    %c0_52 = arith.constant 0 : index
    %182 = vector.load %arg18[%c40_51, %c0_52] : memref<64x32xf32, #tpu.memory_space<vmem>>, vector<8x32xf32>
    tpu.vector_store %arg18[%c40_51, %c0_52], %181 {strides = array<i32>} : memref<64x32xf32, #tpu.memory_space<vmem>>, vector<8x32xf32>,
    %c48 = arith.constant 48 : index
    %c0_53 = arith.constant 0 : index
    %183 = vector.load %arg17[%c48, %c0_53] : memref<64x128xf32, #tpu.memory_space<vmem>>, vector<8x128xf32>
    %cst_54 = arith.constant dense<0.000000e+00> : vector<8x128xf32>
    %184 = tpu.matmul %181, %8, %cst_54 {dimension_numbers = #tpu.dot_dimension_numbers<[1], [0], [0], [1], [0, 0, 1, 1], [], []>} : vector<8x32xf32>, vector<32x128xf32>, vector<8x128xf32> -> vector<8x128xf32>
    %185 = arith.addf %183, %184 : vector<8x128xf32>
    %186 = vector.extract_strided_slice %185 {offsets = [0, 0], sizes = [8, 32], strides = [1, 1]} : vector<8x128xf32> to vector<8x32xf32>
    %187 = arith.negf %186 : vector<8x32xf32>
    %188 = math.exp %187 : vector<8x32xf32>
    %cst_55 = arith.constant 1.000000e+00 : f32
    %189 = vector.broadcast %cst_55 : f32 to vector<8x32xf32>
    %190 = arith.addf %189, %188 : vector<8x32xf32>
    %191 = arith.divf %189, %190 : vector<8x32xf32>
    %192 = vector.extract_strided_slice %185 {offsets = [0, 32], sizes = [8, 32], strides = [1, 1]} : vector<8x128xf32> to vector<8x32xf32>
    %193 = arith.negf %192 : vector<8x32xf32>
    %194 = math.exp %193 : vector<8x32xf32>
    %cst_56 = arith.constant 1.000000e+00 : f32
    %195 = vector.broadcast %cst_56 : f32 to vector<8x32xf32>
    %196 = arith.addf %195, %194 : vector<8x32xf32>
    %197 = arith.divf %195, %196 : vector<8x32xf32>
    %198 = vector.extract_strided_slice %185 {offsets = [0, 64], sizes = [8, 32], strides = [1, 1]} : vector<8x128xf32> to vector<8x32xf32>
    %199 = math.tanh %198 : vector<8x32xf32>
    %200 = vector.extract_strided_slice %185 {offsets = [0, 96], sizes = [8, 32], strides = [1, 1]} : vector<8x128xf32> to vector<8x32xf32>
    %201 = arith.negf %200 : vector<8x32xf32>
    %202 = math.exp %201 : vector<8x32xf32>
    %cst_57 = arith.constant 1.000000e+00 : f32
    %203 = vector.broadcast %cst_57 : f32 to vector<8x32xf32>
    %204 = arith.addf %203, %202 : vector<8x32xf32>
    %205 = arith.divf %203, %204 : vector<8x32xf32>
    %206 = arith.mulf %197, %179 : vector<8x32xf32>
    %207 = arith.mulf %191, %199 : vector<8x32xf32>
    %208 = arith.addf %206, %207 : vector<8x32xf32>
    %209 = math.tanh %208 : vector<8x32xf32>
    %210 = arith.mulf %205, %209 : vector<8x32xf32>
    %c48_58 = arith.constant 48 : index
    %c0_59 = arith.constant 0 : index
    %211 = vector.load %arg18[%c48_58, %c0_59] : memref<64x32xf32, #tpu.memory_space<vmem>>, vector<8x32xf32>
    tpu.vector_store %arg18[%c48_58, %c0_59], %210 {strides = array<i32>} : memref<64x32xf32, #tpu.memory_space<vmem>>, vector<8x32xf32>,
    %c56 = arith.constant 56 : index
    %c0_60 = arith.constant 0 : index
    %212 = vector.load %arg17[%c56, %c0_60] : memref<64x128xf32, #tpu.memory_space<vmem>>, vector<8x128xf32>
    %cst_61 = arith.constant dense<0.000000e+00> : vector<8x128xf32>
    %213 = tpu.matmul %210, %8, %cst_61 {dimension_numbers = #tpu.dot_dimension_numbers<[1], [0], [0], [1], [0, 0, 1, 1], [], []>} : vector<8x32xf32>, vector<32x128xf32>, vector<8x128xf32> -> vector<8x128xf32>
    %214 = arith.addf %212, %213 : vector<8x128xf32>
    %215 = vector.extract_strided_slice %214 {offsets = [0, 0], sizes = [8, 32], strides = [1, 1]} : vector<8x128xf32> to vector<8x32xf32>
    %216 = arith.negf %215 : vector<8x32xf32>
    %217 = math.exp %216 : vector<8x32xf32>
    %cst_62 = arith.constant 1.000000e+00 : f32
    %218 = vector.broadcast %cst_62 : f32 to vector<8x32xf32>
    %219 = arith.addf %218, %217 : vector<8x32xf32>
    %220 = arith.divf %218, %219 : vector<8x32xf32>
    %221 = vector.extract_strided_slice %214 {offsets = [0, 32], sizes = [8, 32], strides = [1, 1]} : vector<8x128xf32> to vector<8x32xf32>
    %222 = arith.negf %221 : vector<8x32xf32>
    %223 = math.exp %222 : vector<8x32xf32>
    %cst_63 = arith.constant 1.000000e+00 : f32
    %224 = vector.broadcast %cst_63 : f32 to vector<8x32xf32>
    %225 = arith.addf %224, %223 : vector<8x32xf32>
    %226 = arith.divf %224, %225 : vector<8x32xf32>
    %227 = vector.extract_strided_slice %214 {offsets = [0, 64], sizes = [8, 32], strides = [1, 1]} : vector<8x128xf32> to vector<8x32xf32>
    %228 = math.tanh %227 : vector<8x32xf32>
    %229 = vector.extract_strided_slice %214 {offsets = [0, 96], sizes = [8, 32], strides = [1, 1]} : vector<8x128xf32> to vector<8x32xf32>
    %230 = arith.negf %229 : vector<8x32xf32>
    %231 = math.exp %230 : vector<8x32xf32>
    %cst_64 = arith.constant 1.000000e+00 : f32
    %232 = vector.broadcast %cst_64 : f32 to vector<8x32xf32>
    %233 = arith.addf %232, %231 : vector<8x32xf32>
    %234 = arith.divf %232, %233 : vector<8x32xf32>
    %235 = arith.mulf %226, %208 : vector<8x32xf32>
    %236 = arith.mulf %220, %228 : vector<8x32xf32>
    %237 = arith.addf %235, %236 : vector<8x32xf32>
    %238 = math.tanh %237 : vector<8x32xf32>
    %239 = arith.mulf %234, %238 : vector<8x32xf32>
    %c56_65 = arith.constant 56 : index
    %c0_66 = arith.constant 0 : index
    %240 = vector.load %arg18[%c56_65, %c0_66] : memref<64x32xf32, #tpu.memory_space<vmem>>, vector<8x32xf32>
    tpu.vector_store %arg18[%c56_65, %c0_66], %239 {strides = array<i32>} : memref<64x32xf32, #tpu.memory_space<vmem>>, vector<8x32xf32>,
    %c0_67 = arith.constant 0 : index
    %c0_68 = arith.constant 0 : index
    %241 = vector.load %arg18[%c0_67, %c0_68] : memref<64x32xf32, #tpu.memory_space<vmem>>, vector<64x32xf32>
    %c0_69 = arith.constant 0 : index
    %c0_70 = arith.constant 0 : index
    %242 = vector.load %arg5[%c0_69, %c0_70] : memref<32x128xf32, #tpu.memory_space<vmem>>, vector<32x128xf32>
    %cst_71 = arith.constant dense<0.000000e+00> : vector<64x128xf32>
    %243 = tpu.matmul %241, %242, %cst_71 {dimension_numbers = #tpu.dot_dimension_numbers<[1], [0], [0], [1], [0, 0, 1, 1], [], []>} : vector<64x32xf32>, vector<32x128xf32>, vector<64x128xf32> -> vector<64x128xf32>
    %c0_72 = arith.constant 0 : index
    %c0_73 = arith.constant 0 : index
    %244 = vector.load %arg7[%c0_72, %c0_73] : memref<1x128xf32, #tpu.memory_space<vmem>>, vector<1x128xf32>
    %245 = vector.broadcast %244 : vector<1x128xf32> to vector<64x128xf32>
    %246 = arith.addf %243, %245 : vector<64x128xf32>
    %c0_74 = arith.constant 0 : index
    %c0_75 = arith.constant 0 : index
    %247 = vector.load %arg17[%c0_74, %c0_75] : memref<64x128xf32, #tpu.memory_space<vmem>>, vector<64x128xf32>
    tpu.vector_store %arg17[%c0_74, %c0_75], %246 {strides = array<i32>} : memref<64x128xf32, #tpu.memory_space<vmem>>, vector<64x128xf32>,
    %c0_76 = arith.constant 0 : index
    %c0_77 = arith.constant 0 : index
    %248 = vector.load %arg6[%c0_76, %c0_77] : memref<32x128xf32, #tpu.memory_space<vmem>>, vector<32x128xf32>
    %c0_78 = arith.constant 0 : index
    %c0_79 = arith.constant 0 : index
    %249 = vector.load %arg17[%c0_78, %c0_79] : memref<64x128xf32, #tpu.memory_space<vmem>>, vector<8x128xf32>
    %cst_80 = arith.constant dense<0.000000e+00> : vector<8x128xf32>
    %250 = tpu.matmul %0, %248, %cst_80 {dimension_numbers = #tpu.dot_dimension_numbers<[1], [0], [0], [1], [0, 0, 1, 1], [], []>} : vector<8x32xf32>, vector<32x128xf32>, vector<8x128xf32> -> vector<8x128xf32>
    %251 = arith.addf %249, %250 : vector<8x128xf32>
    %252 = vector.extract_strided_slice %251 {offsets = [0, 0], sizes = [8, 32], strides = [1, 1]} : vector<8x128xf32> to vector<8x32xf32>
    %253 = arith.negf %252 : vector<8x32xf32>
    %254 = math.exp %253 : vector<8x32xf32>
    %cst_81 = arith.constant 1.000000e+00 : f32
    %255 = vector.broadcast %cst_81 : f32 to vector<8x32xf32>
    %256 = arith.addf %255, %254 : vector<8x32xf32>
    %257 = arith.divf %255, %256 : vector<8x32xf32>
    %258 = vector.extract_strided_slice %251 {offsets = [0, 32], sizes = [8, 32], strides = [1, 1]} : vector<8x128xf32> to vector<8x32xf32>
    %259 = arith.negf %258 : vector<8x32xf32>
    %260 = math.exp %259 : vector<8x32xf32>
    %cst_82 = arith.constant 1.000000e+00 : f32
    %261 = vector.broadcast %cst_82 : f32 to vector<8x32xf32>
    %262 = arith.addf %261, %260 : vector<8x32xf32>
    %263 = arith.divf %261, %262 : vector<8x32xf32>
    %264 = vector.extract_strided_slice %251 {offsets = [0, 64], sizes = [8, 32], strides = [1, 1]} : vector<8x128xf32> to vector<8x32xf32>
    %265 = math.tanh %264 : vector<8x32xf32>
    %266 = vector.extract_strided_slice %251 {offsets = [0, 96], sizes = [8, 32], strides = [1, 1]} : vector<8x128xf32> to vector<8x32xf32>
    %267 = arith.negf %266 : vector<8x32xf32>
    %268 = math.exp %267 : vector<8x32xf32>
    %cst_83 = arith.constant 1.000000e+00 : f32
    %269 = vector.broadcast %cst_83 : f32 to vector<8x32xf32>
    %270 = arith.addf %269, %268 : vector<8x32xf32>
    %271 = arith.divf %269, %270 : vector<8x32xf32>
    %272 = arith.mulf %263, %0 : vector<8x32xf32>
    %273 = arith.mulf %257, %265 : vector<8x32xf32>
    %274 = arith.addf %272, %273 : vector<8x32xf32>
    %275 = math.tanh %274 : vector<8x32xf32>
    %276 = arith.mulf %271, %275 : vector<8x32xf32>
    %c0_84 = arith.constant 0 : index
    %c0_85 = arith.constant 0 : index
    %277 = vector.load %arg18[%c0_84, %c0_85] : memref<64x32xf32, #tpu.memory_space<vmem>>, vector<8x32xf32>
    tpu.vector_store %arg18[%c0_84, %c0_85], %276 {strides = array<i32>} : memref<64x32xf32, #tpu.memory_space<vmem>>, vector<8x32xf32>,
    %c8_86 = arith.constant 8 : index
    %c0_87 = arith.constant 0 : index
    %278 = vector.load %arg17[%c8_86, %c0_87] : memref<64x128xf32, #tpu.memory_space<vmem>>, vector<8x128xf32>
    %cst_88 = arith.constant dense<0.000000e+00> : vector<8x128xf32>
    %279 = tpu.matmul %276, %248, %cst_88 {dimension_numbers = #tpu.dot_dimension_numbers<[1], [0], [0], [1], [0, 0, 1, 1], [], []>} : vector<8x32xf32>, vector<32x128xf32>, vector<8x128xf32> -> vector<8x128xf32>
    %280 = arith.addf %278, %279 : vector<8x128xf32>
    %281 = vector.extract_strided_slice %280 {offsets = [0, 0], sizes = [8, 32], strides = [1, 1]} : vector<8x128xf32> to vector<8x32xf32>
    %282 = arith.negf %281 : vector<8x32xf32>
    %283 = math.exp %282 : vector<8x32xf32>
    %cst_89 = arith.constant 1.000000e+00 : f32
    %284 = vector.broadcast %cst_89 : f32 to vector<8x32xf32>
    %285 = arith.addf %284, %283 : vector<8x32xf32>
    %286 = arith.divf %284, %285 : vector<8x32xf32>
    %287 = vector.extract_strided_slice %280 {offsets = [0, 32], sizes = [8, 32], strides = [1, 1]} : vector<8x128xf32> to vector<8x32xf32>
    %288 = arith.negf %287 : vector<8x32xf32>
    %289 = math.exp %288 : vector<8x32xf32>
    %cst_90 = arith.constant 1.000000e+00 : f32
    %290 = vector.broadcast %cst_90 : f32 to vector<8x32xf32>
    %291 = arith.addf %290, %289 : vector<8x32xf32>
    %292 = arith.divf %290, %291 : vector<8x32xf32>
    %293 = vector.extract_strided_slice %280 {offsets = [0, 64], sizes = [8, 32], strides = [1, 1]} : vector<8x128xf32> to vector<8x32xf32>
    %294 = math.tanh %293 : vector<8x32xf32>
    %295 = vector.extract_strided_slice %280 {offsets = [0, 96], sizes = [8, 32], strides = [1, 1]} : vector<8x128xf32> to vector<8x32xf32>
    %296 = arith.negf %295 : vector<8x32xf32>
    %297 = math.exp %296 : vector<8x32xf32>
    %cst_91 = arith.constant 1.000000e+00 : f32
    %298 = vector.broadcast %cst_91 : f32 to vector<8x32xf32>
    %299 = arith.addf %298, %297 : vector<8x32xf32>
    %300 = arith.divf %298, %299 : vector<8x32xf32>
    %301 = arith.mulf %292, %274 : vector<8x32xf32>
    %302 = arith.mulf %286, %294 : vector<8x32xf32>
    %303 = arith.addf %301, %302 : vector<8x32xf32>
    %304 = math.tanh %303 : vector<8x32xf32>
    %305 = arith.mulf %300, %304 : vector<8x32xf32>
    %c8_92 = arith.constant 8 : index
    %c0_93 = arith.constant 0 : index
    %306 = vector.load %arg18[%c8_92, %c0_93] : memref<64x32xf32, #tpu.memory_space<vmem>>, vector<8x32xf32>
    tpu.vector_store %arg18[%c8_92, %c0_93], %305 {strides = array<i32>} : memref<64x32xf32, #tpu.memory_space<vmem>>, vector<8x32xf32>,
    %c16_94 = arith.constant 16 : index
    %c0_95 = arith.constant 0 : index
    %307 = vector.load %arg17[%c16_94, %c0_95] : memref<64x128xf32, #tpu.memory_space<vmem>>, vector<8x128xf32>
    %cst_96 = arith.constant dense<0.000000e+00> : vector<8x128xf32>
    %308 = tpu.matmul %305, %248, %cst_96 {dimension_numbers = #tpu.dot_dimension_numbers<[1], [0], [0], [1], [0, 0, 1, 1], [], []>} : vector<8x32xf32>, vector<32x128xf32>, vector<8x128xf32> -> vector<8x128xf32>
    %309 = arith.addf %307, %308 : vector<8x128xf32>
    %310 = vector.extract_strided_slice %309 {offsets = [0, 0], sizes = [8, 32], strides = [1, 1]} : vector<8x128xf32> to vector<8x32xf32>
    %311 = arith.negf %310 : vector<8x32xf32>
    %312 = math.exp %311 : vector<8x32xf32>
    %cst_97 = arith.constant 1.000000e+00 : f32
    %313 = vector.broadcast %cst_97 : f32 to vector<8x32xf32>
    %314 = arith.addf %313, %312 : vector<8x32xf32>
    %315 = arith.divf %313, %314 : vector<8x32xf32>
    %316 = vector.extract_strided_slice %309 {offsets = [0, 32], sizes = [8, 32], strides = [1, 1]} : vector<8x128xf32> to vector<8x32xf32>
    %317 = arith.negf %316 : vector<8x32xf32>
    %318 = math.exp %317 : vector<8x32xf32>
    %cst_98 = arith.constant 1.000000e+00 : f32
    %319 = vector.broadcast %cst_98 : f32 to vector<8x32xf32>
    %320 = arith.addf %319, %318 : vector<8x32xf32>
    %321 = arith.divf %319, %320 : vector<8x32xf32>
    %322 = vector.extract_strided_slice %309 {offsets = [0, 64], sizes = [8, 32], strides = [1, 1]} : vector<8x128xf32> to vector<8x32xf32>
    %323 = math.tanh %322 : vector<8x32xf32>
    %324 = vector.extract_strided_slice %309 {offsets = [0, 96], sizes = [8, 32], strides = [1, 1]} : vector<8x128xf32> to vector<8x32xf32>
    %325 = arith.negf %324 : vector<8x32xf32>
    %326 = math.exp %325 : vector<8x32xf32>
    %cst_99 = arith.constant 1.000000e+00 : f32
    %327 = vector.broadcast %cst_99 : f32 to vector<8x32xf32>
    %328 = arith.addf %327, %326 : vector<8x32xf32>
    %329 = arith.divf %327, %328 : vector<8x32xf32>
    %330 = arith.mulf %321, %303 : vector<8x32xf32>
    %331 = arith.mulf %315, %323 : vector<8x32xf32>
    %332 = arith.addf %330, %331 : vector<8x32xf32>
    %333 = math.tanh %332 : vector<8x32xf32>
    %334 = arith.mulf %329, %333 : vector<8x32xf32>
    %c16_100 = arith.constant 16 : index
    %c0_101 = arith.constant 0 : index
    %335 = vector.load %arg18[%c16_100, %c0_101] : memref<64x32xf32, #tpu.memory_space<vmem>>, vector<8x32xf32>
    tpu.vector_store %arg18[%c16_100, %c0_101], %334 {strides = array<i32>} : memref<64x32xf32, #tpu.memory_space<vmem>>, vector<8x32xf32>,
    %c24_102 = arith.constant 24 : index
    %c0_103 = arith.constant 0 : index
    %336 = vector.load %arg17[%c24_102, %c0_103] : memref<64x128xf32, #tpu.memory_space<vmem>>, vector<8x128xf32>
    %cst_104 = arith.constant dense<0.000000e+00> : vector<8x128xf32>
    %337 = tpu.matmul %334, %248, %cst_104 {dimension_numbers = #tpu.dot_dimension_numbers<[1], [0], [0], [1], [0, 0, 1, 1], [], []>} : vector<8x32xf32>, vector<32x128xf32>, vector<8x128xf32> -> vector<8x128xf32>
    %338 = arith.addf %336, %337 : vector<8x128xf32>
    %339 = vector.extract_strided_slice %338 {offsets = [0, 0], sizes = [8, 32], strides = [1, 1]} : vector<8x128xf32> to vector<8x32xf32>
    %340 = arith.negf %339 : vector<8x32xf32>
    %341 = math.exp %340 : vector<8x32xf32>
    %cst_105 = arith.constant 1.000000e+00 : f32
    %342 = vector.broadcast %cst_105 : f32 to vector<8x32xf32>
    %343 = arith.addf %342, %341 : vector<8x32xf32>
    %344 = arith.divf %342, %343 : vector<8x32xf32>
    %345 = vector.extract_strided_slice %338 {offsets = [0, 32], sizes = [8, 32], strides = [1, 1]} : vector<8x128xf32> to vector<8x32xf32>
    %346 = arith.negf %345 : vector<8x32xf32>
    %347 = math.exp %346 : vector<8x32xf32>
    %cst_106 = arith.constant 1.000000e+00 : f32
    %348 = vector.broadcast %cst_106 : f32 to vector<8x32xf32>
    %349 = arith.addf %348, %347 : vector<8x32xf32>
    %350 = arith.divf %348, %349 : vector<8x32xf32>
    %351 = vector.extract_strided_slice %338 {offsets = [0, 64], sizes = [8, 32], strides = [1, 1]} : vector<8x128xf32> to vector<8x32xf32>
    %352 = math.tanh %351 : vector<8x32xf32>
    %353 = vector.extract_strided_slice %338 {offsets = [0, 96], sizes = [8, 32], strides = [1, 1]} : vector<8x128xf32> to vector<8x32xf32>
    %354 = arith.negf %353 : vector<8x32xf32>
    %355 = math.exp %354 : vector<8x32xf32>
    %cst_107 = arith.constant 1.000000e+00 : f32
    %356 = vector.broadcast %cst_107 : f32 to vector<8x32xf32>
    %357 = arith.addf %356, %355 : vector<8x32xf32>
    %358 = arith.divf %356, %357 : vector<8x32xf32>
    %359 = arith.mulf %350, %332 : vector<8x32xf32>
    %360 = arith.mulf %344, %352 : vector<8x32xf32>
    %361 = arith.addf %359, %360 : vector<8x32xf32>
    %362 = math.tanh %361 : vector<8x32xf32>
    %363 = arith.mulf %358, %362 : vector<8x32xf32>
    %c24_108 = arith.constant 24 : index
    %c0_109 = arith.constant 0 : index
    %364 = vector.load %arg18[%c24_108, %c0_109] : memref<64x32xf32, #tpu.memory_space<vmem>>, vector<8x32xf32>
    tpu.vector_store %arg18[%c24_108, %c0_109], %363 {strides = array<i32>} : memref<64x32xf32, #tpu.memory_space<vmem>>, vector<8x32xf32>,
    %c32_110 = arith.constant 32 : index
    %c0_111 = arith.constant 0 : index
    %365 = vector.load %arg17[%c32_110, %c0_111] : memref<64x128xf32, #tpu.memory_space<vmem>>, vector<8x128xf32>
    %cst_112 = arith.constant dense<0.000000e+00> : vector<8x128xf32>
    %366 = tpu.matmul %363, %248, %cst_112 {dimension_numbers = #tpu.dot_dimension_numbers<[1], [0], [0], [1], [0, 0, 1, 1], [], []>} : vector<8x32xf32>, vector<32x128xf32>, vector<8x128xf32> -> vector<8x128xf32>
    %367 = arith.addf %365, %366 : vector<8x128xf32>
    %368 = vector.extract_strided_slice %367 {offsets = [0, 0], sizes = [8, 32], strides = [1, 1]} : vector<8x128xf32> to vector<8x32xf32>
    %369 = arith.negf %368 : vector<8x32xf32>
    %370 = math.exp %369 : vector<8x32xf32>
    %cst_113 = arith.constant 1.000000e+00 : f32
    %371 = vector.broadcast %cst_113 : f32 to vector<8x32xf32>
    %372 = arith.addf %371, %370 : vector<8x32xf32>
    %373 = arith.divf %371, %372 : vector<8x32xf32>
    %374 = vector.extract_strided_slice %367 {offsets = [0, 32], sizes = [8, 32], strides = [1, 1]} : vector<8x128xf32> to vector<8x32xf32>
    %375 = arith.negf %374 : vector<8x32xf32>
    %376 = math.exp %375 : vector<8x32xf32>
    %cst_114 = arith.constant 1.000000e+00 : f32
    %377 = vector.broadcast %cst_114 : f32 to vector<8x32xf32>
    %378 = arith.addf %377, %376 : vector<8x32xf32>
    %379 = arith.divf %377, %378 : vector<8x32xf32>
    %380 = vector.extract_strided_slice %367 {offsets = [0, 64], sizes = [8, 32], strides = [1, 1]} : vector<8x128xf32> to vector<8x32xf32>
    %381 = math.tanh %380 : vector<8x32xf32>
    %382 = vector.extract_strided_slice %367 {offsets = [0, 96], sizes = [8, 32], strides = [1, 1]} : vector<8x128xf32> to vector<8x32xf32>
    %383 = arith.negf %382 : vector<8x32xf32>
    %384 = math.exp %383 : vector<8x32xf32>
    %cst_115 = arith.constant 1.000000e+00 : f32
    %385 = vector.broadcast %cst_115 : f32 to vector<8x32xf32>
    %386 = arith.addf %385, %384 : vector<8x32xf32>
    %387 = arith.divf %385, %386 : vector<8x32xf32>
    %388 = arith.mulf %379, %361 : vector<8x32xf32>
    %389 = arith.mulf %373, %381 : vector<8x32xf32>
    %390 = arith.addf %388, %389 : vector<8x32xf32>
    %391 = math.tanh %390 : vector<8x32xf32>
    %392 = arith.mulf %387, %391 : vector<8x32xf32>
    %c32_116 = arith.constant 32 : index
    %c0_117 = arith.constant 0 : index
    %393 = vector.load %arg18[%c32_116, %c0_117] : memref<64x32xf32, #tpu.memory_space<vmem>>, vector<8x32xf32>
    tpu.vector_store %arg18[%c32_116, %c0_117], %392 {strides = array<i32>} : memref<64x32xf32, #tpu.memory_space<vmem>>, vector<8x32xf32>,
    %c40_118 = arith.constant 40 : index
    %c0_119 = arith.constant 0 : index
    %394 = vector.load %arg17[%c40_118, %c0_119] : memref<64x128xf32, #tpu.memory_space<vmem>>, vector<8x128xf32>
    %cst_120 = arith.constant dense<0.000000e+00> : vector<8x128xf32>
    %395 = tpu.matmul %392, %248, %cst_120 {dimension_numbers = #tpu.dot_dimension_numbers<[1], [0], [0], [1], [0, 0, 1, 1], [], []>} : vector<8x32xf32>, vector<32x128xf32>, vector<8x128xf32> -> vector<8x128xf32>
    %396 = arith.addf %394, %395 : vector<8x128xf32>
    %397 = vector.extract_strided_slice %396 {offsets = [0, 0], sizes = [8, 32], strides = [1, 1]} : vector<8x128xf32> to vector<8x32xf32>
    %398 = arith.negf %397 : vector<8x32xf32>
    %399 = math.exp %398 : vector<8x32xf32>
    %cst_121 = arith.constant 1.000000e+00 : f32
    %400 = vector.broadcast %cst_121 : f32 to vector<8x32xf32>
    %401 = arith.addf %400, %399 : vector<8x32xf32>
    %402 = arith.divf %400, %401 : vector<8x32xf32>
    %403 = vector.extract_strided_slice %396 {offsets = [0, 32], sizes = [8, 32], strides = [1, 1]} : vector<8x128xf32> to vector<8x32xf32>
    %404 = arith.negf %403 : vector<8x32xf32>
    %405 = math.exp %404 : vector<8x32xf32>
    %cst_122 = arith.constant 1.000000e+00 : f32
    %406 = vector.broadcast %cst_122 : f32 to vector<8x32xf32>
    %407 = arith.addf %406, %405 : vector<8x32xf32>
    %408 = arith.divf %406, %407 : vector<8x32xf32>
    %409 = vector.extract_strided_slice %396 {offsets = [0, 64], sizes = [8, 32], strides = [1, 1]} : vector<8x128xf32> to vector<8x32xf32>
    %410 = math.tanh %409 : vector<8x32xf32>
    %411 = vector.extract_strided_slice %396 {offsets = [0, 96], sizes = [8, 32], strides = [1, 1]} : vector<8x128xf32> to vector<8x32xf32>
    %412 = arith.negf %411 : vector<8x32xf32>
    %413 = math.exp %412 : vector<8x32xf32>
    %cst_123 = arith.constant 1.000000e+00 : f32
    %414 = vector.broadcast %cst_123 : f32 to vector<8x32xf32>
    %415 = arith.addf %414, %413 : vector<8x32xf32>
    %416 = arith.divf %414, %415 : vector<8x32xf32>
    %417 = arith.mulf %408, %390 : vector<8x32xf32>
    %418 = arith.mulf %402, %410 : vector<8x32xf32>
    %419 = arith.addf %417, %418 : vector<8x32xf32>
    %420 = math.tanh %419 : vector<8x32xf32>
    %421 = arith.mulf %416, %420 : vector<8x32xf32>
    %c40_124 = arith.constant 40 : index
    %c0_125 = arith.constant 0 : index
    %422 = vector.load %arg18[%c40_124, %c0_125] : memref<64x32xf32, #tpu.memory_space<vmem>>, vector<8x32xf32>
    tpu.vector_store %arg18[%c40_124, %c0_125], %421 {strides = array<i32>} : memref<64x32xf32, #tpu.memory_space<vmem>>, vector<8x32xf32>,
    %c48_126 = arith.constant 48 : index
    %c0_127 = arith.constant 0 : index
    %423 = vector.load %arg17[%c48_126, %c0_127] : memref<64x128xf32, #tpu.memory_space<vmem>>, vector<8x128xf32>
    %cst_128 = arith.constant dense<0.000000e+00> : vector<8x128xf32>
    %424 = tpu.matmul %421, %248, %cst_128 {dimension_numbers = #tpu.dot_dimension_numbers<[1], [0], [0], [1], [0, 0, 1, 1], [], []>} : vector<8x32xf32>, vector<32x128xf32>, vector<8x128xf32> -> vector<8x128xf32>
    %425 = arith.addf %423, %424 : vector<8x128xf32>
    %426 = vector.extract_strided_slice %425 {offsets = [0, 0], sizes = [8, 32], strides = [1, 1]} : vector<8x128xf32> to vector<8x32xf32>
    %427 = arith.negf %426 : vector<8x32xf32>
    %428 = math.exp %427 : vector<8x32xf32>
    %cst_129 = arith.constant 1.000000e+00 : f32
    %429 = vector.broadcast %cst_129 : f32 to vector<8x32xf32>
    %430 = arith.addf %429, %428 : vector<8x32xf32>
    %431 = arith.divf %429, %430 : vector<8x32xf32>
    %432 = vector.extract_strided_slice %425 {offsets = [0, 32], sizes = [8, 32], strides = [1, 1]} : vector<8x128xf32> to vector<8x32xf32>
    %433 = arith.negf %432 : vector<8x32xf32>
    %434 = math.exp %433 : vector<8x32xf32>
    %cst_130 = arith.constant 1.000000e+00 : f32
    %435 = vector.broadcast %cst_130 : f32 to vector<8x32xf32>
    %436 = arith.addf %435, %434 : vector<8x32xf32>
    %437 = arith.divf %435, %436 : vector<8x32xf32>
    %438 = vector.extract_strided_slice %425 {offsets = [0, 64], sizes = [8, 32], strides = [1, 1]} : vector<8x128xf32> to vector<8x32xf32>
    %439 = math.tanh %438 : vector<8x32xf32>
    %440 = vector.extract_strided_slice %425 {offsets = [0, 96], sizes = [8, 32], strides = [1, 1]} : vector<8x128xf32> to vector<8x32xf32>
    %441 = arith.negf %440 : vector<8x32xf32>
    %442 = math.exp %441 : vector<8x32xf32>
    %cst_131 = arith.constant 1.000000e+00 : f32
    %443 = vector.broadcast %cst_131 : f32 to vector<8x32xf32>
    %444 = arith.addf %443, %442 : vector<8x32xf32>
    %445 = arith.divf %443, %444 : vector<8x32xf32>
    %446 = arith.mulf %437, %419 : vector<8x32xf32>
    %447 = arith.mulf %431, %439 : vector<8x32xf32>
    %448 = arith.addf %446, %447 : vector<8x32xf32>
    %449 = math.tanh %448 : vector<8x32xf32>
    %450 = arith.mulf %445, %449 : vector<8x32xf32>
    %c48_132 = arith.constant 48 : index
    %c0_133 = arith.constant 0 : index
    %451 = vector.load %arg18[%c48_132, %c0_133] : memref<64x32xf32, #tpu.memory_space<vmem>>, vector<8x32xf32>
    tpu.vector_store %arg18[%c48_132, %c0_133], %450 {strides = array<i32>} : memref<64x32xf32, #tpu.memory_space<vmem>>, vector<8x32xf32>,
    %c56_134 = arith.constant 56 : index
    %c0_135 = arith.constant 0 : index
    %452 = vector.load %arg17[%c56_134, %c0_135] : memref<64x128xf32, #tpu.memory_space<vmem>>, vector<8x128xf32>
    %cst_136 = arith.constant dense<0.000000e+00> : vector<8x128xf32>
    %453 = tpu.matmul %450, %248, %cst_136 {dimension_numbers = #tpu.dot_dimension_numbers<[1], [0], [0], [1], [0, 0, 1, 1], [], []>} : vector<8x32xf32>, vector<32x128xf32>, vector<8x128xf32> -> vector<8x128xf32>
    %454 = arith.addf %452, %453 : vector<8x128xf32>
    %455 = vector.extract_strided_slice %454 {offsets = [0, 0], sizes = [8, 32], strides = [1, 1]} : vector<8x128xf32> to vector<8x32xf32>
    %456 = arith.negf %455 : vector<8x32xf32>
    %457 = math.exp %456 : vector<8x32xf32>
    %cst_137 = arith.constant 1.000000e+00 : f32
    %458 = vector.broadcast %cst_137 : f32 to vector<8x32xf32>
    %459 = arith.addf %458, %457 : vector<8x32xf32>
    %460 = arith.divf %458, %459 : vector<8x32xf32>
    %461 = vector.extract_strided_slice %454 {offsets = [0, 32], sizes = [8, 32], strides = [1, 1]} : vector<8x128xf32> to vector<8x32xf32>
    %462 = arith.negf %461 : vector<8x32xf32>
    %463 = math.exp %462 : vector<8x32xf32>
    %cst_138 = arith.constant 1.000000e+00 : f32
    %464 = vector.broadcast %cst_138 : f32 to vector<8x32xf32>
    %465 = arith.addf %464, %463 : vector<8x32xf32>
    %466 = arith.divf %464, %465 : vector<8x32xf32>
    %467 = vector.extract_strided_slice %454 {offsets = [0, 64], sizes = [8, 32], strides = [1, 1]} : vector<8x128xf32> to vector<8x32xf32>
    %468 = math.tanh %467 : vector<8x32xf32>
    %469 = vector.extract_strided_slice %454 {offsets = [0, 96], sizes = [8, 32], strides = [1, 1]} : vector<8x128xf32> to vector<8x32xf32>
    %470 = arith.negf %469 : vector<8x32xf32>
    %471 = math.exp %470 : vector<8x32xf32>
    %cst_139 = arith.constant 1.000000e+00 : f32
    %472 = vector.broadcast %cst_139 : f32 to vector<8x32xf32>
    %473 = arith.addf %472, %471 : vector<8x32xf32>
    %474 = arith.divf %472, %473 : vector<8x32xf32>
    %475 = arith.mulf %466, %448 : vector<8x32xf32>
    %476 = arith.mulf %460, %468 : vector<8x32xf32>
    %477 = arith.addf %475, %476 : vector<8x32xf32>
    %478 = math.tanh %477 : vector<8x32xf32>
    %479 = arith.mulf %474, %478 : vector<8x32xf32>
    %c56_140 = arith.constant 56 : index
    %c0_141 = arith.constant 0 : index
    %480 = vector.load %arg18[%c56_140, %c0_141] : memref<64x32xf32, #tpu.memory_space<vmem>>, vector<8x32xf32>
    tpu.vector_store %arg18[%c56_140, %c0_141], %479 {strides = array<i32>} : memref<64x32xf32, #tpu.memory_space<vmem>>, vector<8x32xf32>,
    %c0_142 = arith.constant 0 : index
    %c0_143 = arith.constant 0 : index
    %481 = vector.load %arg1[%c0_142, %c0_143] : memref<64x4xf32, #tpu.memory_space<vmem>>, vector<64x4xf32>
    %c0_144 = arith.constant 0 : index
    %c0_145 = arith.constant 0 : index
    %482 = vector.load %arg8[%c0_144, %c0_145] : memref<4x128xf32, #tpu.memory_space<vmem>>, vector<4x128xf32>
    %cst_146 = arith.constant dense<0.000000e+00> : vector<64x128xf32>
    %483 = tpu.matmul %481, %482, %cst_146 {dimension_numbers = #tpu.dot_dimension_numbers<[1], [0], [0], [1], [0, 0, 1, 1], [], []>} : vector<64x4xf32>, vector<4x128xf32>, vector<64x128xf32> -> vector<64x128xf32>
    %c0_147 = arith.constant 0 : index
    %c0_148 = arith.constant 0 : index
    %484 = vector.load %arg10[%c0_147, %c0_148] : memref<1x128xf32, #tpu.memory_space<vmem>>, vector<1x128xf32>
    %485 = vector.broadcast %484 : vector<1x128xf32> to vector<64x128xf32>
    %486 = arith.addf %483, %485 : vector<64x128xf32>
    %c0_149 = arith.constant 0 : index
    %c0_150 = arith.constant 0 : index
    %487 = vector.load %arg17[%c0_149, %c0_150] : memref<64x128xf32, #tpu.memory_space<vmem>>, vector<64x128xf32>
    tpu.vector_store %arg17[%c0_149, %c0_150], %486 {strides = array<i32>} : memref<64x128xf32, #tpu.memory_space<vmem>>, vector<64x128xf32>,
    %c0_151 = arith.constant 0 : index
    %c0_152 = arith.constant 0 : index
    %488 = vector.load %arg9[%c0_151, %c0_152] : memref<32x128xf32, #tpu.memory_space<vmem>>, vector<32x128xf32>
    %c0_153 = arith.constant 0 : index
    %c0_154 = arith.constant 0 : index
    %489 = vector.load %arg17[%c0_153, %c0_154] : memref<64x128xf32, #tpu.memory_space<vmem>>, vector<8x128xf32>
    %cst_155 = arith.constant dense<0.000000e+00> : vector<8x128xf32>
    %490 = tpu.matmul %239, %488, %cst_155 {dimension_numbers = #tpu.dot_dimension_numbers<[1], [0], [0], [1], [0, 0, 1, 1], [], []>} : vector<8x32xf32>, vector<32x128xf32>, vector<8x128xf32> -> vector<8x128xf32>
    %491 = arith.addf %489, %490 : vector<8x128xf32>
    %492 = vector.extract_strided_slice %491 {offsets = [0, 0], sizes = [8, 32], strides = [1, 1]} : vector<8x128xf32> to vector<8x32xf32>
    %493 = arith.negf %492 : vector<8x32xf32>
    %494 = math.exp %493 : vector<8x32xf32>
    %cst_156 = arith.constant 1.000000e+00 : f32
    %495 = vector.broadcast %cst_156 : f32 to vector<8x32xf32>
    %496 = arith.addf %495, %494 : vector<8x32xf32>
    %497 = arith.divf %495, %496 : vector<8x32xf32>
    %498 = vector.extract_strided_slice %491 {offsets = [0, 32], sizes = [8, 32], strides = [1, 1]} : vector<8x128xf32> to vector<8x32xf32>
    %499 = arith.negf %498 : vector<8x32xf32>
    %500 = math.exp %499 : vector<8x32xf32>
    %cst_157 = arith.constant 1.000000e+00 : f32
    %501 = vector.broadcast %cst_157 : f32 to vector<8x32xf32>
    %502 = arith.addf %501, %500 : vector<8x32xf32>
    %503 = arith.divf %501, %502 : vector<8x32xf32>
    %504 = vector.extract_strided_slice %491 {offsets = [0, 64], sizes = [8, 32], strides = [1, 1]} : vector<8x128xf32> to vector<8x32xf32>
    %505 = math.tanh %504 : vector<8x32xf32>
    %506 = vector.extract_strided_slice %491 {offsets = [0, 96], sizes = [8, 32], strides = [1, 1]} : vector<8x128xf32> to vector<8x32xf32>
    %507 = arith.negf %506 : vector<8x32xf32>
    %508 = math.exp %507 : vector<8x32xf32>
    %cst_158 = arith.constant 1.000000e+00 : f32
    %509 = vector.broadcast %cst_158 : f32 to vector<8x32xf32>
    %510 = arith.addf %509, %508 : vector<8x32xf32>
    %511 = arith.divf %509, %510 : vector<8x32xf32>
    %512 = arith.mulf %503, %237 : vector<8x32xf32>
    %513 = arith.mulf %497, %505 : vector<8x32xf32>
    %514 = arith.addf %512, %513 : vector<8x32xf32>
    %515 = math.tanh %514 : vector<8x32xf32>
    %516 = arith.mulf %511, %515 : vector<8x32xf32>
    %c0_159 = arith.constant 0 : index
    %c0_160 = arith.constant 0 : index
    %517 = vector.load %arg18[%c0_159, %c0_160] : memref<64x32xf32, #tpu.memory_space<vmem>>, vector<8x32xf32>
    tpu.vector_store %arg18[%c0_159, %c0_160], %516 {strides = array<i32>} : memref<64x32xf32, #tpu.memory_space<vmem>>, vector<8x32xf32>,
    %c8_161 = arith.constant 8 : index
    %c0_162 = arith.constant 0 : index
    %518 = vector.load %arg17[%c8_161, %c0_162] : memref<64x128xf32, #tpu.memory_space<vmem>>, vector<8x128xf32>
    %cst_163 = arith.constant dense<0.000000e+00> : vector<8x128xf32>
    %519 = tpu.matmul %516, %488, %cst_163 {dimension_numbers = #tpu.dot_dimension_numbers<[1], [0], [0], [1], [0, 0, 1, 1], [], []>} : vector<8x32xf32>, vector<32x128xf32>, vector<8x128xf32> -> vector<8x128xf32>
    %520 = arith.addf %518, %519 : vector<8x128xf32>
    %521 = vector.extract_strided_slice %520 {offsets = [0, 0], sizes = [8, 32], strides = [1, 1]} : vector<8x128xf32> to vector<8x32xf32>
    %522 = arith.negf %521 : vector<8x32xf32>
    %523 = math.exp %522 : vector<8x32xf32>
    %cst_164 = arith.constant 1.000000e+00 : f32
    %524 = vector.broadcast %cst_164 : f32 to vector<8x32xf32>
    %525 = arith.addf %524, %523 : vector<8x32xf32>
    %526 = arith.divf %524, %525 : vector<8x32xf32>
    %527 = vector.extract_strided_slice %520 {offsets = [0, 32], sizes = [8, 32], strides = [1, 1]} : vector<8x128xf32> to vector<8x32xf32>
    %528 = arith.negf %527 : vector<8x32xf32>
    %529 = math.exp %528 : vector<8x32xf32>
    %cst_165 = arith.constant 1.000000e+00 : f32
    %530 = vector.broadcast %cst_165 : f32 to vector<8x32xf32>
    %531 = arith.addf %530, %529 : vector<8x32xf32>
    %532 = arith.divf %530, %531 : vector<8x32xf32>
    %533 = vector.extract_strided_slice %520 {offsets = [0, 64], sizes = [8, 32], strides = [1, 1]} : vector<8x128xf32> to vector<8x32xf32>
    %534 = math.tanh %533 : vector<8x32xf32>
    %535 = vector.extract_strided_slice %520 {offsets = [0, 96], sizes = [8, 32], strides = [1, 1]} : vector<8x128xf32> to vector<8x32xf32>
    %536 = arith.negf %535 : vector<8x32xf32>
    %537 = math.exp %536 : vector<8x32xf32>
    %cst_166 = arith.constant 1.000000e+00 : f32
    %538 = vector.broadcast %cst_166 : f32 to vector<8x32xf32>
    %539 = arith.addf %538, %537 : vector<8x32xf32>
    %540 = arith.divf %538, %539 : vector<8x32xf32>
    %541 = arith.mulf %532, %514 : vector<8x32xf32>
    %542 = arith.mulf %526, %534 : vector<8x32xf32>
    %543 = arith.addf %541, %542 : vector<8x32xf32>
    %544 = math.tanh %543 : vector<8x32xf32>
    %545 = arith.mulf %540, %544 : vector<8x32xf32>
    %c8_167 = arith.constant 8 : index
    %c0_168 = arith.constant 0 : index
    %546 = vector.load %arg18[%c8_167, %c0_168] : memref<64x32xf32, #tpu.memory_space<vmem>>, vector<8x32xf32>
    tpu.vector_store %arg18[%c8_167, %c0_168], %545 {strides = array<i32>} : memref<64x32xf32, #tpu.memory_space<vmem>>, vector<8x32xf32>,
    %c16_169 = arith.constant 16 : index
    %c0_170 = arith.constant 0 : index
    %547 = vector.load %arg17[%c16_169, %c0_170] : memref<64x128xf32, #tpu.memory_space<vmem>>, vector<8x128xf32>
    %cst_171 = arith.constant dense<0.000000e+00> : vector<8x128xf32>
    %548 = tpu.matmul %545, %488, %cst_171 {dimension_numbers = #tpu.dot_dimension_numbers<[1], [0], [0], [1], [0, 0, 1, 1], [], []>} : vector<8x32xf32>, vector<32x128xf32>, vector<8x128xf32> -> vector<8x128xf32>
    %549 = arith.addf %547, %548 : vector<8x128xf32>
    %550 = vector.extract_strided_slice %549 {offsets = [0, 0], sizes = [8, 32], strides = [1, 1]} : vector<8x128xf32> to vector<8x32xf32>
    %551 = arith.negf %550 : vector<8x32xf32>
    %552 = math.exp %551 : vector<8x32xf32>
    %cst_172 = arith.constant 1.000000e+00 : f32
    %553 = vector.broadcast %cst_172 : f32 to vector<8x32xf32>
    %554 = arith.addf %553, %552 : vector<8x32xf32>
    %555 = arith.divf %553, %554 : vector<8x32xf32>
    %556 = vector.extract_strided_slice %549 {offsets = [0, 32], sizes = [8, 32], strides = [1, 1]} : vector<8x128xf32> to vector<8x32xf32>
    %557 = arith.negf %556 : vector<8x32xf32>
    %558 = math.exp %557 : vector<8x32xf32>
    %cst_173 = arith.constant 1.000000e+00 : f32
    %559 = vector.broadcast %cst_173 : f32 to vector<8x32xf32>
    %560 = arith.addf %559, %558 : vector<8x32xf32>
    %561 = arith.divf %559, %560 : vector<8x32xf32>
    %562 = vector.extract_strided_slice %549 {offsets = [0, 64], sizes = [8, 32], strides = [1, 1]} : vector<8x128xf32> to vector<8x32xf32>
    %563 = math.tanh %562 : vector<8x32xf32>
    %564 = vector.extract_strided_slice %549 {offsets = [0, 96], sizes = [8, 32], strides = [1, 1]} : vector<8x128xf32> to vector<8x32xf32>
    %565 = arith.negf %564 : vector<8x32xf32>
    %566 = math.exp %565 : vector<8x32xf32>
    %cst_174 = arith.constant 1.000000e+00 : f32
    %567 = vector.broadcast %cst_174 : f32 to vector<8x32xf32>
    %568 = arith.addf %567, %566 : vector<8x32xf32>
    %569 = arith.divf %567, %568 : vector<8x32xf32>
    %570 = arith.mulf %561, %543 : vector<8x32xf32>
    %571 = arith.mulf %555, %563 : vector<8x32xf32>
    %572 = arith.addf %570, %571 : vector<8x32xf32>
    %573 = math.tanh %572 : vector<8x32xf32>
    %574 = arith.mulf %569, %573 : vector<8x32xf32>
    %c16_175 = arith.constant 16 : index
    %c0_176 = arith.constant 0 : index
    %575 = vector.load %arg18[%c16_175, %c0_176] : memref<64x32xf32, #tpu.memory_space<vmem>>, vector<8x32xf32>
    tpu.vector_store %arg18[%c16_175, %c0_176], %574 {strides = array<i32>} : memref<64x32xf32, #tpu.memory_space<vmem>>, vector<8x32xf32>,
    %c24_177 = arith.constant 24 : index
    %c0_178 = arith.constant 0 : index
    %576 = vector.load %arg17[%c24_177, %c0_178] : memref<64x128xf32, #tpu.memory_space<vmem>>, vector<8x128xf32>
    %cst_179 = arith.constant dense<0.000000e+00> : vector<8x128xf32>
    %577 = tpu.matmul %574, %488, %cst_179 {dimension_numbers = #tpu.dot_dimension_numbers<[1], [0], [0], [1], [0, 0, 1, 1], [], []>} : vector<8x32xf32>, vector<32x128xf32>, vector<8x128xf32> -> vector<8x128xf32>
    %578 = arith.addf %576, %577 : vector<8x128xf32>
    %579 = vector.extract_strided_slice %578 {offsets = [0, 0], sizes = [8, 32], strides = [1, 1]} : vector<8x128xf32> to vector<8x32xf32>
    %580 = arith.negf %579 : vector<8x32xf32>
    %581 = math.exp %580 : vector<8x32xf32>
    %cst_180 = arith.constant 1.000000e+00 : f32
    %582 = vector.broadcast %cst_180 : f32 to vector<8x32xf32>
    %583 = arith.addf %582, %581 : vector<8x32xf32>
    %584 = arith.divf %582, %583 : vector<8x32xf32>
    %585 = vector.extract_strided_slice %578 {offsets = [0, 32], sizes = [8, 32], strides = [1, 1]} : vector<8x128xf32> to vector<8x32xf32>
    %586 = arith.negf %585 : vector<8x32xf32>
    %587 = math.exp %586 : vector<8x32xf32>
    %cst_181 = arith.constant 1.000000e+00 : f32
    %588 = vector.broadcast %cst_181 : f32 to vector<8x32xf32>
    %589 = arith.addf %588, %587 : vector<8x32xf32>
    %590 = arith.divf %588, %589 : vector<8x32xf32>
    %591 = vector.extract_strided_slice %578 {offsets = [0, 64], sizes = [8, 32], strides = [1, 1]} : vector<8x128xf32> to vector<8x32xf32>
    %592 = math.tanh %591 : vector<8x32xf32>
    %593 = vector.extract_strided_slice %578 {offsets = [0, 96], sizes = [8, 32], strides = [1, 1]} : vector<8x128xf32> to vector<8x32xf32>
    %594 = arith.negf %593 : vector<8x32xf32>
    %595 = math.exp %594 : vector<8x32xf32>
    %cst_182 = arith.constant 1.000000e+00 : f32
    %596 = vector.broadcast %cst_182 : f32 to vector<8x32xf32>
    %597 = arith.addf %596, %595 : vector<8x32xf32>
    %598 = arith.divf %596, %597 : vector<8x32xf32>
    %599 = arith.mulf %590, %572 : vector<8x32xf32>
    %600 = arith.mulf %584, %592 : vector<8x32xf32>
    %601 = arith.addf %599, %600 : vector<8x32xf32>
    %602 = math.tanh %601 : vector<8x32xf32>
    %603 = arith.mulf %598, %602 : vector<8x32xf32>
    %c24_183 = arith.constant 24 : index
    %c0_184 = arith.constant 0 : index
    %604 = vector.load %arg18[%c24_183, %c0_184] : memref<64x32xf32, #tpu.memory_space<vmem>>, vector<8x32xf32>
    tpu.vector_store %arg18[%c24_183, %c0_184], %603 {strides = array<i32>} : memref<64x32xf32, #tpu.memory_space<vmem>>, vector<8x32xf32>,
    %c32_185 = arith.constant 32 : index
    %c0_186 = arith.constant 0 : index
    %605 = vector.load %arg17[%c32_185, %c0_186] : memref<64x128xf32, #tpu.memory_space<vmem>>, vector<8x128xf32>
    %cst_187 = arith.constant dense<0.000000e+00> : vector<8x128xf32>
    %606 = tpu.matmul %603, %488, %cst_187 {dimension_numbers = #tpu.dot_dimension_numbers<[1], [0], [0], [1], [0, 0, 1, 1], [], []>} : vector<8x32xf32>, vector<32x128xf32>, vector<8x128xf32> -> vector<8x128xf32>
    %607 = arith.addf %605, %606 : vector<8x128xf32>
    %608 = vector.extract_strided_slice %607 {offsets = [0, 0], sizes = [8, 32], strides = [1, 1]} : vector<8x128xf32> to vector<8x32xf32>
    %609 = arith.negf %608 : vector<8x32xf32>
    %610 = math.exp %609 : vector<8x32xf32>
    %cst_188 = arith.constant 1.000000e+00 : f32
    %611 = vector.broadcast %cst_188 : f32 to vector<8x32xf32>
    %612 = arith.addf %611, %610 : vector<8x32xf32>
    %613 = arith.divf %611, %612 : vector<8x32xf32>
    %614 = vector.extract_strided_slice %607 {offsets = [0, 32], sizes = [8, 32], strides = [1, 1]} : vector<8x128xf32> to vector<8x32xf32>
    %615 = arith.negf %614 : vector<8x32xf32>
    %616 = math.exp %615 : vector<8x32xf32>
    %cst_189 = arith.constant 1.000000e+00 : f32
    %617 = vector.broadcast %cst_189 : f32 to vector<8x32xf32>
    %618 = arith.addf %617, %616 : vector<8x32xf32>
    %619 = arith.divf %617, %618 : vector<8x32xf32>
    %620 = vector.extract_strided_slice %607 {offsets = [0, 64], sizes = [8, 32], strides = [1, 1]} : vector<8x128xf32> to vector<8x32xf32>
    %621 = math.tanh %620 : vector<8x32xf32>
    %622 = vector.extract_strided_slice %607 {offsets = [0, 96], sizes = [8, 32], strides = [1, 1]} : vector<8x128xf32> to vector<8x32xf32>
    %623 = arith.negf %622 : vector<8x32xf32>
    %624 = math.exp %623 : vector<8x32xf32>
    %cst_190 = arith.constant 1.000000e+00 : f32
    %625 = vector.broadcast %cst_190 : f32 to vector<8x32xf32>
    %626 = arith.addf %625, %624 : vector<8x32xf32>
    %627 = arith.divf %625, %626 : vector<8x32xf32>
    %628 = arith.mulf %619, %601 : vector<8x32xf32>
    %629 = arith.mulf %613, %621 : vector<8x32xf32>
    %630 = arith.addf %628, %629 : vector<8x32xf32>
    %631 = math.tanh %630 : vector<8x32xf32>
    %632 = arith.mulf %627, %631 : vector<8x32xf32>
    %c32_191 = arith.constant 32 : index
    %c0_192 = arith.constant 0 : index
    %633 = vector.load %arg18[%c32_191, %c0_192] : memref<64x32xf32, #tpu.memory_space<vmem>>, vector<8x32xf32>
    tpu.vector_store %arg18[%c32_191, %c0_192], %632 {strides = array<i32>} : memref<64x32xf32, #tpu.memory_space<vmem>>, vector<8x32xf32>,
    %c40_193 = arith.constant 40 : index
    %c0_194 = arith.constant 0 : index
    %634 = vector.load %arg17[%c40_193, %c0_194] : memref<64x128xf32, #tpu.memory_space<vmem>>, vector<8x128xf32>
    %cst_195 = arith.constant dense<0.000000e+00> : vector<8x128xf32>
    %635 = tpu.matmul %632, %488, %cst_195 {dimension_numbers = #tpu.dot_dimension_numbers<[1], [0], [0], [1], [0, 0, 1, 1], [], []>} : vector<8x32xf32>, vector<32x128xf32>, vector<8x128xf32> -> vector<8x128xf32>
    %636 = arith.addf %634, %635 : vector<8x128xf32>
    %637 = vector.extract_strided_slice %636 {offsets = [0, 0], sizes = [8, 32], strides = [1, 1]} : vector<8x128xf32> to vector<8x32xf32>
    %638 = arith.negf %637 : vector<8x32xf32>
    %639 = math.exp %638 : vector<8x32xf32>
    %cst_196 = arith.constant 1.000000e+00 : f32
    %640 = vector.broadcast %cst_196 : f32 to vector<8x32xf32>
    %641 = arith.addf %640, %639 : vector<8x32xf32>
    %642 = arith.divf %640, %641 : vector<8x32xf32>
    %643 = vector.extract_strided_slice %636 {offsets = [0, 32], sizes = [8, 32], strides = [1, 1]} : vector<8x128xf32> to vector<8x32xf32>
    %644 = arith.negf %643 : vector<8x32xf32>
    %645 = math.exp %644 : vector<8x32xf32>
    %cst_197 = arith.constant 1.000000e+00 : f32
    %646 = vector.broadcast %cst_197 : f32 to vector<8x32xf32>
    %647 = arith.addf %646, %645 : vector<8x32xf32>
    %648 = arith.divf %646, %647 : vector<8x32xf32>
    %649 = vector.extract_strided_slice %636 {offsets = [0, 64], sizes = [8, 32], strides = [1, 1]} : vector<8x128xf32> to vector<8x32xf32>
    %650 = math.tanh %649 : vector<8x32xf32>
    %651 = vector.extract_strided_slice %636 {offsets = [0, 96], sizes = [8, 32], strides = [1, 1]} : vector<8x128xf32> to vector<8x32xf32>
    %652 = arith.negf %651 : vector<8x32xf32>
    %653 = math.exp %652 : vector<8x32xf32>
    %cst_198 = arith.constant 1.000000e+00 : f32
    %654 = vector.broadcast %cst_198 : f32 to vector<8x32xf32>
    %655 = arith.addf %654, %653 : vector<8x32xf32>
    %656 = arith.divf %654, %655 : vector<8x32xf32>
    %657 = arith.mulf %648, %630 : vector<8x32xf32>
    %658 = arith.mulf %642, %650 : vector<8x32xf32>
    %659 = arith.addf %657, %658 : vector<8x32xf32>
    %660 = math.tanh %659 : vector<8x32xf32>
    %661 = arith.mulf %656, %660 : vector<8x32xf32>
    %c40_199 = arith.constant 40 : index
    %c0_200 = arith.constant 0 : index
    %662 = vector.load %arg18[%c40_199, %c0_200] : memref<64x32xf32, #tpu.memory_space<vmem>>, vector<8x32xf32>
    tpu.vector_store %arg18[%c40_199, %c0_200], %661 {strides = array<i32>} : memref<64x32xf32, #tpu.memory_space<vmem>>, vector<8x32xf32>,
    %c48_201 = arith.constant 48 : index
    %c0_202 = arith.constant 0 : index
    %663 = vector.load %arg17[%c48_201, %c0_202] : memref<64x128xf32, #tpu.memory_space<vmem>>, vector<8x128xf32>
    %cst_203 = arith.constant dense<0.000000e+00> : vector<8x128xf32>
    %664 = tpu.matmul %661, %488, %cst_203 {dimension_numbers = #tpu.dot_dimension_numbers<[1], [0], [0], [1], [0, 0, 1, 1], [], []>} : vector<8x32xf32>, vector<32x128xf32>, vector<8x128xf32> -> vector<8x128xf32>
    %665 = arith.addf %663, %664 : vector<8x128xf32>
    %666 = vector.extract_strided_slice %665 {offsets = [0, 0], sizes = [8, 32], strides = [1, 1]} : vector<8x128xf32> to vector<8x32xf32>
    %667 = arith.negf %666 : vector<8x32xf32>
    %668 = math.exp %667 : vector<8x32xf32>
    %cst_204 = arith.constant 1.000000e+00 : f32
    %669 = vector.broadcast %cst_204 : f32 to vector<8x32xf32>
    %670 = arith.addf %669, %668 : vector<8x32xf32>
    %671 = arith.divf %669, %670 : vector<8x32xf32>
    %672 = vector.extract_strided_slice %665 {offsets = [0, 32], sizes = [8, 32], strides = [1, 1]} : vector<8x128xf32> to vector<8x32xf32>
    %673 = arith.negf %672 : vector<8x32xf32>
    %674 = math.exp %673 : vector<8x32xf32>
    %cst_205 = arith.constant 1.000000e+00 : f32
    %675 = vector.broadcast %cst_205 : f32 to vector<8x32xf32>
    %676 = arith.addf %675, %674 : vector<8x32xf32>
    %677 = arith.divf %675, %676 : vector<8x32xf32>
    %678 = vector.extract_strided_slice %665 {offsets = [0, 64], sizes = [8, 32], strides = [1, 1]} : vector<8x128xf32> to vector<8x32xf32>
    %679 = math.tanh %678 : vector<8x32xf32>
    %680 = vector.extract_strided_slice %665 {offsets = [0, 96], sizes = [8, 32], strides = [1, 1]} : vector<8x128xf32> to vector<8x32xf32>
    %681 = arith.negf %680 : vector<8x32xf32>
    %682 = math.exp %681 : vector<8x32xf32>
    %cst_206 = arith.constant 1.000000e+00 : f32
    %683 = vector.broadcast %cst_206 : f32 to vector<8x32xf32>
    %684 = arith.addf %683, %682 : vector<8x32xf32>
    %685 = arith.divf %683, %684 : vector<8x32xf32>
    %686 = arith.mulf %677, %659 : vector<8x32xf32>
    %687 = arith.mulf %671, %679 : vector<8x32xf32>
    %688 = arith.addf %686, %687 : vector<8x32xf32>
    %689 = math.tanh %688 : vector<8x32xf32>
    %690 = arith.mulf %685, %689 : vector<8x32xf32>
    %c48_207 = arith.constant 48 : index
    %c0_208 = arith.constant 0 : index
    %691 = vector.load %arg18[%c48_207, %c0_208] : memref<64x32xf32, #tpu.memory_space<vmem>>, vector<8x32xf32>
    tpu.vector_store %arg18[%c48_207, %c0_208], %690 {strides = array<i32>} : memref<64x32xf32, #tpu.memory_space<vmem>>, vector<8x32xf32>,
    %c56_209 = arith.constant 56 : index
    %c0_210 = arith.constant 0 : index
    %692 = vector.load %arg17[%c56_209, %c0_210] : memref<64x128xf32, #tpu.memory_space<vmem>>, vector<8x128xf32>
    %cst_211 = arith.constant dense<0.000000e+00> : vector<8x128xf32>
    %693 = tpu.matmul %690, %488, %cst_211 {dimension_numbers = #tpu.dot_dimension_numbers<[1], [0], [0], [1], [0, 0, 1, 1], [], []>} : vector<8x32xf32>, vector<32x128xf32>, vector<8x128xf32> -> vector<8x128xf32>
    %694 = arith.addf %692, %693 : vector<8x128xf32>
    %695 = vector.extract_strided_slice %694 {offsets = [0, 0], sizes = [8, 32], strides = [1, 1]} : vector<8x128xf32> to vector<8x32xf32>
    %696 = arith.negf %695 : vector<8x32xf32>
    %697 = math.exp %696 : vector<8x32xf32>
    %cst_212 = arith.constant 1.000000e+00 : f32
    %698 = vector.broadcast %cst_212 : f32 to vector<8x32xf32>
    %699 = arith.addf %698, %697 : vector<8x32xf32>
    %700 = arith.divf %698, %699 : vector<8x32xf32>
    %701 = vector.extract_strided_slice %694 {offsets = [0, 32], sizes = [8, 32], strides = [1, 1]} : vector<8x128xf32> to vector<8x32xf32>
    %702 = arith.negf %701 : vector<8x32xf32>
    %703 = math.exp %702 : vector<8x32xf32>
    %cst_213 = arith.constant 1.000000e+00 : f32
    %704 = vector.broadcast %cst_213 : f32 to vector<8x32xf32>
    %705 = arith.addf %704, %703 : vector<8x32xf32>
    %706 = arith.divf %704, %705 : vector<8x32xf32>
    %707 = vector.extract_strided_slice %694 {offsets = [0, 64], sizes = [8, 32], strides = [1, 1]} : vector<8x128xf32> to vector<8x32xf32>
    %708 = math.tanh %707 : vector<8x32xf32>
    %709 = vector.extract_strided_slice %694 {offsets = [0, 96], sizes = [8, 32], strides = [1, 1]} : vector<8x128xf32> to vector<8x32xf32>
    %710 = arith.negf %709 : vector<8x32xf32>
    %711 = math.exp %710 : vector<8x32xf32>
    %cst_214 = arith.constant 1.000000e+00 : f32
    %712 = vector.broadcast %cst_214 : f32 to vector<8x32xf32>
    %713 = arith.addf %712, %711 : vector<8x32xf32>
    %714 = arith.divf %712, %713 : vector<8x32xf32>
    %715 = arith.mulf %706, %688 : vector<8x32xf32>
    %716 = arith.mulf %700, %708 : vector<8x32xf32>
    %717 = arith.addf %715, %716 : vector<8x32xf32>
    %718 = math.tanh %717 : vector<8x32xf32>
    %719 = arith.mulf %714, %718 : vector<8x32xf32>
    %c56_215 = arith.constant 56 : index
    %c0_216 = arith.constant 0 : index
    %720 = vector.load %arg18[%c56_215, %c0_216] : memref<64x32xf32, #tpu.memory_space<vmem>>, vector<8x32xf32>
    tpu.vector_store %arg18[%c56_215, %c0_216], %719 {strides = array<i32>} : memref<64x32xf32, #tpu.memory_space<vmem>>, vector<8x32xf32>,
    %c0_217 = arith.constant 0 : index
    %c0_218 = arith.constant 0 : index
    %721 = vector.load %arg18[%c0_217, %c0_218] : memref<64x32xf32, #tpu.memory_space<vmem>>, vector<64x32xf32>
    %c0_219 = arith.constant 0 : index
    %c0_220 = arith.constant 0 : index
    %722 = vector.load %arg11[%c0_219, %c0_220] : memref<32x128xf32, #tpu.memory_space<vmem>>, vector<32x128xf32>
    %cst_221 = arith.constant dense<0.000000e+00> : vector<64x128xf32>
    %723 = tpu.matmul %721, %722, %cst_221 {dimension_numbers = #tpu.dot_dimension_numbers<[1], [0], [0], [1], [0, 0, 1, 1], [], []>} : vector<64x32xf32>, vector<32x128xf32>, vector<64x128xf32> -> vector<64x128xf32>
    %c0_222 = arith.constant 0 : index
    %c0_223 = arith.constant 0 : index
    %724 = vector.load %arg13[%c0_222, %c0_223] : memref<1x128xf32, #tpu.memory_space<vmem>>, vector<1x128xf32>
    %725 = vector.broadcast %724 : vector<1x128xf32> to vector<64x128xf32>
    %726 = arith.addf %723, %725 : vector<64x128xf32>
    %c0_224 = arith.constant 0 : index
    %c0_225 = arith.constant 0 : index
    %727 = vector.load %arg17[%c0_224, %c0_225] : memref<64x128xf32, #tpu.memory_space<vmem>>, vector<64x128xf32>
    tpu.vector_store %arg17[%c0_224, %c0_225], %726 {strides = array<i32>} : memref<64x128xf32, #tpu.memory_space<vmem>>, vector<64x128xf32>,
    %c0_226 = arith.constant 0 : index
    %c0_227 = arith.constant 0 : index
    %728 = vector.load %arg12[%c0_226, %c0_227] : memref<32x128xf32, #tpu.memory_space<vmem>>, vector<32x128xf32>
    %c0_228 = arith.constant 0 : index
    %c0_229 = arith.constant 0 : index
    %729 = vector.load %arg17[%c0_228, %c0_229] : memref<64x128xf32, #tpu.memory_space<vmem>>, vector<8x128xf32>
    %cst_230 = arith.constant dense<0.000000e+00> : vector<8x128xf32>
    %730 = tpu.matmul %479, %728, %cst_230 {dimension_numbers = #tpu.dot_dimension_numbers<[1], [0], [0], [1], [0, 0, 1, 1], [], []>} : vector<8x32xf32>, vector<32x128xf32>, vector<8x128xf32> -> vector<8x128xf32>
    %731 = arith.addf %729, %730 : vector<8x128xf32>
    %732 = vector.extract_strided_slice %731 {offsets = [0, 0], sizes = [8, 32], strides = [1, 1]} : vector<8x128xf32> to vector<8x32xf32>
    %733 = arith.negf %732 : vector<8x32xf32>
    %734 = math.exp %733 : vector<8x32xf32>
    %cst_231 = arith.constant 1.000000e+00 : f32
    %735 = vector.broadcast %cst_231 : f32 to vector<8x32xf32>
    %736 = arith.addf %735, %734 : vector<8x32xf32>
    %737 = arith.divf %735, %736 : vector<8x32xf32>
    %738 = vector.extract_strided_slice %731 {offsets = [0, 32], sizes = [8, 32], strides = [1, 1]} : vector<8x128xf32> to vector<8x32xf32>
    %739 = arith.negf %738 : vector<8x32xf32>
    %740 = math.exp %739 : vector<8x32xf32>
    %cst_232 = arith.constant 1.000000e+00 : f32
    %741 = vector.broadcast %cst_232 : f32 to vector<8x32xf32>
    %742 = arith.addf %741, %740 : vector<8x32xf32>
    %743 = arith.divf %741, %742 : vector<8x32xf32>
    %744 = vector.extract_strided_slice %731 {offsets = [0, 64], sizes = [8, 32], strides = [1, 1]} : vector<8x128xf32> to vector<8x32xf32>
    %745 = math.tanh %744 : vector<8x32xf32>
    %746 = vector.extract_strided_slice %731 {offsets = [0, 96], sizes = [8, 32], strides = [1, 1]} : vector<8x128xf32> to vector<8x32xf32>
    %747 = arith.negf %746 : vector<8x32xf32>
    %748 = math.exp %747 : vector<8x32xf32>
    %cst_233 = arith.constant 1.000000e+00 : f32
    %749 = vector.broadcast %cst_233 : f32 to vector<8x32xf32>
    %750 = arith.addf %749, %748 : vector<8x32xf32>
    %751 = arith.divf %749, %750 : vector<8x32xf32>
    %752 = arith.mulf %743, %477 : vector<8x32xf32>
    %753 = arith.mulf %737, %745 : vector<8x32xf32>
    %754 = arith.addf %752, %753 : vector<8x32xf32>
    %755 = math.tanh %754 : vector<8x32xf32>
    %756 = arith.mulf %751, %755 : vector<8x32xf32>
    %c0_234 = arith.constant 0 : index
    %c0_235 = arith.constant 0 : index
    %757 = vector.load %arg18[%c0_234, %c0_235] : memref<64x32xf32, #tpu.memory_space<vmem>>, vector<8x32xf32>
    tpu.vector_store %arg18[%c0_234, %c0_235], %756 {strides = array<i32>} : memref<64x32xf32, #tpu.memory_space<vmem>>, vector<8x32xf32>,
    %c8_236 = arith.constant 8 : index
    %c0_237 = arith.constant 0 : index
    %758 = vector.load %arg17[%c8_236, %c0_237] : memref<64x128xf32, #tpu.memory_space<vmem>>, vector<8x128xf32>
    %cst_238 = arith.constant dense<0.000000e+00> : vector<8x128xf32>
    %759 = tpu.matmul %756, %728, %cst_238 {dimension_numbers = #tpu.dot_dimension_numbers<[1], [0], [0], [1], [0, 0, 1, 1], [], []>} : vector<8x32xf32>, vector<32x128xf32>, vector<8x128xf32> -> vector<8x128xf32>
    %760 = arith.addf %758, %759 : vector<8x128xf32>
    %761 = vector.extract_strided_slice %760 {offsets = [0, 0], sizes = [8, 32], strides = [1, 1]} : vector<8x128xf32> to vector<8x32xf32>
    %762 = arith.negf %761 : vector<8x32xf32>
    %763 = math.exp %762 : vector<8x32xf32>
    %cst_239 = arith.constant 1.000000e+00 : f32
    %764 = vector.broadcast %cst_239 : f32 to vector<8x32xf32>
    %765 = arith.addf %764, %763 : vector<8x32xf32>
    %766 = arith.divf %764, %765 : vector<8x32xf32>
    %767 = vector.extract_strided_slice %760 {offsets = [0, 32], sizes = [8, 32], strides = [1, 1]} : vector<8x128xf32> to vector<8x32xf32>
    %768 = arith.negf %767 : vector<8x32xf32>
    %769 = math.exp %768 : vector<8x32xf32>
    %cst_240 = arith.constant 1.000000e+00 : f32
    %770 = vector.broadcast %cst_240 : f32 to vector<8x32xf32>
    %771 = arith.addf %770, %769 : vector<8x32xf32>
    %772 = arith.divf %770, %771 : vector<8x32xf32>
    %773 = vector.extract_strided_slice %760 {offsets = [0, 64], sizes = [8, 32], strides = [1, 1]} : vector<8x128xf32> to vector<8x32xf32>
    %774 = math.tanh %773 : vector<8x32xf32>
    %775 = vector.extract_strided_slice %760 {offsets = [0, 96], sizes = [8, 32], strides = [1, 1]} : vector<8x128xf32> to vector<8x32xf32>
    %776 = arith.negf %775 : vector<8x32xf32>
    %777 = math.exp %776 : vector<8x32xf32>
    %cst_241 = arith.constant 1.000000e+00 : f32
    %778 = vector.broadcast %cst_241 : f32 to vector<8x32xf32>
    %779 = arith.addf %778, %777 : vector<8x32xf32>
    %780 = arith.divf %778, %779 : vector<8x32xf32>
    %781 = arith.mulf %772, %754 : vector<8x32xf32>
    %782 = arith.mulf %766, %774 : vector<8x32xf32>
    %783 = arith.addf %781, %782 : vector<8x32xf32>
    %784 = math.tanh %783 : vector<8x32xf32>
    %785 = arith.mulf %780, %784 : vector<8x32xf32>
    %c8_242 = arith.constant 8 : index
    %c0_243 = arith.constant 0 : index
    %786 = vector.load %arg18[%c8_242, %c0_243] : memref<64x32xf32, #tpu.memory_space<vmem>>, vector<8x32xf32>
    tpu.vector_store %arg18[%c8_242, %c0_243], %785 {strides = array<i32>} : memref<64x32xf32, #tpu.memory_space<vmem>>, vector<8x32xf32>,
    %c16_244 = arith.constant 16 : index
    %c0_245 = arith.constant 0 : index
    %787 = vector.load %arg17[%c16_244, %c0_245] : memref<64x128xf32, #tpu.memory_space<vmem>>, vector<8x128xf32>
    %cst_246 = arith.constant dense<0.000000e+00> : vector<8x128xf32>
    %788 = tpu.matmul %785, %728, %cst_246 {dimension_numbers = #tpu.dot_dimension_numbers<[1], [0], [0], [1], [0, 0, 1, 1], [], []>} : vector<8x32xf32>, vector<32x128xf32>, vector<8x128xf32> -> vector<8x128xf32>
    %789 = arith.addf %787, %788 : vector<8x128xf32>
    %790 = vector.extract_strided_slice %789 {offsets = [0, 0], sizes = [8, 32], strides = [1, 1]} : vector<8x128xf32> to vector<8x32xf32>
    %791 = arith.negf %790 : vector<8x32xf32>
    %792 = math.exp %791 : vector<8x32xf32>
    %cst_247 = arith.constant 1.000000e+00 : f32
    %793 = vector.broadcast %cst_247 : f32 to vector<8x32xf32>
    %794 = arith.addf %793, %792 : vector<8x32xf32>
    %795 = arith.divf %793, %794 : vector<8x32xf32>
    %796 = vector.extract_strided_slice %789 {offsets = [0, 32], sizes = [8, 32], strides = [1, 1]} : vector<8x128xf32> to vector<8x32xf32>
    %797 = arith.negf %796 : vector<8x32xf32>
    %798 = math.exp %797 : vector<8x32xf32>
    %cst_248 = arith.constant 1.000000e+00 : f32
    %799 = vector.broadcast %cst_248 : f32 to vector<8x32xf32>
    %800 = arith.addf %799, %798 : vector<8x32xf32>
    %801 = arith.divf %799, %800 : vector<8x32xf32>
    %802 = vector.extract_strided_slice %789 {offsets = [0, 64], sizes = [8, 32], strides = [1, 1]} : vector<8x128xf32> to vector<8x32xf32>
    %803 = math.tanh %802 : vector<8x32xf32>
    %804 = vector.extract_strided_slice %789 {offsets = [0, 96], sizes = [8, 32], strides = [1, 1]} : vector<8x128xf32> to vector<8x32xf32>
    %805 = arith.negf %804 : vector<8x32xf32>
    %806 = math.exp %805 : vector<8x32xf32>
    %cst_249 = arith.constant 1.000000e+00 : f32
    %807 = vector.broadcast %cst_249 : f32 to vector<8x32xf32>
    %808 = arith.addf %807, %806 : vector<8x32xf32>
    %809 = arith.divf %807, %808 : vector<8x32xf32>
    %810 = arith.mulf %801, %783 : vector<8x32xf32>
    %811 = arith.mulf %795, %803 : vector<8x32xf32>
    %812 = arith.addf %810, %811 : vector<8x32xf32>
    %813 = math.tanh %812 : vector<8x32xf32>
    %814 = arith.mulf %809, %813 : vector<8x32xf32>
    %c16_250 = arith.constant 16 : index
    %c0_251 = arith.constant 0 : index
    %815 = vector.load %arg18[%c16_250, %c0_251] : memref<64x32xf32, #tpu.memory_space<vmem>>, vector<8x32xf32>
    tpu.vector_store %arg18[%c16_250, %c0_251], %814 {strides = array<i32>} : memref<64x32xf32, #tpu.memory_space<vmem>>, vector<8x32xf32>,
    %c24_252 = arith.constant 24 : index
    %c0_253 = arith.constant 0 : index
    %816 = vector.load %arg17[%c24_252, %c0_253] : memref<64x128xf32, #tpu.memory_space<vmem>>, vector<8x128xf32>
    %cst_254 = arith.constant dense<0.000000e+00> : vector<8x128xf32>
    %817 = tpu.matmul %814, %728, %cst_254 {dimension_numbers = #tpu.dot_dimension_numbers<[1], [0], [0], [1], [0, 0, 1, 1], [], []>} : vector<8x32xf32>, vector<32x128xf32>, vector<8x128xf32> -> vector<8x128xf32>
    %818 = arith.addf %816, %817 : vector<8x128xf32>
    %819 = vector.extract_strided_slice %818 {offsets = [0, 0], sizes = [8, 32], strides = [1, 1]} : vector<8x128xf32> to vector<8x32xf32>
    %820 = arith.negf %819 : vector<8x32xf32>
    %821 = math.exp %820 : vector<8x32xf32>
    %cst_255 = arith.constant 1.000000e+00 : f32
    %822 = vector.broadcast %cst_255 : f32 to vector<8x32xf32>
    %823 = arith.addf %822, %821 : vector<8x32xf32>
    %824 = arith.divf %822, %823 : vector<8x32xf32>
    %825 = vector.extract_strided_slice %818 {offsets = [0, 32], sizes = [8, 32], strides = [1, 1]} : vector<8x128xf32> to vector<8x32xf32>
    %826 = arith.negf %825 : vector<8x32xf32>
    %827 = math.exp %826 : vector<8x32xf32>
    %cst_256 = arith.constant 1.000000e+00 : f32
    %828 = vector.broadcast %cst_256 : f32 to vector<8x32xf32>
    %829 = arith.addf %828, %827 : vector<8x32xf32>
    %830 = arith.divf %828, %829 : vector<8x32xf32>
    %831 = vector.extract_strided_slice %818 {offsets = [0, 64], sizes = [8, 32], strides = [1, 1]} : vector<8x128xf32> to vector<8x32xf32>
    %832 = math.tanh %831 : vector<8x32xf32>
    %833 = vector.extract_strided_slice %818 {offsets = [0, 96], sizes = [8, 32], strides = [1, 1]} : vector<8x128xf32> to vector<8x32xf32>
    %834 = arith.negf %833 : vector<8x32xf32>
    %835 = math.exp %834 : vector<8x32xf32>
    %cst_257 = arith.constant 1.000000e+00 : f32
    %836 = vector.broadcast %cst_257 : f32 to vector<8x32xf32>
    %837 = arith.addf %836, %835 : vector<8x32xf32>
    %838 = arith.divf %836, %837 : vector<8x32xf32>
    %839 = arith.mulf %830, %812 : vector<8x32xf32>
    %840 = arith.mulf %824, %832 : vector<8x32xf32>
    %841 = arith.addf %839, %840 : vector<8x32xf32>
    %842 = math.tanh %841 : vector<8x32xf32>
    %843 = arith.mulf %838, %842 : vector<8x32xf32>
    %c24_258 = arith.constant 24 : index
    %c0_259 = arith.constant 0 : index
    %844 = vector.load %arg18[%c24_258, %c0_259] : memref<64x32xf32, #tpu.memory_space<vmem>>, vector<8x32xf32>
    tpu.vector_store %arg18[%c24_258, %c0_259], %843 {strides = array<i32>} : memref<64x32xf32, #tpu.memory_space<vmem>>, vector<8x32xf32>,
    %c32_260 = arith.constant 32 : index
    %c0_261 = arith.constant 0 : index
    %845 = vector.load %arg17[%c32_260, %c0_261] : memref<64x128xf32, #tpu.memory_space<vmem>>, vector<8x128xf32>
    %cst_262 = arith.constant dense<0.000000e+00> : vector<8x128xf32>
    %846 = tpu.matmul %843, %728, %cst_262 {dimension_numbers = #tpu.dot_dimension_numbers<[1], [0], [0], [1], [0, 0, 1, 1], [], []>} : vector<8x32xf32>, vector<32x128xf32>, vector<8x128xf32> -> vector<8x128xf32>
    %847 = arith.addf %845, %846 : vector<8x128xf32>
    %848 = vector.extract_strided_slice %847 {offsets = [0, 0], sizes = [8, 32], strides = [1, 1]} : vector<8x128xf32> to vector<8x32xf32>
    %849 = arith.negf %848 : vector<8x32xf32>
    %850 = math.exp %849 : vector<8x32xf32>
    %cst_263 = arith.constant 1.000000e+00 : f32
    %851 = vector.broadcast %cst_263 : f32 to vector<8x32xf32>
    %852 = arith.addf %851, %850 : vector<8x32xf32>
    %853 = arith.divf %851, %852 : vector<8x32xf32>
    %854 = vector.extract_strided_slice %847 {offsets = [0, 32], sizes = [8, 32], strides = [1, 1]} : vector<8x128xf32> to vector<8x32xf32>
    %855 = arith.negf %854 : vector<8x32xf32>
    %856 = math.exp %855 : vector<8x32xf32>
    %cst_264 = arith.constant 1.000000e+00 : f32
    %857 = vector.broadcast %cst_264 : f32 to vector<8x32xf32>
    %858 = arith.addf %857, %856 : vector<8x32xf32>
    %859 = arith.divf %857, %858 : vector<8x32xf32>
    %860 = vector.extract_strided_slice %847 {offsets = [0, 64], sizes = [8, 32], strides = [1, 1]} : vector<8x128xf32> to vector<8x32xf32>
    %861 = math.tanh %860 : vector<8x32xf32>
    %862 = vector.extract_strided_slice %847 {offsets = [0, 96], sizes = [8, 32], strides = [1, 1]} : vector<8x128xf32> to vector<8x32xf32>
    %863 = arith.negf %862 : vector<8x32xf32>
    %864 = math.exp %863 : vector<8x32xf32>
    %cst_265 = arith.constant 1.000000e+00 : f32
    %865 = vector.broadcast %cst_265 : f32 to vector<8x32xf32>
    %866 = arith.addf %865, %864 : vector<8x32xf32>
    %867 = arith.divf %865, %866 : vector<8x32xf32>
    %868 = arith.mulf %859, %841 : vector<8x32xf32>
    %869 = arith.mulf %853, %861 : vector<8x32xf32>
    %870 = arith.addf %868, %869 : vector<8x32xf32>
    %871 = math.tanh %870 : vector<8x32xf32>
    %872 = arith.mulf %867, %871 : vector<8x32xf32>
    %c32_266 = arith.constant 32 : index
    %c0_267 = arith.constant 0 : index
    %873 = vector.load %arg18[%c32_266, %c0_267] : memref<64x32xf32, #tpu.memory_space<vmem>>, vector<8x32xf32>
    tpu.vector_store %arg18[%c32_266, %c0_267], %872 {strides = array<i32>} : memref<64x32xf32, #tpu.memory_space<vmem>>, vector<8x32xf32>,
    %c40_268 = arith.constant 40 : index
    %c0_269 = arith.constant 0 : index
    %874 = vector.load %arg17[%c40_268, %c0_269] : memref<64x128xf32, #tpu.memory_space<vmem>>, vector<8x128xf32>
    %cst_270 = arith.constant dense<0.000000e+00> : vector<8x128xf32>
    %875 = tpu.matmul %872, %728, %cst_270 {dimension_numbers = #tpu.dot_dimension_numbers<[1], [0], [0], [1], [0, 0, 1, 1], [], []>} : vector<8x32xf32>, vector<32x128xf32>, vector<8x128xf32> -> vector<8x128xf32>
    %876 = arith.addf %874, %875 : vector<8x128xf32>
    %877 = vector.extract_strided_slice %876 {offsets = [0, 0], sizes = [8, 32], strides = [1, 1]} : vector<8x128xf32> to vector<8x32xf32>
    %878 = arith.negf %877 : vector<8x32xf32>
    %879 = math.exp %878 : vector<8x32xf32>
    %cst_271 = arith.constant 1.000000e+00 : f32
    %880 = vector.broadcast %cst_271 : f32 to vector<8x32xf32>
    %881 = arith.addf %880, %879 : vector<8x32xf32>
    %882 = arith.divf %880, %881 : vector<8x32xf32>
    %883 = vector.extract_strided_slice %876 {offsets = [0, 32], sizes = [8, 32], strides = [1, 1]} : vector<8x128xf32> to vector<8x32xf32>
    %884 = arith.negf %883 : vector<8x32xf32>
    %885 = math.exp %884 : vector<8x32xf32>
    %cst_272 = arith.constant 1.000000e+00 : f32
    %886 = vector.broadcast %cst_272 : f32 to vector<8x32xf32>
    %887 = arith.addf %886, %885 : vector<8x32xf32>
    %888 = arith.divf %886, %887 : vector<8x32xf32>
    %889 = vector.extract_strided_slice %876 {offsets = [0, 64], sizes = [8, 32], strides = [1, 1]} : vector<8x128xf32> to vector<8x32xf32>
    %890 = math.tanh %889 : vector<8x32xf32>
    %891 = vector.extract_strided_slice %876 {offsets = [0, 96], sizes = [8, 32], strides = [1, 1]} : vector<8x128xf32> to vector<8x32xf32>
    %892 = arith.negf %891 : vector<8x32xf32>
    %893 = math.exp %892 : vector<8x32xf32>
    %cst_273 = arith.constant 1.000000e+00 : f32
    %894 = vector.broadcast %cst_273 : f32 to vector<8x32xf32>
    %895 = arith.addf %894, %893 : vector<8x32xf32>
    %896 = arith.divf %894, %895 : vector<8x32xf32>
    %897 = arith.mulf %888, %870 : vector<8x32xf32>
    %898 = arith.mulf %882, %890 : vector<8x32xf32>
    %899 = arith.addf %897, %898 : vector<8x32xf32>
    %900 = math.tanh %899 : vector<8x32xf32>
    %901 = arith.mulf %896, %900 : vector<8x32xf32>
    %c40_274 = arith.constant 40 : index
    %c0_275 = arith.constant 0 : index
    %902 = vector.load %arg18[%c40_274, %c0_275] : memref<64x32xf32, #tpu.memory_space<vmem>>, vector<8x32xf32>
    tpu.vector_store %arg18[%c40_274, %c0_275], %901 {strides = array<i32>} : memref<64x32xf32, #tpu.memory_space<vmem>>, vector<8x32xf32>,
    %c48_276 = arith.constant 48 : index
    %c0_277 = arith.constant 0 : index
    %903 = vector.load %arg17[%c48_276, %c0_277] : memref<64x128xf32, #tpu.memory_space<vmem>>, vector<8x128xf32>
    %cst_278 = arith.constant dense<0.000000e+00> : vector<8x128xf32>
    %904 = tpu.matmul %901, %728, %cst_278 {dimension_numbers = #tpu.dot_dimension_numbers<[1], [0], [0], [1], [0, 0, 1, 1], [], []>} : vector<8x32xf32>, vector<32x128xf32>, vector<8x128xf32> -> vector<8x128xf32>
    %905 = arith.addf %903, %904 : vector<8x128xf32>
    %906 = vector.extract_strided_slice %905 {offsets = [0, 0], sizes = [8, 32], strides = [1, 1]} : vector<8x128xf32> to vector<8x32xf32>
    %907 = arith.negf %906 : vector<8x32xf32>
    %908 = math.exp %907 : vector<8x32xf32>
    %cst_279 = arith.constant 1.000000e+00 : f32
    %909 = vector.broadcast %cst_279 : f32 to vector<8x32xf32>
    %910 = arith.addf %909, %908 : vector<8x32xf32>
    %911 = arith.divf %909, %910 : vector<8x32xf32>
    %912 = vector.extract_strided_slice %905 {offsets = [0, 32], sizes = [8, 32], strides = [1, 1]} : vector<8x128xf32> to vector<8x32xf32>
    %913 = arith.negf %912 : vector<8x32xf32>
    %914 = math.exp %913 : vector<8x32xf32>
    %cst_280 = arith.constant 1.000000e+00 : f32
    %915 = vector.broadcast %cst_280 : f32 to vector<8x32xf32>
    %916 = arith.addf %915, %914 : vector<8x32xf32>
    %917 = arith.divf %915, %916 : vector<8x32xf32>
    %918 = vector.extract_strided_slice %905 {offsets = [0, 64], sizes = [8, 32], strides = [1, 1]} : vector<8x128xf32> to vector<8x32xf32>
    %919 = math.tanh %918 : vector<8x32xf32>
    %920 = vector.extract_strided_slice %905 {offsets = [0, 96], sizes = [8, 32], strides = [1, 1]} : vector<8x128xf32> to vector<8x32xf32>
    %921 = arith.negf %920 : vector<8x32xf32>
    %922 = math.exp %921 : vector<8x32xf32>
    %cst_281 = arith.constant 1.000000e+00 : f32
    %923 = vector.broadcast %cst_281 : f32 to vector<8x32xf32>
    %924 = arith.addf %923, %922 : vector<8x32xf32>
    %925 = arith.divf %923, %924 : vector<8x32xf32>
    %926 = arith.mulf %917, %899 : vector<8x32xf32>
    %927 = arith.mulf %911, %919 : vector<8x32xf32>
    %928 = arith.addf %926, %927 : vector<8x32xf32>
    %929 = math.tanh %928 : vector<8x32xf32>
    %930 = arith.mulf %925, %929 : vector<8x32xf32>
    %c48_282 = arith.constant 48 : index
    %c0_283 = arith.constant 0 : index
    %931 = vector.load %arg18[%c48_282, %c0_283] : memref<64x32xf32, #tpu.memory_space<vmem>>, vector<8x32xf32>
    tpu.vector_store %arg18[%c48_282, %c0_283], %930 {strides = array<i32>} : memref<64x32xf32, #tpu.memory_space<vmem>>, vector<8x32xf32>,
    %c56_284 = arith.constant 56 : index
    %c0_285 = arith.constant 0 : index
    %932 = vector.load %arg17[%c56_284, %c0_285] : memref<64x128xf32, #tpu.memory_space<vmem>>, vector<8x128xf32>
    %cst_286 = arith.constant dense<0.000000e+00> : vector<8x128xf32>
    %933 = tpu.matmul %930, %728, %cst_286 {dimension_numbers = #tpu.dot_dimension_numbers<[1], [0], [0], [1], [0, 0, 1, 1], [], []>} : vector<8x32xf32>, vector<32x128xf32>, vector<8x128xf32> -> vector<8x128xf32>
    %934 = arith.addf %932, %933 : vector<8x128xf32>
    %935 = vector.extract_strided_slice %934 {offsets = [0, 0], sizes = [8, 32], strides = [1, 1]} : vector<8x128xf32> to vector<8x32xf32>
    %936 = arith.negf %935 : vector<8x32xf32>
    %937 = math.exp %936 : vector<8x32xf32>
    %cst_287 = arith.constant 1.000000e+00 : f32
    %938 = vector.broadcast %cst_287 : f32 to vector<8x32xf32>
    %939 = arith.addf %938, %937 : vector<8x32xf32>
    %940 = arith.divf %938, %939 : vector<8x32xf32>
    %941 = vector.extract_strided_slice %934 {offsets = [0, 32], sizes = [8, 32], strides = [1, 1]} : vector<8x128xf32> to vector<8x32xf32>
    %942 = arith.negf %941 : vector<8x32xf32>
    %943 = math.exp %942 : vector<8x32xf32>
    %cst_288 = arith.constant 1.000000e+00 : f32
    %944 = vector.broadcast %cst_288 : f32 to vector<8x32xf32>
    %945 = arith.addf %944, %943 : vector<8x32xf32>
    %946 = arith.divf %944, %945 : vector<8x32xf32>
    %947 = vector.extract_strided_slice %934 {offsets = [0, 64], sizes = [8, 32], strides = [1, 1]} : vector<8x128xf32> to vector<8x32xf32>
    %948 = math.tanh %947 : vector<8x32xf32>
    %949 = vector.extract_strided_slice %934 {offsets = [0, 96], sizes = [8, 32], strides = [1, 1]} : vector<8x128xf32> to vector<8x32xf32>
    %950 = arith.negf %949 : vector<8x32xf32>
    %951 = math.exp %950 : vector<8x32xf32>
    %cst_289 = arith.constant 1.000000e+00 : f32
    %952 = vector.broadcast %cst_289 : f32 to vector<8x32xf32>
    %953 = arith.addf %952, %951 : vector<8x32xf32>
    %954 = arith.divf %952, %953 : vector<8x32xf32>
    %955 = arith.mulf %946, %928 : vector<8x32xf32>
    %956 = arith.mulf %940, %948 : vector<8x32xf32>
    %957 = arith.addf %955, %956 : vector<8x32xf32>
    %958 = math.tanh %957 : vector<8x32xf32>
    %959 = arith.mulf %954, %958 : vector<8x32xf32>
    %c56_290 = arith.constant 56 : index
    %c0_291 = arith.constant 0 : index
    %960 = vector.load %arg18[%c56_290, %c0_291] : memref<64x32xf32, #tpu.memory_space<vmem>>, vector<8x32xf32>
    tpu.vector_store %arg18[%c56_290, %c0_291], %959 {strides = array<i32>} : memref<64x32xf32, #tpu.memory_space<vmem>>, vector<8x32xf32>,
    %c0_292 = arith.constant 0 : index
    %c0_293 = arith.constant 0 : index
    %961 = vector.load %arg18[%c0_292, %c0_293] : memref<64x32xf32, #tpu.memory_space<vmem>>, vector<64x32xf32>
    %c0_294 = arith.constant 0 : index
    %c0_295 = arith.constant 0 : index
    %962 = vector.load %arg14[%c0_294, %c0_295] : memref<32x4xf32, #tpu.memory_space<vmem>>, vector<32x4xf32>
    %cst_296 = arith.constant dense<0.000000e+00> : vector<64x4xf32>
    %963 = tpu.matmul %961, %962, %cst_296 {dimension_numbers = #tpu.dot_dimension_numbers<[1], [0], [0], [1], [0, 0, 1, 1], [], []>} : vector<64x32xf32>, vector<32x4xf32>, vector<64x4xf32> -> vector<64x4xf32>
    %c0_297 = arith.constant 0 : index
    %c0_298 = arith.constant 0 : index
    %964 = vector.load %arg15[%c0_297, %c0_298] : memref<1x4xf32, #tpu.memory_space<vmem>>, vector<1x4xf32>
    %965 = vector.broadcast %964 : vector<1x4xf32> to vector<64x4xf32>
    %966 = arith.addf %963, %965 : vector<64x4xf32>
    %cst_299 = arith.constant 0.000000e+00 : f32
    %967 = vector.broadcast %cst_299 : f32 to vector<64x4xf32>
    %968 = arith.maximumf %966, %967 : vector<64x4xf32>
    %969 = math.absf %966 : vector<64x4xf32>
    %cst_300 = arith.constant 0.000000e+00 : f32
    %970 = vector.broadcast %cst_300 : f32 to vector<64x4xf32>
    %971 = arith.subf %970, %969 : vector<64x4xf32>
    %972 = math.exp %971 : vector<64x4xf32>
    %973 = math.log1p %972 : vector<64x4xf32>
    %974 = arith.addf %968, %973 : vector<64x4xf32>
    %975 = tpu.iota {dimensions = array<i32: 1>} : vector<64x4xi32>
    %c2_i32 = arith.constant 2 : i32
    %976 = vector.broadcast %c2_i32 : i32 to vector<64x4xi32>
    %977 = arith.cmpi slt, %975, %976 : vector<64x4xi32>
    %cst_301 = arith.constant 0.949999988 : f32
    %978 = vector.broadcast %cst_301 : f32 to vector<64x4xf32>
    %979 = arith.mulf %978, %974 : vector<64x4xf32>
    %cst_302 = arith.constant 5.000000e-02 : f32
    %980 = vector.broadcast %cst_302 : f32 to vector<64x4xf32>
    %981 = arith.addf %980, %979 : vector<64x4xf32>
    %982 = arith.select %977, %966, %981 : vector<64x4xi1>, vector<64x4xf32>
    %c0_303 = arith.constant 0 : index
    %c0_304 = arith.constant 0 : index
    %983 = vector.load %arg16[%c0_303, %c0_304] : memref<64x4xf32, #tpu.memory_space<vmem>>, vector<64x4xf32>
    tpu.vector_store %arg16[%c0_303, %c0_304], %982 {strides = array<i32>} : memref<64x4xf32, #tpu.memory_space<vmem>>, vector<64x4xf32>,
    return
  }
}

</mosaic_0001>

<llo_original>
// kernel: lstm_seq2seq_forward.1
$region0: #{lstm_seq2seq_forward.1}
  #allocation0 [shape = 'u32[]', space=smem, size = 0x4, offset = 0x4, fixed_abs, tag = 'smem constant byte address 0x4 - core index']
  #allocation1 [shape = 'u32[144,128]{1,0:T(1,128)}', space=vmem, size = 0x12000, scoped, tag = 'internal scratch']
  #allocation2 [shape = 'f32[64,128]{1,0:T(8,128)}', space=vmem, size = 0x8000, scoped, tag = 'scratch operand']
  #allocation3 [shape = 'f32[64,32]{1,0:T(8,128)}', space=vmem, size = 0x8000, scoped, tag = 'scratch operand']
  %s0 = inlined_call_operand.vmem [shape: f32[64,6], index: 0, kind: input, shape index: {}]
  %s1 = inlined_call_operand.vmem [shape: f32[64,4], index: 1, kind: input, shape index: {}]
  %s2 = inlined_call_operand.vmem [shape: f32[6,128], index: 2, kind: input, shape index: {}]
  %s3 = inlined_call_operand.vmem [shape: f32[32,128], index: 3, kind: input, shape index: {}]
  %s4 = inlined_call_operand.vmem [shape: f32[1,128], index: 4, kind: input, shape index: {}]
  %s5 = inlined_call_operand.vmem [shape: f32[32,128], index: 5, kind: input, shape index: {}]
  %s6 = inlined_call_operand.vmem [shape: f32[32,128], index: 6, kind: input, shape index: {}]
  %s7 = inlined_call_operand.vmem [shape: f32[1,128], index: 7, kind: input, shape index: {}]
  %s8 = inlined_call_operand.vmem [shape: f32[4,128], index: 8, kind: input, shape index: {}]
  %s9 = inlined_call_operand.vmem [shape: f32[32,128], index: 9, kind: input, shape index: {}]
  %s10 = inlined_call_operand.vmem [shape: f32[1,128], index: 10, kind: input, shape index: {}]
  %s11 = inlined_call_operand.vmem [shape: f32[32,128], index: 11, kind: input, shape index: {}]
  %s12 = inlined_call_operand.vmem [shape: f32[32,128], index: 12, kind: input, shape index: {}]
  %s13 = inlined_call_operand.vmem [shape: f32[1,128], index: 13, kind: input, shape index: {}]
  %s14 = inlined_call_operand.vmem [shape: f32[32,4], index: 14, kind: input, shape index: {}]
  %s15 = inlined_call_operand.vmem [shape: f32[1,4], index: 15, kind: input, shape index: {}]
  %s16 = inlined_call_operand.vmem [shape: f32[64,4], index: 16, kind: output, shape index: {}]
  %s17 = sld [smem:[#allocation0]]
  $region74: #{lstm_seq2seq_forward.1} parent=0
    _
  %s19 = ssub.s32 1, %s17
  %s20 = scalar_select 0, %s19, %s17
  // Predicated region
  $region2: #{lstm_seq2seq_forward.1} parent=0 // pred_check
    _
  $region3: #{lstm_seq2seq_forward.1} parent=0 // pred_check_branch
    %22 = sbr.rel (0) target = $region5
  $region4: #{lstm_seq2seq_forward.1} parent=0 // pred_region
    _
  $region5: #{lstm_seq2seq_forward.1} parent=0 // pred_fallthru
    _
  // Predicated region
  $region6: #{lstm_seq2seq_forward.1} parent=0 // pred_check
    _
  $region7: #{lstm_seq2seq_forward.1} parent=0 // pred_check_branch
    %24 = sbr.rel (0) target = $region9
  $region8: #{lstm_seq2seq_forward.1} parent=0 // pred_region
    _
  $region9: #{lstm_seq2seq_forward.1} parent=0 // pred_fallthru
    _
  // Predicated region
  $region10: #{lstm_seq2seq_forward.1} parent=0 // pred_check
    _
  $region11: #{lstm_seq2seq_forward.1} parent=0 // pred_check_branch
    %26 = sbr.rel (0) target = $region13
  $region12: #{lstm_seq2seq_forward.1} parent=0 // pred_region
    _
  $region13: #{lstm_seq2seq_forward.1} parent=0 // pred_fallthru
    _
  // Predicated region
  $region14: #{lstm_seq2seq_forward.1} parent=0 // pred_check
    _
  $region15: #{lstm_seq2seq_forward.1} parent=0 // pred_check_branch
    %28 = sbr.rel (0) target = $region17
  $region16: #{lstm_seq2seq_forward.1} parent=0 // pred_region
    _
  $region17: #{lstm_seq2seq_forward.1} parent=0 // pred_fallthru
    _
  // Predicated region
  $region18: #{lstm_seq2seq_forward.1} parent=0 // pred_check
    _
  $region19: #{lstm_seq2seq_forward.1} parent=0 // pred_check_branch
    %30 = sbr.rel (0) target = $region21
  $region20: #{lstm_seq2seq_forward.1} parent=0 // pred_region
    _
  $region21: #{lstm_seq2seq_forward.1} parent=0 // pred_fallthru
    _
  // Predicated region
  $region22: #{lstm_seq2seq_forward.1} parent=0 // pred_check
    _
  $region23: #{lstm_seq2seq_forward.1} parent=0 // pred_check_branch
    %32 = sbr.rel (0) target = $region25
  $region24: #{lstm_seq2seq_forward.1} parent=0 // pred_region
    _
  $region25: #{lstm_seq2seq_forward.1} parent=0 // pred_fallthru
    _
  // Predicated region
  $region26: #{lstm_seq2seq_forward.1} parent=0 // pred_check
    _
  $region27: #{lstm_seq2seq_forward.1} parent=0 // pred_check_branch
    %34 = sbr.rel (0) target = $region29
  $region28: #{lstm_seq2seq_forward.1} parent=0 // pred_region
    _
  $region29: #{lstm_seq2seq_forward.1} parent=0 // pred_fallthru
    _
  // Predicated region
  $region30: #{lstm_seq2seq_forward.1} parent=0 // pred_check
    _
  $region31: #{lstm_seq2seq_forward.1} parent=0 // pred_check_branch
    %36 = sbr.rel (0) target = $region33
  $region32: #{lstm_seq2seq_forward.1} parent=0 // pred_region
    _
  $region33: #{lstm_seq2seq_forward.1} parent=0 // pred_fallthru
    _
  // Predicated region
  $region34: #{lstm_seq2seq_forward.1} parent=0 // pred_check
    _
  $region35: #{lstm_seq2seq_forward.1} parent=0 // pred_check_branch
    %38 = sbr.rel (0) target = $region37
  $region36: #{lstm_seq2seq_forward.1} parent=0 // pred_region
    _
  $region37: #{lstm_seq2seq_forward.1} parent=0 // pred_fallthru
    _
  // Predicated region
  $region38: #{lstm_seq2seq_forward.1} parent=0 // pred_check
    _
  $region39: #{lstm_seq2seq_forward.1} parent=0 // pred_check_branch
    %40 = sbr.rel (0) target = $region41
  $region40: #{lstm_seq2seq_forward.1} parent=0 // pred_region
    _
  $region41: #{lstm_seq2seq_forward.1} parent=0 // pred_fallthru
    _
  // Predicated region
  $region42: #{lstm_seq2seq_forward.1} parent=0 // pred_check
    _
  $region43: #{lstm_seq2seq_forward.1} parent=0 // pred_check_branch
    %42 = sbr.rel (0) target = $region45
  $region44: #{lstm_seq2seq_forward.1} parent=0 // pred_region
    _
  $region45: #{lstm_seq2seq_forward.1} parent=0 // pred_fallthru
    _
  // Predicated region
  $region46: #{lstm_seq2seq_forward.1} parent=0 // pred_check
    _
  $region47: #{lstm_seq2seq_forward.1} parent=0 // pred_check_branch
    %44 = sbr.rel (0) target = $region49
  $region48: #{lstm_seq2seq_forward.1} parent=0 // pred_region
    _
  $region49: #{lstm_seq2seq_forward.1} parent=0 // pred_fallthru
    _
  // Predicated region
  $region50: #{lstm_seq2seq_forward.1} parent=0 // pred_check
    _
  $region51: #{lstm_seq2seq_forward.1} parent=0 // pred_check_branch
    %46 = sbr.rel (0) target = $region53
  $region52: #{lstm_seq2seq_forward.1} parent=0 // pred_region
    _
  $region53: #{lstm_seq2seq_forward.1} parent=0 // pred_fallthru
    _
  // Predicated region
  $region54: #{lstm_seq2seq_forward.1} parent=0 // pred_check
    _
  $region55: #{lstm_seq2seq_forward.1} parent=0 // pred_check_branch
    %48 = sbr.rel (0) target = $region57
  $region56: #{lstm_seq2seq_forward.1} parent=0 // pred_region
    _
  $region57: #{lstm_seq2seq_forward.1} parent=0 // pred_fallthru
    _
  // Predicated region
  $region58: #{lstm_seq2seq_forward.1} parent=0 // pred_check
    _
  $region59: #{lstm_seq2seq_forward.1} parent=0 // pred_check_branch
    %50 = sbr.rel (0) target = $region61
  $region60: #{lstm_seq2seq_forward.1} parent=0 // pred_region
    _
  $region61: #{lstm_seq2seq_forward.1} parent=0 // pred_fallthru
    _
  // Predicated region
  $region62: #{lstm_seq2seq_forward.1} parent=0 // pred_check
    _
  $region63: #{lstm_seq2seq_forward.1} parent=0 // pred_check_branch
    %52 = sbr.rel (0) target = $region65
  $region64: #{lstm_seq2seq_forward.1} parent=0 // pred_region
    _
  $region65: #{lstm_seq2seq_forward.1} parent=0 // pred_fallthru
    _
  %v53 = vld [vmem:[%s0] sm:$0xff]
  %v54 = vld [vmem:[%s0 + $0x8] sm:$0xff]
  %v55 = vld [vmem:[%s0 + $0x10] sm:$0xff]
  %v56 = vld [vmem:[%s0 + $0x18] sm:$0xff]
  %v57 = vld [vmem:[%s0 + $0x20] sm:$0xff]
  %v58 = vld [vmem:[%s0 + $0x28] sm:$0xff]
  %v59 = vld [vmem:[%s0 + $0x30] sm:$0xff]
  %v60 = vld [vmem:[%s0 + $0x38] sm:$0xff]
  %v61 = vld [vmem:[%s2] sm:$0x3f]
  %v62 = vld [vmem:[%s4] sm:$0x1]
  %v64 = vlaneseq
  %v65 = vshrl.u32 %v64, 7
  %v66 = vsub.s32 0, %v65
  %v67 = vrot.slane %v62, %v66
  %vm69 = vcmask 48128
  %v71 = vsel %vm69, %v53, 0
  %v74 = vsel %vm69, %v54, 0
  %v77 = vsel %vm69, %v55, 0
  %v80 = vsel %vm69, %v56, 0
  %v83 = vsel %vm69, %v57, 0
  %v86 = vsel %vm69, %v58, 0
  %v89 = vsel %vm69, %v59, 0
  %v92 = vsel %vm69, %v60, 0
  %vm94 = vcmask 1045504
  %v96 = vsel %vm94, %v61, 0
  %98 = vmatprep.subr.mxu0 0.0
  %99 = vmatpush1.msra.mxu0 %v96
  %100 = vmatprep.subr.mxu0 0.0
  %101 = vmatpush1.msra.mxu0 0.0
  %102 = vmatprep.subr.mxu0 0.0
  %103 = vmatpush1.msra.mxu0 0.0
  %104 = vmatprep.subr.mxu0 0.0
  %105 = vmatpush1.msra.mxu0 0.0
  %106 = vmatprep.subr.mxu0 0.0
  %107 = vmatpush1.msra.mxu0 0.0
  %108 = vmatprep.subr.mxu0 0.0
  %109 = vmatpush1.msra.mxu0 0.0
  %110 = vmatprep.subr.mxu0 0.0
  %111 = vmatpush1.msra.mxu0 0.0
  %112 = vmatprep.subr.mxu0 0.0
  %113 = vmatpush1.msra.mxu0 0.0
  %114 = vmatprep.subr.mxu0 0.0
  %115 = vmatpush1.msra.mxu0 0.0
  %116 = vmatprep.subr.mxu0 0.0
  %117 = vmatpush1.msra.mxu0 0.0
  %118 = vmatprep.subr.mxu0 0.0
  %119 = vmatpush1.msra.mxu0 0.0
  %120 = vmatprep.subr.mxu0 0.0
  %121 = vmatpush1.msra.mxu0 0.0
  %122 = vmatprep.subr.mxu0 0.0
  %123 = vmatpush1.msra.mxu0 0.0
  %124 = vmatprep.subr.mxu0 0.0
  %125 = vmatpush1.msra.mxu0 0.0
  %126 = vmatprep.subr.mxu0 0.0
  %127 = vmatpush1.msra.mxu0 0.0
  %128 = vmatprep.subr.mxu0 0.0
  %129 = vmatpush1.msra.mxu0 0.0
  %130 = vmatprep.subr.mxu0 0.0
  %131 = vmatpush1.msra.mxu0 0.0
  %132 = vmatprep.subr.mxu0 0.0
  %133 = vmatpush1.msra.mxu0 0.0
  %134 = vmatprep.subr.mxu0 0.0
  %135 = vmatpush1.msra.mxu0 0.0
  %136 = vmatprep.subr.mxu0 0.0
  %137 = vmatpush1.msra.mxu0 0.0
  %138 = vmatprep.subr.mxu0 0.0
  %139 = vmatpush1.msra.mxu0 0.0
  %140 = vmatprep.subr.mxu0 0.0
  %141 = vmatpush1.msra.mxu0 0.0
  %142 = vmatprep.subr.mxu0 0.0
  %143 = vmatpush1.msra.mxu0 0.0
  %144 = vmatprep.subr.mxu0 0.0
  %145 = vmatpush1.msra.mxu0 0.0
  %146 = vmatprep.subr.mxu0 0.0
  %147 = vmatpush1.msra.mxu0 0.0
  %148 = vmatprep.subr.mxu0 0.0
  %149 = vmatpush1.msra.mxu0 0.0
  %150 = vmatprep.subr.mxu0 0.0
  %151 = vmatpush1.msra.mxu0 0.0
  %152 = vmatprep.subr.mxu0 0.0
  %153 = vmatpush1.msra.mxu0 0.0
  %154 = vmatprep.subr.mxu0 0.0
  %155 = vmatpush1.msra.mxu0 0.0
  %156 = vmatprep.subr.mxu0 0.0
  %157 = vmatpush1.msra.mxu0 0.0
  %158 = vmatprep.subr.mxu0 0.0
  %159 = vmatpush1.msra.mxu0 0.0
  %160 = vmatprep.subr.mxu0 0.0
  %161 = vmatpush1.msra.mxu0 0.0
  %162 = vmatprep.mubr.f32.mxu0 0.0
  %163 = vmatmul.mubr.f32.gmra.mrb[0].mxu0 %v71
  %v164 = vpop.f32.mrb[0].mxu0
  %v165 = vadd.f32 %v67, %v164
  %v166 = vpop.f32.mrb[0].mxu0
  %167 = vmatprep.mubr.f32.mxu0 0.0
  %168 = vmatmul.mubr.f32.gmra.mrb[0].mxu0 %v74
  %v169 = vpop.f32.mrb[0].mxu0
  %v170 = vadd.f32 %v67, %v169
  %v171 = vpop.f32.mrb[0].mxu0
  %172 = vmatprep.mubr.f32.mxu0 0.0
  %173 = vmatmul.mubr.f32.gmra.mrb[0].mxu0 %v77
  %v174 = vpop.f32.mrb[0].mxu0
  %v175 = vadd.f32 %v67, %v174
  %v176 = vpop.f32.mrb[0].mxu0
  %177 = vmatprep.mubr.f32.mxu0 0.0
  %178 = vmatmul.mubr.f32.gmra.mrb[0].mxu0 %v80
  %v179 = vpop.f32.mrb[0].mxu0
  %v180 = vadd.f32 %v67, %v179
  %v181 = vpop.f32.mrb[0].mxu0
  %182 = vmatprep.mubr.f32.mxu0 0.0
  %183 = vmatmul.mubr.f32.gmra.mrb[0].mxu0 %v83
  %v184 = vpop.f32.mrb[0].mxu0
  %v185 = vadd.f32 %v67, %v184
  %v186 = vpop.f32.mrb[0].mxu0
  %187 = vmatprep.mubr.f32.mxu0 0.0
  %188 = vmatmul.mubr.f32.gmra.mrb[0].mxu0 %v86
  %v189 = vpop.f32.mrb[0].mxu0
  %v190 = vadd.f32 %v67, %v189
  %v191 = vpop.f32.mrb[0].mxu0
  %192 = vmatprep.mubr.f32.mxu0 0.0
  %193 = vmatmul.mubr.f32.gmra.mrb[0].mxu0 %v89
  %v194 = vpop.f32.mrb[0].mxu0
  %v195 = vadd.f32 %v67, %v194
  %v196 = vpop.f32.mrb[0].mxu0
  %197 = vmatprep.mubr.f32.mxu0 0.0
  %198 = vmatmul.mubr.f32.gmra.mrb[0].mxu0 %v92
  %v199 = vpop.f32.mrb[0].mxu0
  %v200 = vadd.f32 %v67, %v199
  %v201 = vpop.f32.mrb[0].mxu0
  %202 = vdwg.mxu0
  %203 = vst [vmem:[#allocation2] sm:$0xff] %v165
  %204 = vst [vmem:[#allocation2 + $0x8] sm:$0xff] %v170
  %205 = vst [vmem:[#allocation2 + $0x10] sm:$0xff] %v175
  %206 = vst [vmem:[#allocation2 + $0x18] sm:$0xff] %v180
  %207 = vst [vmem:[#allocation2 + $0x20] sm:$0xff] %v185
  %208 = vst [vmem:[#allocation2 + $0x28] sm:$0xff] %v190
  %209 = vst [vmem:[#allocation2 + $0x30] sm:$0xff] %v195
  %210 = vst [vmem:[#allocation2 + $0x38] sm:$0xff] %v200
  %v211 = vld [vmem:[%s3] sm:$0xff]
  %v212 = vld [vmem:[%s3 + $0x8] sm:$0xff]
  %v213 = vld [vmem:[%s3 + $0x10] sm:$0xff]
  %v214 = vld [vmem:[%s3 + $0x18] sm:$0xff]
  %v215 = vld [vmem:[#allocation2] sm:$0xff]
  %vm216 = vcmask 261120
  %v218 = vsel %vm216, 0.0, 0
  %220 = vmatprep.subr.mxu0 0.0
  %221 = vmatpush1.msra.mxu0 %v211
  %222 = vmatprep.subr.mxu0 0.0
  %223 = vmatpush1.msra.mxu0 %v212
  %224 = vmatprep.subr.mxu0 0.0
  %225 = vmatpush1.msra.mxu0 %v213
  %226 = vmatprep.subr.mxu0 0.0
  %227 = vmatpush1.msra.mxu0 %v214
  %228 = vmatprep.subr.mxu0 0.0
  %229 = vmatpush1.msra.mxu0 0.0
  %230 = vmatprep.subr.mxu0 0.0
  %231 = vmatpush1.msra.mxu0 0.0
  %232 = vmatprep.subr.mxu0 0.0
  %233 = vmatpush1.msra.mxu0 0.0
  %234 = vmatprep.subr.mxu0 0.0
  %235 = vmatpush1.msra.mxu0 0.0
  %236 = vmatprep.subr.mxu0 0.0
  %237 = vmatpush1.msra.mxu0 0.0
  %238 = vmatprep.subr.mxu0 0.0
  %239 = vmatpush1.msra.mxu0 0.0
  %240 = vmatprep.subr.mxu0 0.0
  %241 = vmatpush1.msra.mxu0 0.0
  %242 = vmatprep.subr.mxu0 0.0
  %243 = vmatpush1.msra.mxu0 0.0
  %244 = vmatprep.subr.mxu0 0.0
  %245 = vmatpush1.msra.mxu0 0.0
  %246 = vmatprep.subr.mxu0 0.0
  %247 = vmatpush1.msra.mxu0 0.0
  %248 = vmatprep.subr.mxu0 0.0
  %249 = vmatpush1.msra.mxu0 0.0
  %250 = vmatprep.subr.mxu0 0.0
  %251 = vmatpush1.msra.mxu0 0.0
  %252 = vmatprep.subr.mxu0 0.0
  %253 = vmatpush1.msra.mxu0 0.0
  %254 = vmatprep.subr.mxu0 0.0
  %255 = vmatpush1.msra.mxu0 0.0
  %256 = vmatprep.subr.mxu0 0.0
  %257 = vmatpush1.msra.mxu0 0.0
  %258 = vmatprep.subr.mxu0 0.0
  %259 = vmatpush1.msra.mxu0 0.0
  %260 = vmatprep.subr.mxu0 0.0
  %261 = vmatpush1.msra.mxu0 0.0
  %262 = vmatprep.subr.mxu0 0.0
  %263 = vmatpush1.msra.mxu0 0.0
  %264 = vmatprep.subr.mxu0 0.0
  %265 = vmatpush1.msra.mxu0 0.0
  %266 = vmatprep.subr.mxu0 0.0
  %267 = vmatpush1.msra.mxu0 0.0
  %268 = vmatprep.subr.mxu0 0.0
  %269 = vmatpush1.msra.mxu0 0.0
  %270 = vmatprep.subr.mxu0 0.0
  %271 = vmatpush1.msra.mxu0 0.0
  %272 = vmatprep.subr.mxu0 0.0
  %273 = vmatpush1.msra.mxu0 0.0
  %274 = vmatprep.subr.mxu0 0.0
  %275 = vmatpush1.msra.mxu0 0.0
  %276 = vmatprep.subr.mxu0 0.0
  %277 = vmatpush1.msra.mxu0 0.0
  %278 = vmatprep.subr.mxu0 0.0
  %279 = vmatpush1.msra.mxu0 0.0
  %280 = vmatprep.subr.mxu0 0.0
  %281 = vmatpush1.msra.mxu0 0.0
  %282 = vmatprep.subr.mxu0 0.0
  %283 = vmatpush1.msra.mxu0 0.0
  %284 = vmatprep.mubr.f32.mxu0 0.0
  %285 = vmatmul.mubr.f32.gmra.mrb[0].mxu0 %v218
  %v286 = vpop.f32.mrb[0].mxu0
  %v287 = vadd.f32 0.0, %v286
  %v288 = vpop.f32.mrb[0].mxu0
  %289 = vdwg.mxu0
  %v290 = vadd.f32 %v215, %v287
  %v291 = vxor.u32 %v290, 2147483648
  %v292 = vmul.f32 %v291, 1.442695
  %v293 = vpow.pop %v292
  %v294 = vadd.f32 %v293, 1.0
  %v295 = vrcp.pop %v294
  %v296 = vmul.f32 1.0, %v295
  %v297 = vtanh.pop %v290
  %v298 = vmul.f32 %v296, 0.0
  %300 = vrot.lane.b32.xlu0 %v297, 64
  %v301 = vpop.permute.xlu0 %300
  %v303 = vmul.f32 %v296, %v301
  %305 = vrot.lane.b32.xlu0 %v303, 32
  %v306 = vpop.permute.xlu0 %305
  %v308 = vadd.f32 %v298, %v306
  %v309 = vtanh.pop %v308
  %311 = vrot.lane.b32.xlu0 %v309, 64
  %v312 = vpop.permute.xlu0 %311
  %v314 = vmul.f32 %v296, %v312
  %316 = vrot.lane.b32.xlu0 %v314, 32
  %v317 = vpop.permute.xlu0 %316
  %319 = vst.msk [vmem:[#allocation3] sm:$0xff] %vm216, %v317
  %v320 = vld [vmem:[#allocation2 + $0x8] sm:$0xff]
  %v321 = vsel %vm216, %v317, 0
  %323 = vmatprep.subr.mxu0 0.0
  %324 = vmatpush1.msra.mxu0 %v211
  %325 = vmatprep.subr.mxu0 0.0
  %326 = vmatpush1.msra.mxu0 %v212
  %327 = vmatprep.subr.mxu0 0.0
  %328 = vmatpush1.msra.mxu0 %v213
  %329 = vmatprep.subr.mxu0 0.0
  %330 = vmatpush1.msra.mxu0 %v214
  %331 = vmatprep.subr.mxu0 0.0
  %332 = vmatpush1.msra.mxu0 0.0
  %333 = vmatprep.subr.mxu0 0.0
  %334 = vmatpush1.msra.mxu0 0.0
  %335 = vmatprep.subr.mxu0 0.0
  %336 = vmatpush1.msra.mxu0 0.0
  %337 = vmatprep.subr.mxu0 0.0
  %338 = vmatpush1.msra.mxu0 0.0
  %339 = vmatprep.subr.mxu0 0.0
  %340 = vmatpush1.msra.mxu0 0.0
  %341 = vmatprep.subr.mxu0 0.0
  %342 = vmatpush1.msra.mxu0 0.0
  %343 = vmatprep.subr.mxu0 0.0
  %344 = vmatpush1.msra.mxu0 0.0
  %345 = vmatprep.subr.mxu0 0.0
  %346 = vmatpush1.msra.mxu0 0.0
  %347 = vmatprep.subr.mxu0 0.0
  %348 = vmatpush1.msra.mxu0 0.0
  %349 = vmatprep.subr.mxu0 0.0
  %350 = vmatpush1.msra.mxu0 0.0
  %351 = vmatprep.subr.mxu0 0.0
  %352 = vmatpush1.msra.mxu0 0.0
  %353 = vmatprep.subr.mxu0 0.0
  %354 = vmatpush1.msra.mxu0 0.0
  %355 = vmatprep.subr.mxu0 0.0
  %356 = vmatpush1.msra.mxu0 0.0
  %357 = vmatprep.subr.mxu0 0.0
  %358 = vmatpush1.msra.mxu0 0.0
  %359 = vmatprep.subr.mxu0 0.0
  %360 = vmatpush1.msra.mxu0 0.0
  %361 = vmatprep.subr.mxu0 0.0
  %362 = vmatpush1.msra.mxu0 0.0
  %363 = vmatprep.subr.mxu0 0.0
  %364 = vmatpush1.msra.mxu0 0.0
  %365 = vmatprep.subr.mxu0 0.0
  %366 = vmatpush1.msra.mxu0 0.0
  %367 = vmatprep.subr.mxu0 0.0
  %368 = vmatpush1.msra.mxu0 0.0
  %369 = vmatprep.subr.mxu0 0.0
  %370 = vmatpush1.msra.mxu0 0.0
  %371 = vmatprep.subr.mxu0 0.0
  %372 = vmatpush1.msra.mxu0 0.0
  %373 = vmatprep.subr.mxu0 0.0
  %374 = vmatpush1.msra.mxu0 0.0
  %375 = vmatprep.subr.mxu0 0.0
  %376 = vmatpush1.msra.mxu0 0.0
  %377 = vmatprep.subr.mxu0 0.0
  %378 = vmatpush1.msra.mxu0 0.0
  %379 = vmatprep.subr.mxu0 0.0
  %380 = vmatpush1.msra.mxu0 0.0
  %381 = vmatprep.subr.mxu0 0.0
  %382 = vmatpush1.msra.mxu0 0.0
  %383 = vmatprep.subr.mxu0 0.0
  %384 = vmatpush1.msra.mxu0 0.0
  %385 = vmatprep.subr.mxu0 0.0
  %386 = vmatpush1.msra.mxu0 0.0
  %387 = vmatprep.mubr.f32.mxu0 0.0
  %388 = vmatmul.mubr.f32.gmra.mrb[0].mxu0 %v321
  %v389 = vpop.f32.mrb[0].mxu0
  %v390 = vadd.f32 0.0, %v389
  %v391 = vpop.f32.mrb[0].mxu0
  %392 = vdwg.mxu0
  %v393 = vadd.f32 %v320, %v390
  %v394 = vxor.u32 %v393, 2147483648
  %v395 = vmul.f32 %v394, 1.442695
  %v396 = vpow.pop %v395
  %v397 = vadd.f32 %v396, 1.0
  %v398 = vrcp.pop %v397
  %v399 = vmul.f32 1.0, %v398
  %v400 = vtanh.pop %v393
  %v401 = vmul.f32 %v399, %v308
  %403 = vrot.lane.b32.xlu0 %v400, 64
  %v404 = vpop.permute.xlu0 %403
  %v406 = vmul.f32 %v399, %v404
  %408 = vrot.lane.b32.xlu0 %v406, 32
  %v409 = vpop.permute.xlu0 %408
  %v411 = vadd.f32 %v401, %v409
  %v412 = vtanh.pop %v411
  %414 = vrot.lane.b32.xlu0 %v412, 64
  %v415 = vpop.permute.xlu0 %414
  %v417 = vmul.f32 %v399, %v415
  %419 = vrot.lane.b32.xlu0 %v417, 32
  %v420 = vpop.permute.xlu0 %419
  %422 = vst.msk [vmem:[#allocation3 + $0x8] sm:$0xff] %vm216, %v420
  %v423 = vld [vmem:[#allocation2 + $0x10] sm:$0xff]
  %v424 = vsel %vm216, %v420, 0
  %426 = vmatprep.subr.mxu0 0.0
  %427 = vmatpush1.msra.mxu0 %v211
  %428 = vmatprep.subr.mxu0 0.0
  %429 = vmatpush1.msra.mxu0 %v212
  %430 = vmatprep.subr.mxu0 0.0
  %431 = vmatpush1.msra.mxu0 %v213
  %432 = vmatprep.subr.mxu0 0.0
  %433 = vmatpush1.msra.mxu0 %v214
  %434 = vmatprep.subr.mxu0 0.0
  %435 = vmatpush1.msra.mxu0 0.0
  %436 = vmatprep.subr.mxu0 0.0
  %437 = vmatpush1.msra.mxu0 0.0
  %438 = vmatprep.subr.mxu0 0.0
  %439 = vmatpush1.msra.mxu0 0.0
  %440 = vmatprep.subr.mxu0 0.0
  %441 = vmatpush1.msra.mxu0 0.0
  %442 = vmatprep.subr.mxu0 0.0
  %443 = vmatpush1.msra.mxu0 0.0
  %444 = vmatprep.subr.mxu0 0.0
  %445 = vmatpush1.msra.mxu0 0.0
  %446 = vmatprep.subr.mxu0 0.0
  %447 = vmatpush1.msra.mxu0 0.0
  %448 = vmatprep.subr.mxu0 0.0
  %449 = vmatpush1.msra.mxu0 0.0
  %450 = vmatprep.subr.mxu0 0.0
  %451 = vmatpush1.msra.mxu0 0.0
  %452 = vmatprep.subr.mxu0 0.0
  %453 = vmatpush1.msra.mxu0 0.0
  %454 = vmatprep.subr.mxu0 0.0
  %455 = vmatpush1.msra.mxu0 0.0
  %456 = vmatprep.subr.mxu0 0.0
  %457 = vmatpush1.msra.mxu0 0.0
  %458 = vmatprep.subr.mxu0 0.0
  %459 = vmatpush1.msra.mxu0 0.0
  %460 = vmatprep.subr.mxu0 0.0
  %461 = vmatpush1.msra.mxu0 0.0
  %462 = vmatprep.subr.mxu0 0.0
  %463 = vmatpush1.msra.mxu0 0.0
  %464 = vmatprep.subr.mxu0 0.0
  %465 = vmatpush1.msra.mxu0 0.0
  %466 = vmatprep.subr.mxu0 0.0
  %467 = vmatpush1.msra.mxu0 0.0
  %468 = vmatprep.subr.mxu0 0.0
  %469 = vmatpush1.msra.mxu0 0.0
  %470 = vmatprep.subr.mxu0 0.0
  %471 = vmatpush1.msra.mxu0 0.0
  %472 = vmatprep.subr.mxu0 0.0
  %473 = vmatpush1.msra.mxu0 0.0
  %474 = vmatprep.subr.mxu0 0.0
  %475 = vmatpush1.msra.mxu0 0.0
  %476 = vmatprep.subr.mxu0 0.0
  %477 = vmatpush1.msra.mxu0 0.0
  %478 = vmatprep.subr.mxu0 0.0
  %479 = vmatpush1.msra.mxu0 0.0
  %480 = vmatprep.subr.mxu0 0.0
  %481 = vmatpush1.msra.mxu0 0.0
  %482 = vmatprep.subr.mxu0 0.0
  %483 = vmatpush1.msra.mxu0 0.0
  %484 = vmatprep.subr.mxu0 0.0
  %485 = vmatpush1.msra.mxu0 0.0
  %486 = vmatprep.subr.mxu0 0.0
  %487 = vmatpush1.msra.mxu0 0.0
  %488 = vmatprep.subr.mxu0 0.0
  %489 = vmatpush1.msra.mxu0 0.0
  %490 = vmatprep.mubr.f32.mxu0 0.0
  %491 = vmatmul.mubr.f32.gmra.mrb[0].mxu0 %v424
  %v492 = vpop.f32.mrb[0].mxu0
  %v493 = vadd.f32 0.0, %v492
  %v494 = vpop.f32.mrb[0].mxu0
  %495 = vdwg.mxu0
  %v496 = vadd.f32 %v423, %v493
  %v497 = vxor.u32 %v496, 2147483648
  %v498 = vmul.f32 %v497, 1.442695
  %v499 = vpow.pop %v498
  %v500 = vadd.f32 %v499, 1.0
  %v501 = vrcp.pop %v500
  %v502 = vmul.f32 1.0, %v501
  %v503 = vtanh.pop %v496
  %v504 = vmul.f32 %v502, %v411
  %506 = vrot.lane.b32.xlu0 %v503, 64
  %v507 = vpop.permute.xlu0 %506
  %v509 = vmul.f32 %v502, %v507
  %511 = vrot.lane.b32.xlu0 %v509, 32
  %v512 = vpop.permute.xlu0 %511
  %v514 = vadd.f32 %v504, %v512
  %v515 = vtanh.pop %v514
  %517 = vrot.lane.b32.xlu0 %v515, 64
  %v518 = vpop.permute.xlu0 %517
  %v520 = vmul.f32 %v502, %v518
  %522 = vrot.lane.b32.xlu0 %v520, 32
  %v523 = vpop.permute.xlu0 %522
  %525 = vst.msk [vmem:[#allocation3 + $0x10] sm:$0xff] %vm216, %v523
  %v526 = vld [vmem:[#allocation2 + $0x18] sm:$0xff]
  %v527 = vsel %vm216, %v523, 0
  %529 = vmatprep.subr.mxu0 0.0
  %530 = vmatpush1.msra.mxu0 %v211
  %531 = vmatprep.subr.mxu0 0.0
  %532 = vmatpush1.msra.mxu0 %v212
  %533 = vmatprep.subr.mxu0 0.0
  %534 = vmatpush1.msra.mxu0 %v213
  %535 = vmatprep.subr.mxu0 0.0
  %536 = vmatpush1.msra.mxu0 %v214
  %537 = vmatprep.subr.mxu0 0.0
  %538 = vmatpush1.msra.mxu0 0.0
  %539 = vmatprep.subr.mxu0 0.0
  %540 = vmatpush1.msra.mxu0 0.0
  %541 = vmatprep.subr.mxu0 0.0
  %542 = vmatpush1.msra.mxu0 0.0
  %543 = vmatprep.subr.mxu0 0.0
  %544 = vmatpush1.msra.mxu0 0.0
  %545 = vmatprep.subr.mxu0 0.0
  %546 = vmatpush1.msra.mxu0 0.0
  %547 = vmatprep.subr.mxu0 0.0
  %548 = vmatpush1.msra.mxu0 0.0
  %549 = vmatprep.subr.mxu0 0.0
  %550 = vmatpush1.msra.mxu0 0.0
  %551 = vmatprep.subr.mxu0 0.0
  %552 = vmatpush1.msra.mxu0 0.0
  %553 = vmatprep.subr.mxu0 0.0
  %554 = vmatpush1.msra.mxu0 0.0
  %555 = vmatprep.subr.mxu0 0.0
  %556 = vmatpush1.msra.mxu0 0.0
  %557 = vmatprep.subr.mxu0 0.0
  %558 = vmatpush1.msra.mxu0 0.0
  %559 = vmatprep.subr.mxu0 0.0
  %560 = vmatpush1.msra.mxu0 0.0
  %561 = vmatprep.subr.mxu0 0.0
  %562 = vmatpush1.msra.mxu0 0.0
  %563 = vmatprep.subr.mxu0 0.0
  %564 = vmatpush1.msra.mxu0 0.0
  %565 = vmatprep.subr.mxu0 0.0
  %566 = vmatpush1.msra.mxu0 0.0
  %567 = vmatprep.subr.mxu0 0.0
  %568 = vmatpush1.msra.mxu0 0.0
  %569 = vmatprep.subr.mxu0 0.0
  %570 = vmatpush1.msra.mxu0 0.0
  %571 = vmatprep.subr.mxu0 0.0
  %572 = vmatpush1.msra.mxu0 0.0
  %573 = vmatprep.subr.mxu0 0.0
  %574 = vmatpush1.msra.mxu0 0.0
  %575 = vmatprep.subr.mxu0 0.0
  %576 = vmatpush1.msra.mxu0 0.0
  %577 = vmatprep.subr.mxu0 0.0
  %578 = vmatpush1.msra.mxu0 0.0
  %579 = vmatprep.subr.mxu0 0.0
  %580 = vmatpush1.msra.mxu0 0.0
  %581 = vmatprep.subr.mxu0 0.0
  %582 = vmatpush1.msra.mxu0 0.0
  %583 = vmatprep.subr.mxu0 0.0
  %584 = vmatpush1.msra.mxu0 0.0
  %585 = vmatprep.subr.mxu0 0.0
  %586 = vmatpush1.msra.mxu0 0.0
  %587 = vmatprep.subr.mxu0 0.0
  %588 = vmatpush1.msra.mxu0 0.0
  %589 = vmatprep.subr.mxu0 0.0
  %590 = vmatpush1.msra.mxu0 0.0
  %591 = vmatprep.subr.mxu0 0.0
  %592 = vmatpush1.msra.mxu0 0.0
  %593 = vmatprep.mubr.f32.mxu0 0.0
  %594 = vmatmul.mubr.f32.gmra.mrb[0].mxu0 %v527
  %v595 = vpop.f32.mrb[0].mxu0
  %v596 = vadd.f32 0.0, %v595
  %v597 = vpop.f32.mrb[0].mxu0
  %598 = vdwg.mxu0
  %v599 = vadd.f32 %v526, %v596
  %v600 = vxor.u32 %v599, 2147483648
  %v601 = vmul.f32 %v600, 1.442695
  %v602 = vpow.pop %v601
  %v603 = vadd.f32 %v602, 1.0
  %v604 = vrcp.pop %v603
  %v605 = vmul.f32 1.0, %v604
  %v606 = vtanh.pop %v599
  %v607 = vmul.f32 %v605, %v514
  %609 = vrot.lane.b32.xlu0 %v606, 64
  %v610 = vpop.permute.xlu0 %609
  %v612 = vmul.f32 %v605, %v610
  %614 = vrot.lane.b32.xlu0 %v612, 32
  %v615 = vpop.permute.xlu0 %614
  %v617 = vadd.f32 %v607, %v615
  %v618 = vtanh.pop %v617
  %620 = vrot.lane.b32.xlu0 %v618, 64
  %v621 = vpop.permute.xlu0 %620
  %v623 = vmul.f32 %v605, %v621
  %625 = vrot.lane.b32.xlu0 %v623, 32
  %v626 = vpop.permute.xlu0 %625
  %628 = vst.msk [vmem:[#allocation3 + $0x18] sm:$0xff] %vm216, %v626
  %v629 = vld [vmem:[#allocation2 + $0x20] sm:$0xff]
  %v630 = vsel %vm216, %v626, 0
  %632 = vmatprep.subr.mxu0 0.0
  %633 = vmatpush1.msra.mxu0 %v211
  %634 = vmatprep.subr.mxu0 0.0
  %635 = vmatpush1.msra.mxu0 %v212
  %636 = vmatprep.subr.mxu0 0.0
  %637 = vmatpush1.msra.mxu0 %v213
  %638 = vmatprep.subr.mxu0 0.0
  %639 = vmatpush1.msra.mxu0 %v214
  %640 = vmatprep.subr.mxu0 0.0
  %641 = vmatpush1.msra.mxu0 0.0
  %642 = vmatprep.subr.mxu0 0.0
  %643 = vmatpush1.msra.mxu0 0.0
  %644 = vmatprep.subr.mxu0 0.0
  %645 = vmatpush1.msra.mxu0 0.0
  %646 = vmatprep.subr.mxu0 0.0
  %647 = vmatpush1.msra.mxu0 0.0
  %648 = vmatprep.subr.mxu0 0.0
  %649 = vmatpush1.msra.mxu0 0.0
  %650 = vmatprep.subr.mxu0 0.0
  %651 = vmatpush1.msra.mxu0 0.0
  %652 = vmatprep.subr.mxu0 0.0
  %653 = vmatpush1.msra.mxu0 0.0
  %654 = vmatprep.subr.mxu0 0.0
  %655 = vmatpush1.msra.mxu0 0.0
  %656 = vmatprep.subr.mxu0 0.0
  %657 = vmatpush1.msra.mxu0 0.0
  %658 = vmatprep.subr.mxu0 0.0
  %659 = vmatpush1.msra.mxu0 0.0
  %660 = vmatprep.subr.mxu0 0.0
  %661 = vmatpush1.msra.mxu0 0.0
  %662 = vmatprep.subr.mxu0 0.0
  %663 = vmatpush1.msra.mxu0 0.0
  %664 = vmatprep.subr.mxu0 0.0
  %665 = vmatpush1.msra.mxu0 0.0
  %666 = vmatprep.subr.mxu0 0.0
  %667 = vmatpush1.msra.mxu0 0.0
  %668 = vmatprep.subr.mxu0 0.0
  %669 = vmatpush1.msra.mxu0 0.0
  %670 = vmatprep.subr.mxu0 0.0
  %671 = vmatpush1.msra.mxu0 0.0
  %672 = vmatprep.subr.mxu0 0.0
  %673 = vmatpush1.msra.mxu0 0.0
  %674 = vmatprep.subr.mxu0 0.0
  %675 = vmatpush1.msra.mxu0 0.0
  %676 = vmatprep.subr.mxu0 0.0
  %677 = vmatpush1.msra.mxu0 0.0
  %678 = vmatprep.subr.mxu0 0.0
  %679 = vmatpush1.msra.mxu0 0.0
  %680 = vmatprep.subr.mxu0 0.0
  %681 = vmatpush1.msra.mxu0 0.0
  %682 = vmatprep.subr.mxu0 0.0
  %683 = vmatpush1.msra.mxu0 0.0
  %684 = vmatprep.subr.mxu0 0.0
  %685 = vmatpush1.msra.mxu0 0.0
  %686 = vmatprep.subr.mxu0 0.0
  %687 = vmatpush1.msra.mxu0 0.0
  %688 = vmatprep.subr.mxu0 0.0
  %689 = vmatpush1.msra.mxu0 0.0
  %690 = vmatprep.subr.mxu0 0.0
  %691 = vmatpush1.msra.mxu0 0.0
  %692 = vmatprep.subr.mxu0 0.0
  %693 = vmatpush1.msra.mxu0 0.0
  %694 = vmatprep.subr.mxu0 0.0
  %695 = vmatpush1.msra.mxu0 0.0
  %696 = vmatprep.mubr.f32.mxu0 0.0
  %697 = vmatmul.mubr.f32.gmra.mrb[0].mxu0 %v630
  %v698 = vpop.f32.mrb[0].mxu0
  %v699 = vadd.f32 0.0, %v698
  %v700 = vpop.f32.mrb[0].mxu0
  %701 = vdwg.mxu0
  %v702 = vadd.f32 %v629, %v699
  %v703 = vxor.u32 %v702, 2147483648
  %v704 = vmul.f32 %v703, 1.442695
  %v705 = vpow.pop %v704
  %v706 = vadd.f32 %v705, 1.0
  %v707 = vrcp.pop %v706
  %v708 = vmul.f32 1.0, %v707
  %v709 = vtanh.pop %v702
  %v710 = vmul.f32 %v708, %v617
  %712 = vrot.lane.b32.xlu0 %v709, 64
  %v713 = vpop.permute.xlu0 %712
  %v715 = vmul.f32 %v708, %v713
  %717 = vrot.lane.b32.xlu0 %v715, 32
  %v718 = vpop.permute.xlu0 %717
  %v720 = vadd.f32 %v710, %v718
  %v721 = vtanh.pop %v720
  %723 = vrot.lane.b32.xlu0 %v721, 64
  %v724 = vpop.permute.xlu0 %723
  %v726 = vmul.f32 %v708, %v724
  %728 = vrot.lane.b32.xlu0 %v726, 32
  %v729 = vpop.permute.xlu0 %728
  %731 = vst.msk [vmem:[#allocation3 + $0x20] sm:$0xff] %vm216, %v729
  %v732 = vld [vmem:[#allocation2 + $0x28] sm:$0xff]
  %v733 = vsel %vm216, %v729, 0
  %735 = vmatprep.subr.mxu0 0.0
  %736 = vmatpush1.msra.mxu0 %v211
  %737 = vmatprep.subr.mxu0 0.0
  %738 = vmatpush1.msra.mxu0 %v212
  %739 = vmatprep.subr.mxu0 0.0
  %740 = vmatpush1.msra.mxu0 %v213
  %741 = vmatprep.subr.mxu0 0.0
  %742 = vmatpush1.msra.mxu0 %v214
  %743 = vmatprep.subr.mxu0 0.0
  %744 = vmatpush1.msra.mxu0 0.0
  %745 = vmatprep.subr.mxu0 0.0
  %746 = vmatpush1.msra.mxu0 0.0
  %747 = vmatprep.subr.mxu0 0.0
  %748 = vmatpush1.msra.mxu0 0.0
  %749 = vmatprep.subr.mxu0 0.0
  %750 = vmatpush1.msra.mxu0 0.0
  %751 = vmatprep.subr.mxu0 0.0
  %752 = vmatpush1.msra.mxu0 0.0
  %753 = vmatprep.subr.mxu0 0.0
  %754 = vmatpush1.msra.mxu0 0.0
  %755 = vmatprep.subr.mxu0 0.0
  %756 = vmatpush1.msra.mxu0 0.0
  %757 = vmatprep.subr.mxu0 0.0
  %758 = vmatpush1.msra.mxu0 0.0
  %759 = vmatprep.subr.mxu0 0.0
  %760 = vmatpush1.msra.mxu0 0.0
  %761 = vmatprep.subr.mxu0 0.0
  %762 = vmatpush1.msra.mxu0 0.0
  %763 = vmatprep.subr.mxu0 0.0
  %764 = vmatpush1.msra.mxu0 0.0
  %765 = vmatprep.subr.mxu0 0.0
  %766 = vmatpush1.msra.mxu0 0.0
  %767 = vmatprep.subr.mxu0 0.0
  %768 = vmatpush1.msra.mxu0 0.0
  %769 = vmatprep.subr.mxu0 0.0
  %770 = vmatpush1.msra.mxu0 0.0
  %771 = vmatprep.subr.mxu0 0.0
  %772 = vmatpush1.msra.mxu0 0.0
  %773 = vmatprep.subr.mxu0 0.0
  %774 = vmatpush1.msra.mxu0 0.0
  %775 = vmatprep.subr.mxu0 0.0
  %776 = vmatpush1.msra.mxu0 0.0
  %777 = vmatprep.subr.mxu0 0.0
  %778 = vmatpush1.msra.mxu0 0.0
  %779 = vmatprep.subr.mxu0 0.0
  %780 = vmatpush1.msra.mxu0 0.0
  %781 = vmatprep.subr.mxu0 0.0
  %782 = vmatpush1.msra.mxu0 0.0
  %783 = vmatprep.subr.mxu0 0.0
  %784 = vmatpush1.msra.mxu0 0.0
  %785 = vmatprep.subr.mxu0 0.0
  %786 = vmatpush1.msra.mxu0 0.0
  %787 = vmatprep.subr.mxu0 0.0
  %788 = vmatpush1.msra.mxu0 0.0
  %789 = vmatprep.subr.mxu0 0.0
  %790 = vmatpush1.msra.mxu0 0.0
  %791 = vmatprep.subr.mxu0 0.0
  %792 = vmatpush1.msra.mxu0 0.0
  %793 = vmatprep.subr.mxu0 0.0
  %794 = vmatpush1.msra.mxu0 0.0
  %795 = vmatprep.subr.mxu0 0.0
  %796 = vmatpush1.msra.mxu0 0.0
  %797 = vmatprep.subr.mxu0 0.0
  %798 = vmatpush1.msra.mxu0 0.0
  %799 = vmatprep.mubr.f32.mxu0 0.0
  %800 = vmatmul.mubr.f32.gmra.mrb[0].mxu0 %v733
  %v801 = vpop.f32.mrb[0].mxu0
  %v802 = vadd.f32 0.0, %v801
  %v803 = vpop.f32.mrb[0].mxu0
  %804 = vdwg.mxu0
  %v805 = vadd.f32 %v732, %v802
  %v806 = vxor.u32 %v805, 2147483648
  %v807 = vmul.f32 %v806, 1.442695
  %v808 = vpow.pop %v807
  %v809 = vadd.f32 %v808, 1.0
  %v810 = vrcp.pop %v809
  %v811 = vmul.f32 1.0, %v810
  %v812 = vtanh.pop %v805
  %v813 = vmul.f32 %v811, %v720
  %815 = vrot.lane.b32.xlu0 %v812, 64
  %v816 = vpop.permute.xlu0 %815
  %v818 = vmul.f32 %v811, %v816
  %820 = vrot.lane.b32.xlu0 %v818, 32
  %v821 = vpop.permute.xlu0 %820
  %v823 = vadd.f32 %v813, %v821
  %v824 = vtanh.pop %v823
  %826 = vrot.lane.b32.xlu0 %v824, 64
  %v827 = vpop.permute.xlu0 %826
  %v829 = vmul.f32 %v811, %v827
  %831 = vrot.lane.b32.xlu0 %v829, 32
  %v832 = vpop.permute.xlu0 %831
  %834 = vst.msk [vmem:[#allocation3 + $0x28] sm:$0xff] %vm216, %v832
  %v835 = vld [vmem:[#allocation2 + $0x30] sm:$0xff]
  %v836 = vsel %vm216, %v832, 0
  %838 = vmatprep.subr.mxu0 0.0
  %839 = vmatpush1.msra.mxu0 %v211
  %840 = vmatprep.subr.mxu0 0.0
  %841 = vmatpush1.msra.mxu0 %v212
  %842 = vmatprep.subr.mxu0 0.0
  %843 = vmatpush1.msra.mxu0 %v213
  %844 = vmatprep.subr.mxu0 0.0
  %845 = vmatpush1.msra.mxu0 %v214
  %846 = vmatprep.subr.mxu0 0.0
  %847 = vmatpush1.msra.mxu0 0.0
  %848 = vmatprep.subr.mxu0 0.0
  %849 = vmatpush1.msra.mxu0 0.0
  %850 = vmatprep.subr.mxu0 0.0
  %851 = vmatpush1.msra.mxu0 0.0
  %852 = vmatprep.subr.mxu0 0.0
  %853 = vmatpush1.msra.mxu0 0.0
  %854 = vmatprep.subr.mxu0 0.0
  %855 = vmatpush1.msra.mxu0 0.0
  %856 = vmatprep.subr.mxu0 0.0
  %857 = vmatpush1.msra.mxu0 0.0
  %858 = vmatprep.subr.mxu0 0.0
  %859 = vmatpush1.msra.mxu0 0.0
  %860 = vmatprep.subr.mxu0 0.0
  %861 = vmatpush1.msra.mxu0 0.0
  %862 = vmatprep.subr.mxu0 0.0
  %863 = vmatpush1.msra.mxu0 0.0
  %864 = vmatprep.subr.mxu0 0.0
  %865 = vmatpush1.msra.mxu0 0.0
  %866 = vmatprep.subr.mxu0 0.0
  %867 = vmatpush1.msra.mxu0 0.0
  %868 = vmatprep.subr.mxu0 0.0
  %869 = vmatpush1.msra.mxu0 0.0
  %870 = vmatprep.subr.mxu0 0.0
  %871 = vmatpush1.msra.mxu0 0.0
  %872 = vmatprep.subr.mxu0 0.0
  %873 = vmatpush1.msra.mxu0 0.0
  %874 = vmatprep.subr.mxu0 0.0
  %875 = vmatpush1.msra.mxu0 0.0
  %876 = vmatprep.subr.mxu0 0.0
  %877 = vmatpush1.msra.mxu0 0.0
  %878 = vmatprep.subr.mxu0 0.0
  %879 = vmatpush1.msra.mxu0 0.0
  %880 = vmatprep.subr.mxu0 0.0
  %881 = vmatpush1.msra.mxu0 0.0
  %882 = vmatprep.subr.mxu0 0.0
  %883 = vmatpush1.msra.mxu0 0.0
  %884 = vmatprep.subr.mxu0 0.0
  %885 = vmatpush1.msra.mxu0 0.0
  %886 = vmatprep.subr.mxu0 0.0
  %887 = vmatpush1.msra.mxu0 0.0
  %888 = vmatprep.subr.mxu0 0.0
  %889 = vmatpush1.msra.mxu0 0.0
  %890 = vmatprep.subr.mxu0 0.0
  %891 = vmatpush1.msra.mxu0 0.0
  %892 = vmatprep.subr.mxu0 0.0
  %893 = vmatpush1.msra.mxu0 0.0
  %894 = vmatprep.subr.mxu0 0.0
  %895 = vmatpush1.msra.mxu0 0.0
  %896 = vmatprep.subr.mxu0 0.0
  %897 = vmatpush1.msra.mxu0 0.0
  %898 = vmatprep.subr.mxu0 0.0
  %899 = vmatpush1.msra.mxu0 0.0
  %900 = vmatprep.subr.mxu0 0.0
  %901 = vmatpush1.msra.mxu0 0.0
  %902 = vmatprep.mubr.f32.mxu0 0.0
  %903 = vmatmul.mubr.f32.gmra.mrb[0].mxu0 %v836
  %v904 = vpop.f32.mrb[0].mxu0
  %v905 = vadd.f32 0.0, %v904
  %v906 = vpop.f32.mrb[0].mxu0
  %907 = vdwg.mxu0
  %v908 = vadd.f32 %v835, %v905
  %v909 = vxor.u32 %v908, 2147483648
  %v910 = vmul.f32 %v909, 1.442695
  %v911 = vpow.pop %v910
  %v912 = vadd.f32 %v911, 1.0
  %v913 = vrcp.pop %v912
  %v914 = vmul.f32 1.0, %v913
  %v915 = vtanh.pop %v908
  %v916 = vmul.f32 %v914, %v823
  %918 = vrot.lane.b32.xlu0 %v915, 64
  %v919 = vpop.permute.xlu0 %918
  %v921 = vmul.f32 %v914, %v919
  %923 = vrot.lane.b32.xlu0 %v921, 32
  %v924 = vpop.permute.xlu0 %923
  %v926 = vadd.f32 %v916, %v924
  %v927 = vtanh.pop %v926
  %929 = vrot.lane.b32.xlu0 %v927, 64
  %v930 = vpop.permute.xlu0 %929
  %v932 = vmul.f32 %v914, %v930
  %934 = vrot.lane.b32.xlu0 %v932, 32
  %v935 = vpop.permute.xlu0 %934
  %937 = vst.msk [vmem:[#allocation3 + $0x30] sm:$0xff] %vm216, %v935
  %v938 = vld [vmem:[#allocation2 + $0x38] sm:$0xff]
  %v939 = vsel %vm216, %v935, 0
  %941 = vmatprep.subr.mxu0 0.0
  %942 = vmatpush1.msra.mxu0 %v211
  %943 = vmatprep.subr.mxu0 0.0
  %944 = vmatpush1.msra.mxu0 %v212
  %945 = vmatprep.subr.mxu0 0.0
  %946 = vmatpush1.msra.mxu0 %v213
  %947 = vmatprep.subr.mxu0 0.0
  %948 = vmatpush1.msra.mxu0 %v214
  %949 = vmatprep.subr.mxu0 0.0
  %950 = vmatpush1.msra.mxu0 0.0
  %951 = vmatprep.subr.mxu0 0.0
  %952 = vmatpush1.msra.mxu0 0.0
  %953 = vmatprep.subr.mxu0 0.0
  %954 = vmatpush1.msra.mxu0 0.0
  %955 = vmatprep.subr.mxu0 0.0
  %956 = vmatpush1.msra.mxu0 0.0
  %957 = vmatprep.subr.mxu0 0.0
  %958 = vmatpush1.msra.mxu0 0.0
  %959 = vmatprep.subr.mxu0 0.0
  %960 = vmatpush1.msra.mxu0 0.0
  %961 = vmatprep.subr.mxu0 0.0
  %962 = vmatpush1.msra.mxu0 0.0
  %963 = vmatprep.subr.mxu0 0.0
  %964 = vmatpush1.msra.mxu0 0.0
  %965 = vmatprep.subr.mxu0 0.0
  %966 = vmatpush1.msra.mxu0 0.0
  %967 = vmatprep.subr.mxu0 0.0
  %968 = vmatpush1.msra.mxu0 0.0
  %969 = vmatprep.subr.mxu0 0.0
  %970 = vmatpush1.msra.mxu0 0.0
  %971 = vmatprep.subr.mxu0 0.0
  %972 = vmatpush1.msra.mxu0 0.0
  %973 = vmatprep.subr.mxu0 0.0
  %974 = vmatpush1.msra.mxu0 0.0
  %975 = vmatprep.subr.mxu0 0.0
  %976 = vmatpush1.msra.mxu0 0.0
  %977 = vmatprep.subr.mxu0 0.0
  %978 = vmatpush1.msra.mxu0 0.0
  %979 = vmatprep.subr.mxu0 0.0
  %980 = vmatpush1.msra.mxu0 0.0
  %981 = vmatprep.subr.mxu0 0.0
  %982 = vmatpush1.msra.mxu0 0.0
  %983 = vmatprep.subr.mxu0 0.0
  %984 = vmatpush1.msra.mxu0 0.0
  %985 = vmatprep.subr.mxu0 0.0
  %986 = vmatpush1.msra.mxu0 0.0
  %987 = vmatprep.subr.mxu0 0.0
  %988 = vmatpush1.msra.mxu0 0.0
  %989 = vmatprep.subr.mxu0 0.0
  %990 = vmatpush1.msra.mxu0 0.0
  %991 = vmatprep.subr.mxu0 0.0
  %992 = vmatpush1.msra.mxu0 0.0
  %993 = vmatprep.subr.mxu0 0.0
  %994 = vmatpush1.msra.mxu0 0.0
  %995 = vmatprep.subr.mxu0 0.0
  %996 = vmatpush1.msra.mxu0 0.0
  %997 = vmatprep.subr.mxu0 0.0
  %998 = vmatpush1.msra.mxu0 0.0
  %999 = vmatprep.subr.mxu0 0.0
  %1000 = vmatpush1.msra.mxu0 0.0
  %1001 = vmatprep.subr.mxu0 0.0
  %1002 = vmatpush1.msra.mxu0 0.0
  %1003 = vmatprep.subr.mxu0 0.0
  %1004 = vmatpush1.msra.mxu0 0.0
  %1005 = vmatprep.mubr.f32.mxu0 0.0
  %1006 = vmatmul.mubr.f32.gmra.mrb[0].mxu0 %v939
  %v1007 = vpop.f32.mrb[0].mxu0
  %v1008 = vadd.f32 0.0, %v1007
  %v1009 = vpop.f32.mrb[0].mxu0
  %1010 = vdwg.mxu0
  %v1011 = vadd.f32 %v938, %v1008
  %v1012 = vxor.u32 %v1011, 2147483648
  %v1013 = vmul.f32 %v1012, 1.442695
  %v1014 = vpow.pop %v1013
  %v1015 = vadd.f32 %v1014, 1.0
  %v1016 = vrcp.pop %v1015
  %v1017 = vmul.f32 1.0, %v1016
  %v1018 = vtanh.pop %v1011
  %v1019 = vmul.f32 %v1017, %v926
  %1021 = vrot.lane.b32.xlu0 %v1018, 64
  %v1022 = vpop.permute.xlu0 %1021
  %v1024 = vmul.f32 %v1017, %v1022
  %1026 = vrot.lane.b32.xlu0 %v1024, 32
  %v1027 = vpop.permute.xlu0 %1026
  %v1029 = vadd.f32 %v1019, %v1027
  %v1030 = vtanh.pop %v1029
  %1032 = vrot.lane.b32.xlu0 %v1030, 64
  %v1033 = vpop.permute.xlu0 %1032
  %v1035 = vmul.f32 %v1017, %v1033
  %1037 = vrot.lane.b32.xlu0 %v1035, 32
  %v1038 = vpop.permute.xlu0 %1037
  %1040 = vst.msk [vmem:[#allocation3 + $0x38] sm:$0xff] %vm216, %v1038
  %v1041 = vld [vmem:[#allocation3] sm:$0xff]
  %v1042 = vld [vmem:[#allocation3 + $0x8] sm:$0xff]
  %v1043 = vld [vmem:[#allocation3 + $0x10] sm:$0xff]
  %v1044 = vld [vmem:[#allocation3 + $0x18] sm:$0xff]
  %v1045 = vld [vmem:[#allocation3 + $0x20] sm:$0xff]
  %v1046 = vld [vmem:[#allocation3 + $0x28] sm:$0xff]
  %v1047 = vld [vmem:[#allocation3 + $0x30] sm:$0xff]
  %v1048 = vld [vmem:[#allocation3 + $0x38] sm:$0xff]
  %v1049 = vld [vmem:[%s5] sm:$0xff]
  %v1050 = vld [vmem:[%s5 + $0x8] sm:$0xff]
  %v1051 = vld [vmem:[%s5 + $0x10] sm:$0xff]
  %v1052 = vld [vmem:[%s5 + $0x18] sm:$0xff]
  %v1053 = vld [vmem:[%s7] sm:$0x1]
  %v1055 = vlaneseq
  %v1056 = vshrl.u32 %v1055, 7
  %v1057 = vsub.s32 0, %v1056
  %v1058 = vrot.slane %v1053, %v1057
  %v1061 = vsel %vm216, %v1041, 0
  %v1064 = vsel %vm216, %v1042, 0
  %v1067 = vsel %vm216, %v1043, 0
  %v1070 = vsel %vm216, %v1044, 0
  %v1073 = vsel %vm216, %v1045, 0
  %v1076 = vsel %vm216, %v1046, 0
  %v1079 = vsel %vm216, %v1047, 0
  %v1082 = vsel %vm216, %v1048, 0
  %1084 = vmatprep.subr.mxu0 0.0
  %1085 = vmatpush1.msra.mxu0 %v1049
  %1086 = vmatprep.subr.mxu0 0.0
  %1087 = vmatpush1.msra.mxu0 %v1050
  %1088 = vmatprep.subr.mxu0 0.0
  %1089 = vmatpush1.msra.mxu0 %v1051
  %1090 = vmatprep.subr.mxu0 0.0
  %1091 = vmatpush1.msra.mxu0 %v1052
  %1092 = vmatprep.subr.mxu0 0.0
  %1093 = vmatpush1.msra.mxu0 0.0
  %1094 = vmatprep.subr.mxu0 0.0
  %1095 = vmatpush1.msra.mxu0 0.0
  %1096 = vmatprep.subr.mxu0 0.0
  %1097 = vmatpush1.msra.mxu0 0.0
  %1098 = vmatprep.subr.mxu0 0.0
  %1099 = vmatpush1.msra.mxu0 0.0
  %1100 = vmatprep.subr.mxu0 0.0
  %1101 = vmatpush1.msra.mxu0 0.0
  %1102 = vmatprep.subr.mxu0 0.0
  %1103 = vmatpush1.msra.mxu0 0.0
  %1104 = vmatprep.subr.mxu0 0.0
  %1105 = vmatpush1.msra.mxu0 0.0
  %1106 = vmatprep.subr.mxu0 0.0
  %1107 = vmatpush1.msra.mxu0 0.0
  %1108 = vmatprep.subr.mxu0 0.0
  %1109 = vmatpush1.msra.mxu0 0.0
  %1110 = vmatprep.subr.mxu0 0.0
  %1111 = vmatpush1.msra.mxu0 0.0
  %1112 = vmatprep.subr.mxu0 0.0
  %1113 = vmatpush1.msra.mxu0 0.0
  %1114 = vmatprep.subr.mxu0 0.0
  %1115 = vmatpush1.msra.mxu0 0.0
  %1116 = vmatprep.subr.mxu0 0.0
  %1117 = vmatpush1.msra.mxu0 0.0
  %1118 = vmatprep.subr.mxu0 0.0
  %1119 = vmatpush1.msra.mxu0 0.0
  %1120 = vmatprep.subr.mxu0 0.0
  %1121 = vmatpush1.msra.mxu0 0.0
  %1122 = vmatprep.subr.mxu0 0.0
  %1123 = vmatpush1.msra.mxu0 0.0
  %1124 = vmatprep.subr.mxu0 0.0
  %1125 = vmatpush1.msra.mxu0 0.0
  %1126 = vmatprep.subr.mxu0 0.0
  %1127 = vmatpush1.msra.mxu0 0.0
  %1128 = vmatprep.subr.mxu0 0.0
  %1129 = vmatpush1.msra.mxu0 0.0
  %1130 = vmatprep.subr.mxu0 0.0
  %1131 = vmatpush1.msra.mxu0 0.0
  %1132 = vmatprep.subr.mxu0 0.0
  %1133 = vmatpush1.msra.mxu0 0.0
  %1134 = vmatprep.subr.mxu0 0.0
  %1135 = vmatpush1.msra.mxu0 0.0
  %1136 = vmatprep.subr.mxu0 0.0
  %1137 = vmatpush1.msra.mxu0 0.0
  %1138 = vmatprep.subr.mxu0 0.0
  %1139 = vmatpush1.msra.mxu0 0.0
  %1140 = vmatprep.subr.mxu0 0.0
  %1141 = vmatpush1.msra.mxu0 0.0
  %1142 = vmatprep.subr.mxu0 0.0
  %1143 = vmatpush1.msra.mxu0 0.0
  %1144 = vmatprep.subr.mxu0 0.0
  %1145 = vmatpush1.msra.mxu0 0.0
  %1146 = vmatprep.subr.mxu0 0.0
  %1147 = vmatpush1.msra.mxu0 0.0
  %1148 = vmatprep.mubr.f32.mxu0 0.0
  %1149 = vmatmul.mubr.f32.gmra.mrb[0].mxu0 %v1061
  %v1150 = vpop.f32.mrb[0].mxu0
  %v1151 = vadd.f32 %v1058, %v1150
  %v1152 = vpop.f32.mrb[0].mxu0
  %1153 = vmatprep.mubr.f32.mxu0 0.0
  %1154 = vmatmul.mubr.f32.gmra.mrb[0].mxu0 %v1064
  %v1155 = vpop.f32.mrb[0].mxu0
  %v1156 = vadd.f32 %v1058, %v1155
  %v1157 = vpop.f32.mrb[0].mxu0
  %1158 = vmatprep.mubr.f32.mxu0 0.0
  %1159 = vmatmul.mubr.f32.gmra.mrb[0].mxu0 %v1067
  %v1160 = vpop.f32.mrb[0].mxu0
  %v1161 = vadd.f32 %v1058, %v1160
  %v1162 = vpop.f32.mrb[0].mxu0
  %1163 = vmatprep.mubr.f32.mxu0 0.0
  %1164 = vmatmul.mubr.f32.gmra.mrb[0].mxu0 %v1070
  %v1165 = vpop.f32.mrb[0].mxu0
  %v1166 = vadd.f32 %v1058, %v1165
  %v1167 = vpop.f32.mrb[0].mxu0
  %1168 = vmatprep.mubr.f32.mxu0 0.0
  %1169 = vmatmul.mubr.f32.gmra.mrb[0].mxu0 %v1073
  %v1170 = vpop.f32.mrb[0].mxu0
  %v1171 = vadd.f32 %v1058, %v1170
  %v1172 = vpop.f32.mrb[0].mxu0
  %1173 = vmatprep.mubr.f32.mxu0 0.0
  %1174 = vmatmul.mubr.f32.gmra.mrb[0].mxu0 %v1076
  %v1175 = vpop.f32.mrb[0].mxu0
  %v1176 = vadd.f32 %v1058, %v1175
  %v1177 = vpop.f32.mrb[0].mxu0
  %1178 = vmatprep.mubr.f32.mxu0 0.0
  %1179 = vmatmul.mubr.f32.gmra.mrb[0].mxu0 %v1079
  %v1180 = vpop.f32.mrb[0].mxu0
  %v1181 = vadd.f32 %v1058, %v1180
  %v1182 = vpop.f32.mrb[0].mxu0
  %1183 = vmatprep.mubr.f32.mxu0 0.0
  %1184 = vmatmul.mubr.f32.gmra.mrb[0].mxu0 %v1082
  %v1185 = vpop.f32.mrb[0].mxu0
  %v1186 = vadd.f32 %v1058, %v1185
  %v1187 = vpop.f32.mrb[0].mxu0
  %1188 = vdwg.mxu0
  %1189 = vst [vmem:[#allocation2] sm:$0xff] %v1151
  %1190 = vst [vmem:[#allocation2 + $0x8] sm:$0xff] %v1156
  %1191 = vst [vmem:[#allocation2 + $0x10] sm:$0xff] %v1161
  %1192 = vst [vmem:[#allocation2 + $0x18] sm:$0xff] %v1166
  %1193 = vst [vmem:[#allocation2 + $0x20] sm:$0xff] %v1171
  %1194 = vst [vmem:[#allocation2 + $0x28] sm:$0xff] %v1176
  %1195 = vst [vmem:[#allocation2 + $0x30] sm:$0xff] %v1181
  %1196 = vst [vmem:[#allocation2 + $0x38] sm:$0xff] %v1186
  %v1197 = vld [vmem:[%s6] sm:$0xff]
  %v1198 = vld [vmem:[%s6 + $0x8] sm:$0xff]
  %v1199 = vld [vmem:[%s6 + $0x10] sm:$0xff]
  %v1200 = vld [vmem:[%s6 + $0x18] sm:$0xff]
  %v1201 = vld [vmem:[#allocation2] sm:$0xff]
  %1202 = vmatprep.subr.mxu0 0.0
  %1203 = vmatpush1.msra.mxu0 %v1197
  %1204 = vmatprep.subr.mxu0 0.0
  %1205 = vmatpush1.msra.mxu0 %v1198
  %1206 = vmatprep.subr.mxu0 0.0
  %1207 = vmatpush1.msra.mxu0 %v1199
  %1208 = vmatprep.subr.mxu0 0.0
  %1209 = vmatpush1.msra.mxu0 %v1200
  %1210 = vmatprep.subr.mxu0 0.0
  %1211 = vmatpush1.msra.mxu0 0.0
  %1212 = vmatprep.subr.mxu0 0.0
  %1213 = vmatpush1.msra.mxu0 0.0
  %1214 = vmatprep.subr.mxu0 0.0
  %1215 = vmatpush1.msra.mxu0 0.0
  %1216 = vmatprep.subr.mxu0 0.0
  %1217 = vmatpush1.msra.mxu0 0.0
  %1218 = vmatprep.subr.mxu0 0.0
  %1219 = vmatpush1.msra.mxu0 0.0
  %1220 = vmatprep.subr.mxu0 0.0
  %1221 = vmatpush1.msra.mxu0 0.0
  %1222 = vmatprep.subr.mxu0 0.0
  %1223 = vmatpush1.msra.mxu0 0.0
  %1224 = vmatprep.subr.mxu0 0.0
  %1225 = vmatpush1.msra.mxu0 0.0
  %1226 = vmatprep.subr.mxu0 0.0
  %1227 = vmatpush1.msra.mxu0 0.0
  %1228 = vmatprep.subr.mxu0 0.0
  %1229 = vmatpush1.msra.mxu0 0.0
  %1230 = vmatprep.subr.mxu0 0.0
  %1231 = vmatpush1.msra.mxu0 0.0
  %1232 = vmatprep.subr.mxu0 0.0
  %1233 = vmatpush1.msra.mxu0 0.0
  %1234 = vmatprep.subr.mxu0 0.0
  %1235 = vmatpush1.msra.mxu0 0.0
  %1236 = vmatprep.subr.mxu0 0.0
  %1237 = vmatpush1.msra.mxu0 0.0
  %1238 = vmatprep.subr.mxu0 0.0
  %1239 = vmatpush1.msra.mxu0 0.0
  %1240 = vmatprep.subr.mxu0 0.0
  %1241 = vmatpush1.msra.mxu0 0.0
  %1242 = vmatprep.subr.mxu0 0.0
  %1243 = vmatpush1.msra.mxu0 0.0
  %1244 = vmatprep.subr.mxu0 0.0
  %1245 = vmatpush1.msra.mxu0 0.0
  %1246 = vmatprep.subr.mxu0 0.0
  %1247 = vmatpush1.msra.mxu0 0.0
  %1248 = vmatprep.subr.mxu0 0.0
  %1249 = vmatpush1.msra.mxu0 0.0
  %1250 = vmatprep.subr.mxu0 0.0
  %1251 = vmatpush1.msra.mxu0 0.0
  %1252 = vmatprep.subr.mxu0 0.0
  %1253 = vmatpush1.msra.mxu0 0.0
  %1254 = vmatprep.subr.mxu0 0.0
  %1255 = vmatpush1.msra.mxu0 0.0
  %1256 = vmatprep.subr.mxu0 0.0
  %1257 = vmatpush1.msra.mxu0 0.0
  %1258 = vmatprep.subr.mxu0 0.0
  %1259 = vmatpush1.msra.mxu0 0.0
  %1260 = vmatprep.subr.mxu0 0.0
  %1261 = vmatpush1.msra.mxu0 0.0
  %1262 = vmatprep.subr.mxu0 0.0
  %1263 = vmatpush1.msra.mxu0 0.0
  %1264 = vmatprep.subr.mxu0 0.0
  %1265 = vmatpush1.msra.mxu0 0.0
  %1266 = vmatprep.mubr.f32.mxu0 0.0
  %1267 = vmatmul.mubr.f32.gmra.mrb[0].mxu0 %v218
  %v1268 = vpop.f32.mrb[0].mxu0
  %v1269 = vadd.f32 0.0, %v1268
  %v1270 = vpop.f32.mrb[0].mxu0
  %1271 = vdwg.mxu0
  %v1272 = vadd.f32 %v1201, %v1269
  %v1273 = vxor.u32 %v1272, 2147483648
  %v1274 = vmul.f32 %v1273, 1.442695
  %v1275 = vpow.pop %v1274
  %v1276 = vadd.f32 %v1275, 1.0
  %v1277 = vrcp.pop %v1276
  %v1278 = vmul.f32 1.0, %v1277
  %v1279 = vtanh.pop %v1272
  %v1280 = vmul.f32 %v1278, 0.0
  %1282 = vrot.lane.b32.xlu0 %v1279, 64
  %v1283 = vpop.permute.xlu0 %1282
  %v1285 = vmul.f32 %v1278, %v1283
  %1287 = vrot.lane.b32.xlu0 %v1285, 32
  %v1288 = vpop.permute.xlu0 %1287
  %v1290 = vadd.f32 %v1280, %v1288
  %v1291 = vtanh.pop %v1290
  %1293 = vrot.lane.b32.xlu0 %v1291, 64
  %v1294 = vpop.permute.xlu0 %1293
  %v1296 = vmul.f32 %v1278, %v1294
  %1298 = vrot.lane.b32.xlu0 %v1296, 32
  %v1299 = vpop.permute.xlu0 %1298
  %1301 = vst.msk [vmem:[#allocation3] sm:$0xff] %vm216, %v1299
  %v1302 = vld [vmem:[#allocation2 + $0x8] sm:$0xff]
  %v1303 = vsel %vm216, %v1299, 0
  %1305 = vmatprep.subr.mxu0 0.0
  %1306 = vmatpush1.msra.mxu0 %v1197
  %1307 = vmatprep.subr.mxu0 0.0
  %1308 = vmatpush1.msra.mxu0 %v1198
  %1309 = vmatprep.subr.mxu0 0.0
  %1310 = vmatpush1.msra.mxu0 %v1199
  %1311 = vmatprep.subr.mxu0 0.0
  %1312 = vmatpush1.msra.mxu0 %v1200
  %1313 = vmatprep.subr.mxu0 0.0
  %1314 = vmatpush1.msra.mxu0 0.0
  %1315 = vmatprep.subr.mxu0 0.0
  %1316 = vmatpush1.msra.mxu0 0.0
  %1317 = vmatprep.subr.mxu0 0.0
  %1318 = vmatpush1.msra.mxu0 0.0
  %1319 = vmatprep.subr.mxu0 0.0
  %1320 = vmatpush1.msra.mxu0 0.0
  %1321 = vmatprep.subr.mxu0 0.0
  %1322 = vmatpush1.msra.mxu0 0.0
  %1323 = vmatprep.subr.mxu0 0.0
  %1324 = vmatpush1.msra.mxu0 0.0
  %1325 = vmatprep.subr.mxu0 0.0
  %1326 = vmatpush1.msra.mxu0 0.0
  %1327 = vmatprep.subr.mxu0 0.0
  %1328 = vmatpush1.msra.mxu0 0.0
  %1329 = vmatprep.subr.mxu0 0.0
  %1330 = vmatpush1.msra.mxu0 0.0
  %1331 = vmatprep.subr.mxu0 0.0
  %1332 = vmatpush1.msra.mxu0 0.0
  %1333 = vmatprep.subr.mxu0 0.0
  %1334 = vmatpush1.msra.mxu0 0.0
  %1335 = vmatprep.subr.mxu0 0.0
  %1336 = vmatpush1.msra.mxu0 0.0
  %1337 = vmatprep.subr.mxu0 0.0
  %1338 = vmatpush1.msra.mxu0 0.0
  %1339 = vmatprep.subr.mxu0 0.0
  %1340 = vmatpush1.msra.mxu0 0.0
  %1341 = vmatprep.subr.mxu0 0.0
  %1342 = vmatpush1.msra.mxu0 0.0
  %1343 = vmatprep.subr.mxu0 0.0
  %1344 = vmatpush1.msra.mxu0 0.0
  %1345 = vmatprep.subr.mxu0 0.0
  %1346 = vmatpush1.msra.mxu0 0.0
  %1347 = vmatprep.subr.mxu0 0.0
  %1348 = vmatpush1.msra.mxu0 0.0
  %1349 = vmatprep.subr.mxu0 0.0
  %1350 = vmatpush1.msra.mxu0 0.0
  %1351 = vmatprep.subr.mxu0 0.0
  %1352 = vmatpush1.msra.mxu0 0.0
  %1353 = vmatprep.subr.mxu0 0.0
  %1354 = vmatpush1.msra.mxu0 0.0
  %1355 = vmatprep.subr.mxu0 0.0
  %1356 = vmatpush1.msra.mxu0 0.0
  %1357 = vmatprep.subr.mxu0 0.0
  %1358 = vmatpush1.msra.mxu0 0.0
  %1359 = vmatprep.subr.mxu0 0.0
  %1360 = vmatpush1.msra.mxu0 0.0
  %1361 = vmatprep.subr.mxu0 0.0
  %1362 = vmatpush1.msra.mxu0 0.0
  %1363 = vmatprep.subr.mxu0 0.0
  %1364 = vmatpush1.msra.mxu0 0.0
  %1365 = vmatprep.subr.mxu0 0.0
  %1366 = vmatpush1.msra.mxu0 0.0
  %1367 = vmatprep.subr.mxu0 0.0
  %1368 = vmatpush1.msra.mxu0 0.0
  %1369 = vmatprep.mubr.f32.mxu0 0.0
  %1370 = vmatmul.mubr.f32.gmra.mrb[0].mxu0 %v1303
  %v1371 = vpop.f32.mrb[0].mxu0
  %v1372 = vadd.f32 0.0, %v1371
  %v1373 = vpop.f32.mrb[0].mxu0
  %1374 = vdwg.mxu0
  %v1375 = vadd.f32 %v1302, %v1372
  %v1376 = vxor.u32 %v1375, 2147483648
  %v1377 = vmul.f32 %v1376, 1.442695
  %v1378 = vpow.pop %v1377
  %v1379 = vadd.f32 %v1378, 1.0
  %v1380 = vrcp.pop %v1379
  %v1381 = vmul.f32 1.0, %v1380
  %v1382 = vtanh.pop %v1375
  %v1383 = vmul.f32 %v1381, %v1290
  %1385 = vrot.lane.b32.xlu0 %v1382, 64
  %v1386 = vpop.permute.xlu0 %1385
  %v1388 = vmul.f32 %v1381, %v1386
  %1390 = vrot.lane.b32.xlu0 %v1388, 32
  %v1391 = vpop.permute.xlu0 %1390
  %v1393 = vadd.f32 %v1383, %v1391
  %v1394 = vtanh.pop %v1393
  %1396 = vrot.lane.b32.xlu0 %v1394, 64
  %v1397 = vpop.permute.xlu0 %1396
  %v1399 = vmul.f32 %v1381, %v1397
  %1401 = vrot.lane.b32.xlu0 %v1399, 32
  %v1402 = vpop.permute.xlu0 %1401
  %1404 = vst.msk [vmem:[#allocation3 + $0x8] sm:$0xff] %vm216, %v1402
  %v1405 = vld [vmem:[#allocation2 + $0x10] sm:$0xff]
  %v1406 = vsel %vm216, %v1402, 0
  %1408 = vmatprep.subr.mxu0 0.0
  %1409 = vmatpush1.msra.mxu0 %v1197
  %1410 = vmatprep.subr.mxu0 0.0
  %1411 = vmatpush1.msra.mxu0 %v1198
  %1412 = vmatprep.subr.mxu0 0.0
  %1413 = vmatpush1.msra.mxu0 %v1199
  %1414 = vmatprep.subr.mxu0 0.0
  %1415 = vmatpush1.msra.mxu0 %v1200
  %1416 = vmatprep.subr.mxu0 0.0
  %1417 = vmatpush1.msra.mxu0 0.0
  %1418 = vmatprep.subr.mxu0 0.0
  %1419 = vmatpush1.msra.mxu0 0.0
  %1420 = vmatprep.subr.mxu0 0.0
  %1421 = vmatpush1.msra.mxu0 0.0
  %1422 = vmatprep.subr.mxu0 0.0
  %1423 = vmatpush1.msra.mxu0 0.0
  %1424 = vmatprep.subr.mxu0 0.0
  %1425 = vmatpush1.msra.mxu0 0.0
  %1426 = vmatprep.subr.mxu0 0.0
  %1427 = vmatpush1.msra.mxu0 0.0
  %1428 = vmatprep.subr.mxu0 0.0
  %1429 = vmatpush1.msra.mxu0 0.0
  %1430 = vmatprep.subr.mxu0 0.0
  %1431 = vmatpush1.msra.mxu0 0.0
  %1432 = vmatprep.subr.mxu0 0.0
  %1433 = vmatpush1.msra.mxu0 0.0
  %1434 = vmatprep.subr.mxu0 0.0
  %1435 = vmatpush1.msra.mxu0 0.0
  %1436 = vmatprep.subr.mxu0 0.0
  %1437 = vmatpush1.msra.mxu0 0.0
  %1438 = vmatprep.subr.mxu0 0.0
  %1439 = vmatpush1.msra.mxu0 0.0
  %1440 = vmatprep.subr.mxu0 0.0
  %1441 = vmatpush1.msra.mxu0 0.0
  %1442 = vmatprep.subr.mxu0 0.0
  %1443 = vmatpush1.msra.mxu0 0.0
  %1444 = vmatprep.subr.mxu0 0.0
  %1445 = vmatpush1.msra.mxu0 0.0
  %1446 = vmatprep.subr.mxu0 0.0
  %1447 = vmatpush1.msra.mxu0 0.0
  %1448 = vmatprep.subr.mxu0 0.0
  %1449 = vmatpush1.msra.mxu0 0.0
  %1450 = vmatprep.subr.mxu0 0.0
  %1451 = vmatpush1.msra.mxu0 0.0
  %1452 = vmatprep.subr.mxu0 0.0
  %1453 = vmatpush1.msra.mxu0 0.0
  %1454 = vmatprep.subr.mxu0 0.0
  %1455 = vmatpush1.msra.mxu0 0.0
  %1456 = vmatprep.subr.mxu0 0.0
  %1457 = vmatpush1.msra.mxu0 0.0
  %1458 = vmatprep.subr.mxu0 0.0
  %1459 = vmatpush1.msra.mxu0 0.0
  %1460 = vmatprep.subr.mxu0 0.0
  %1461 = vmatpush1.msra.mxu0 0.0
  %1462 = vmatprep.subr.mxu0 0.0
  %1463 = vmatpush1.msra.mxu0 0.0
  %1464 = vmatprep.subr.mxu0 0.0
  %1465 = vmatpush1.msra.mxu0 0.0
  %1466 = vmatprep.subr.mxu0 0.0
  %1467 = vmatpush1.msra.mxu0 0.0
  %1468 = vmatprep.subr.mxu0 0.0
  %1469 = vmatpush1.msra.mxu0 0.0
  %1470 = vmatprep.subr.mxu0 0.0
  %1471 = vmatpush1.msra.mxu0 0.0
  %1472 = vmatprep.mubr.f32.mxu0 0.0
  %1473 = vmatmul.mubr.f32.gmra.mrb[0].mxu0 %v1406
  %v1474 = vpop.f32.mrb[0].mxu0
  %v1475 = vadd.f32 0.0, %v1474
  %v1476 = vpop.f32.mrb[0].mxu0
  %1477 = vdwg.mxu0
  %v1478 = vadd.f32 %v1405, %v1475
  %v1479 = vxor.u32 %v1478, 2147483648
  %v1480 = vmul.f32 %v1479, 1.442695
  %v1481 = vpow.pop %v1480
  %v1482 = vadd.f32 %v1481, 1.0
  %v1483 = vrcp.pop %v1482
  %v1484 = vmul.f32 1.0, %v1483
  %v1485 = vtanh.pop %v1478
  %v1486 = vmul.f32 %v1484, %v1393
  %1488 = vrot.lane.b32.xlu0 %v1485, 64
  %v1489 = vpop.permute.xlu0 %1488
  %v1491 = vmul.f32 %v1484, %v1489
  %1493 = vrot.lane.b32.xlu0 %v1491, 32
  %v1494 = vpop.permute.xlu0 %1493
  %v1496 = vadd.f32 %v1486, %v1494
  %v1497 = vtanh.pop %v1496
  %1499 = vrot.lane.b32.xlu0 %v1497, 64
  %v1500 = vpop.permute.xlu0 %1499
  %v1502 = vmul.f32 %v1484, %v1500
  %1504 = vrot.lane.b32.xlu0 %v1502, 32
  %v1505 = vpop.permute.xlu0 %1504
  %1507 = vst.msk [vmem:[#allocation3 + $0x10] sm:$0xff] %vm216, %v1505
  %v1508 = vld [vmem:[#allocation2 + $0x18] sm:$0xff]
  %v1509 = vsel %vm216, %v1505, 0
  %1511 = vmatprep.subr.mxu0 0.0
  %1512 = vmatpush1.msra.mxu0 %v1197
  %1513 = vmatprep.subr.mxu0 0.0
  %1514 = vmatpush1.msra.mxu0 %v1198
  %1515 = vmatprep.subr.mxu0 0.0
  %1516 = vmatpush1.msra.mxu0 %v1199
  %1517 = vmatprep.subr.mxu0 0.0
  %1518 = vmatpush1.msra.mxu0 %v1200
  %1519 = vmatprep.subr.mxu0 0.0
  %1520 = vmatpush1.msra.mxu0 0.0
  %1521 = vmatprep.subr.mxu0 0.0
  %1522 = vmatpush1.msra.mxu0 0.0
  %1523 = vmatprep.subr.mxu0 0.0
  %1524 = vmatpush1.msra.mxu0 0.0
  %1525 = vmatprep.subr.mxu0 0.0
  %1526 = vmatpush1.msra.mxu0 0.0
  %1527 = vmatprep.subr.mxu0 0.0
  %1528 = vmatpush1.msra.mxu0 0.0
  %1529 = vmatprep.subr.mxu0 0.0
  %1530 = vmatpush1.msra.mxu0 0.0
  %1531 = vmatprep.subr.mxu0 0.0
  %1532 = vmatpush1.msra.mxu0 0.0
  %1533 = vmatprep.subr.mxu0 0.0
  %1534 = vmatpush1.msra.mxu0 0.0
  %1535 = vmatprep.subr.mxu0 0.0
  %1536 = vmatpush1.msra.mxu0 0.0
  %1537 = vmatprep.subr.mxu0 0.0
  %1538 = vmatpush1.msra.mxu0 0.0
  %1539 = vmatprep.subr.mxu0 0.0
  %1540 = vmatpush1.msra.mxu0 0.0
  %1541 = vmatprep.subr.mxu0 0.0
  %1542 = vmatpush1.msra.mxu0 0.0
  %1543 = vmatprep.subr.mxu0 0.0
  %1544 = vmatpush1.msra.mxu0 0.0
  %1545 = vmatprep.subr.mxu0 0.0
  %1546 = vmatpush1.msra.mxu0 0.0
  %1547 = vmatprep.subr.mxu0 0.0
  %1548 = vmatpush1.msra.mxu0 0.0
  %1549 = vmatprep.subr.mxu0 0.0
  %1550 = vmatpush1.msra.mxu0 0.0
  %1551 = vmatprep.subr.mxu0 0.0
  %1552 = vmatpush1.msra.mxu0 0.0
  %1553 = vmatprep.subr.mxu0 0.0
  %1554 = vmatpush1.msra.mxu0 0.0
  %1555 = vmatprep.subr.mxu0 0.0
  %1556 = vmatpush1.msra.mxu0 0.0
  %1557 = vmatprep.subr.mxu0 0.0
  %1558 = vmatpush1.msra.mxu0 0.0
  %1559 = vmatprep.subr.mxu0 0.0
  %1560 = vmatpush1.msra.mxu0 0.0
  %1561 = vmatprep.subr.mxu0 0.0
  %1562 = vmatpush1.msra.mxu0 0.0
  %1563 = vmatprep.subr.mxu0 0.0
  %1564 = vmatpush1.msra.mxu0 0.0
  %1565 = vmatprep.subr.mxu0 0.0
  %1566 = vmatpush1.msra.mxu0 0.0
  %1567 = vmatprep.subr.mxu0 0.0
  %1568 = vmatpush1.msra.mxu0 0.0
  %1569 = vmatprep.subr.mxu0 0.0
  %1570 = vmatpush1.msra.mxu0 0.0
  %1571 = vmatprep.subr.mxu0 0.0
  %1572 = vmatpush1.msra.mxu0 0.0
  %1573 = vmatprep.subr.mxu0 0.0
  %1574 = vmatpush1.msra.mxu0 0.0
  %1575 = vmatprep.mubr.f32.mxu0 0.0
  %1576 = vmatmul.mubr.f32.gmra.mrb[0].mxu0 %v1509
  %v1577 = vpop.f32.mrb[0].mxu0
  %v1578 = vadd.f32 0.0, %v1577
  %v1579 = vpop.f32.mrb[0].mxu0
  %1580 = vdwg.mxu0
  %v1581 = vadd.f32 %v1508, %v1578
  %v1582 = vxor.u32 %v1581, 2147483648
  %v1583 = vmul.f32 %v1582, 1.442695
  %v1584 = vpow.pop %v1583
  %v1585 = vadd.f32 %v1584, 1.0
  %v1586 = vrcp.pop %v1585
  %v1587 = vmul.f32 1.0, %v1586
  %v1588 = vtanh.pop %v1581
  %v1589 = vmul.f32 %v1587, %v1496
  %1591 = vrot.lane.b32.xlu0 %v1588, 64
  %v1592 = vpop.permute.xlu0 %1591
  %v1594 = vmul.f32 %v1587, %v1592
  %1596 = vrot.lane.b32.xlu0 %v1594, 32
  %v1597 = vpop.permute.xlu0 %1596
  %v1599 = vadd.f32 %v1589, %v1597
  %v1600 = vtanh.pop %v1599
  %1602 = vrot.lane.b32.xlu0 %v1600, 64
  %v1603 = vpop.permute.xlu0 %1602
  %v1605 = vmul.f32 %v1587, %v1603
  %1607 = vrot.lane.b32.xlu0 %v1605, 32
  %v1608 = vpop.permute.xlu0 %1607
  %1610 = vst.msk [vmem:[#allocation3 + $0x18] sm:$0xff] %vm216, %v1608
  %v1611 = vld [vmem:[#allocation2 + $0x20] sm:$0xff]
  %v1612 = vsel %vm216, %v1608, 0
  %1614 = vmatprep.subr.mxu0 0.0
  %1615 = vmatpush1.msra.mxu0 %v1197
  %1616 = vmatprep.subr.mxu0 0.0
  %1617 = vmatpush1.msra.mxu0 %v1198
  %1618 = vmatprep.subr.mxu0 0.0
  %1619 = vmatpush1.msra.mxu0 %v1199
  %1620 = vmatprep.subr.mxu0 0.0
  %1621 = vmatpush1.msra.mxu0 %v1200
  %1622 = vmatprep.subr.mxu0 0.0
  %1623 = vmatpush1.msra.mxu0 0.0
  %1624 = vmatprep.subr.mxu0 0.0
  %1625 = vmatpush1.msra.mxu0 0.0
  %1626 = vmatprep.subr.mxu0 0.0
  %1627 = vmatpush1.msra.mxu0 0.0
  %1628 = vmatprep.subr.mxu0 0.0
  %1629 = vmatpush1.msra.mxu0 0.0
  %1630 = vmatprep.subr.mxu0 0.0
  %1631 = vmatpush1.msra.mxu0 0.0
  %1632 = vmatprep.subr.mxu0 0.0
  %1633 = vmatpush1.msra.mxu0 0.0
  %1634 = vmatprep.subr.mxu0 0.0
  %1635 = vmatpush1.msra.mxu0 0.0
  %1636 = vmatprep.subr.mxu0 0.0
  %1637 = vmatpush1.msra.mxu0 0.0
  %1638 = vmatprep.subr.mxu0 0.0
  %1639 = vmatpush1.msra.mxu0 0.0
  %1640 = vmatprep.subr.mxu0 0.0
  %1641 = vmatpush1.msra.mxu0 0.0
  %1642 = vmatprep.subr.mxu0 0.0
  %1643 = vmatpush1.msra.mxu0 0.0
  %1644 = vmatprep.subr.mxu0 0.0
  %1645 = vmatpush1.msra.mxu0 0.0
  %1646 = vmatprep.subr.mxu0 0.0
  %1647 = vmatpush1.msra.mxu0 0.0
  %1648 = vmatprep.subr.mxu0 0.0
  %1649 = vmatpush1.msra.mxu0 0.0
  %1650 = vmatprep.subr.mxu0 0.0
  %1651 = vmatpush1.msra.mxu0 0.0
  %1652 = vmatprep.subr.mxu0 0.0
  %1653 = vmatpush1.msra.mxu0 0.0
  %1654 = vmatprep.subr.mxu0 0.0
  %1655 = vmatpush1.msra.mxu0 0.0
  %1656 = vmatprep.subr.mxu0 0.0
  %1657 = vmatpush1.msra.mxu0 0.0
  %1658 = vmatprep.subr.mxu0 0.0
  %1659 = vmatpush1.msra.mxu0 0.0
  %1660 = vmatprep.subr.mxu0 0.0
  %1661 = vmatpush1.msra.mxu0 0.0
  %1662 = vmatprep.subr.mxu0 0.0
  %1663 = vmatpush1.msra.mxu0 0.0
  %1664 = vmatprep.subr.mxu0 0.0
  %1665 = vmatpush1.msra.mxu0 0.0
  %1666 = vmatprep.subr.mxu0 0.0
  %1667 = vmatpush1.msra.mxu0 0.0
  %1668 = vmatprep.subr.mxu0 0.0
  %1669 = vmatpush1.msra.mxu0 0.0
  %1670 = vmatprep.subr.mxu0 0.0
  %1671 = vmatpush1.msra.mxu0 0.0
  %1672 = vmatprep.subr.mxu0 0.0
  %1673 = vmatpush1.msra.mxu0 0.0
  %1674 = vmatprep.subr.mxu0 0.0
  %1675 = vmatpush1.msra.mxu0 0.0
  %1676 = vmatprep.subr.mxu0 0.0
  %1677 = vmatpush1.msra.mxu0 0.0
  %1678 = vmatprep.mubr.f32.mxu0 0.0
  %1679 = vmatmul.mubr.f32.gmra.mrb[0].mxu0 %v1612
  %v1680 = vpop.f32.mrb[0].mxu0
  %v1681 = vadd.f32 0.0, %v1680
  %v1682 = vpop.f32.mrb[0].mxu0
  %1683 = vdwg.mxu0
  %v1684 = vadd.f32 %v1611, %v1681
  %v1685 = vxor.u32 %v1684, 2147483648
  %v1686 = vmul.f32 %v1685, 1.442695
  %v1687 = vpow.pop %v1686
  %v1688 = vadd.f32 %v1687, 1.0
  %v1689 = vrcp.pop %v1688
  %v1690 = vmul.f32 1.0, %v1689
  %v1691 = vtanh.pop %v1684
  %v1692 = vmul.f32 %v1690, %v1599
  %1694 = vrot.lane.b32.xlu0 %v1691, 64
  %v1695 = vpop.permute.xlu0 %1694
  %v1697 = vmul.f32 %v1690, %v1695
  %1699 = vrot.lane.b32.xlu0 %v1697, 32
  %v1700 = vpop.permute.xlu0 %1699
  %v1702 = vadd.f32 %v1692, %v1700
  %v1703 = vtanh.pop %v1702
  %1705 = vrot.lane.b32.xlu0 %v1703, 64
  %v1706 = vpop.permute.xlu0 %1705
  %v1708 = vmul.f32 %v1690, %v1706
  %1710 = vrot.lane.b32.xlu0 %v1708, 32
  %v1711 = vpop.permute.xlu0 %1710
  %1713 = vst.msk [vmem:[#allocation3 + $0x20] sm:$0xff] %vm216, %v1711
  %v1714 = vld [vmem:[#allocation2 + $0x28] sm:$0xff]
  %v1715 = vsel %vm216, %v1711, 0
  %1717 = vmatprep.subr.mxu0 0.0
  %1718 = vmatpush1.msra.mxu0 %v1197
  %1719 = vmatprep.subr.mxu0 0.0
  %1720 = vmatpush1.msra.mxu0 %v1198
  %1721 = vmatprep.subr.mxu0 0.0
  %1722 = vmatpush1.msra.mxu0 %v1199
  %1723 = vmatprep.subr.mxu0 0.0
  %1724 = vmatpush1.msra.mxu0 %v1200
  %1725 = vmatprep.subr.mxu0 0.0
  %1726 = vmatpush1.msra.mxu0 0.0
  %1727 = vmatprep.subr.mxu0 0.0
  %1728 = vmatpush1.msra.mxu0 0.0
  %1729 = vmatprep.subr.mxu0 0.0
  %1730 = vmatpush1.msra.mxu0 0.0
  %1731 = vmatprep.subr.mxu0 0.0
  %1732 = vmatpush1.msra.mxu0 0.0
  %1733 = vmatprep.subr.mxu0 0.0
  %1734 = vmatpush1.msra.mxu0 0.0
  %1735 = vmatprep.subr.mxu0 0.0
  %1736 = vmatpush1.msra.mxu0 0.0
  %1737 = vmatprep.subr.mxu0 0.0
  %1738 = vmatpush1.msra.mxu0 0.0
  %1739 = vmatprep.subr.mxu0 0.0
  %1740 = vmatpush1.msra.mxu0 0.0
  %1741 = vmatprep.subr.mxu0 0.0
  %1742 = vmatpush1.msra.mxu0 0.0
  %1743 = vmatprep.subr.mxu0 0.0
  %1744 = vmatpush1.msra.mxu0 0.0
  %1745 = vmatprep.subr.mxu0 0.0
  %1746 = vmatpush1.msra.mxu0 0.0
  %1747 = vmatprep.subr.mxu0 0.0
  %1748 = vmatpush1.msra.mxu0 0.0
  %1749 = vmatprep.subr.mxu0 0.0
  %1750 = vmatpush1.msra.mxu0 0.0
  %1751 = vmatprep.subr.mxu0 0.0
  %1752 = vmatpush1.msra.mxu0 0.0
  %1753 = vmatprep.subr.mxu0 0.0
  %1754 = vmatpush1.msra.mxu0 0.0
  %1755 = vmatprep.subr.mxu0 0.0
  %1756 = vmatpush1.msra.mxu0 0.0
  %1757 = vmatprep.subr.mxu0 0.0
  %1758 = vmatpush1.msra.mxu0 0.0
  %1759 = vmatprep.subr.mxu0 0.0
  %1760 = vmatpush1.msra.mxu0 0.0
  %1761 = vmatprep.subr.mxu0 0.0
  %1762 = vmatpush1.msra.mxu0 0.0
  %1763 = vmatprep.subr.mxu0 0.0
  %1764 = vmatpush1.msra.mxu0 0.0
  %1765 = vmatprep.subr.mxu0 0.0
  %1766 = vmatpush1.msra.mxu0 0.0
  %1767 = vmatprep.subr.mxu0 0.0
  %1768 = vmatpush1.msra.mxu0 0.0
  %1769 = vmatprep.subr.mxu0 0.0
  %1770 = vmatpush1.msra.mxu0 0.0
  %1771 = vmatprep.subr.mxu0 0.0
  %1772 = vmatpush1.msra.mxu0 0.0
  %1773 = vmatprep.subr.mxu0 0.0
  %1774 = vmatpush1.msra.mxu0 0.0
  %1775 = vmatprep.subr.mxu0 0.0
  %1776 = vmatpush1.msra.mxu0 0.0
  %1777 = vmatprep.subr.mxu0 0.0
  %1778 = vmatpush1.msra.mxu0 0.0
  %1779 = vmatprep.subr.mxu0 0.0
  %1780 = vmatpush1.msra.mxu0 0.0
  %1781 = vmatprep.mubr.f32.mxu0 0.0
  %1782 = vmatmul.mubr.f32.gmra.mrb[0].mxu0 %v1715
  %v1783 = vpop.f32.mrb[0].mxu0
  %v1784 = vadd.f32 0.0, %v1783
  %v1785 = vpop.f32.mrb[0].mxu0
  %1786 = vdwg.mxu0
  %v1787 = vadd.f32 %v1714, %v1784
  %v1788 = vxor.u32 %v1787, 2147483648
  %v1789 = vmul.f32 %v1788, 1.442695
  %v1790 = vpow.pop %v1789
  %v1791 = vadd.f32 %v1790, 1.0
  %v1792 = vrcp.pop %v1791
  %v1793 = vmul.f32 1.0, %v1792
  %v1794 = vtanh.pop %v1787
  %v1795 = vmul.f32 %v1793, %v1702
  %1797 = vrot.lane.b32.xlu0 %v1794, 64
  %v1798 = vpop.permute.xlu0 %1797
  %v1800 = vmul.f32 %v1793, %v1798
  %1802 = vrot.lane.b32.xlu0 %v1800, 32
  %v1803 = vpop.permute.xlu0 %1802
  %v1805 = vadd.f32 %v1795, %v1803
  %v1806 = vtanh.pop %v1805
  %1808 = vrot.lane.b32.xlu0 %v1806, 64
  %v1809 = vpop.permute.xlu0 %1808
  %v1811 = vmul.f32 %v1793, %v1809
  %1813 = vrot.lane.b32.xlu0 %v1811, 32
  %v1814 = vpop.permute.xlu0 %1813
  %1816 = vst.msk [vmem:[#allocation3 + $0x28] sm:$0xff] %vm216, %v1814
  %v1817 = vld [vmem:[#allocation2 + $0x30] sm:$0xff]
  %v1818 = vsel %vm216, %v1814, 0
  %1820 = vmatprep.subr.mxu0 0.0
  %1821 = vmatpush1.msra.mxu0 %v1197
  %1822 = vmatprep.subr.mxu0 0.0
  %1823 = vmatpush1.msra.mxu0 %v1198
  %1824 = vmatprep.subr.mxu0 0.0
  %1825 = vmatpush1.msra.mxu0 %v1199
  %1826 = vmatprep.subr.mxu0 0.0
  %1827 = vmatpush1.msra.mxu0 %v1200
  %1828 = vmatprep.subr.mxu0 0.0
  %1829 = vmatpush1.msra.mxu0 0.0
  %1830 = vmatprep.subr.mxu0 0.0
  %1831 = vmatpush1.msra.mxu0 0.0
  %1832 = vmatprep.subr.mxu0 0.0
  %1833 = vmatpush1.msra.mxu0 0.0
  %1834 = vmatprep.subr.mxu0 0.0
  %1835 = vmatpush1.msra.mxu0 0.0
  %1836 = vmatprep.subr.mxu0 0.0
  %1837 = vmatpush1.msra.mxu0 0.0
  %1838 = vmatprep.subr.mxu0 0.0
  %1839 = vmatpush1.msra.mxu0 0.0
  %1840 = vmatprep.subr.mxu0 0.0
  %1841 = vmatpush1.msra.mxu0 0.0
  %1842 = vmatprep.subr.mxu0 0.0
  %1843 = vmatpush1.msra.mxu0 0.0
  %1844 = vmatprep.subr.mxu0 0.0
  %1845 = vmatpush1.msra.mxu0 0.0
  %1846 = vmatprep.subr.mxu0 0.0
  %1847 = vmatpush1.msra.mxu0 0.0
  %1848 = vmatprep.subr.mxu0 0.0
  %1849 = vmatpush1.msra.mxu0 0.0
  %1850 = vmatprep.subr.mxu0 0.0
  %1851 = vmatpush1.msra.mxu0 0.0
  %1852 = vmatprep.subr.mxu0 0.0
  %1853 = vmatpush1.msra.mxu0 0.0
  %1854 = vmatprep.subr.mxu0 0.0
  %1855 = vmatpush1.msra.mxu0 0.0
  %1856 = vmatprep.subr.mxu0 0.0
  %1857 = vmatpush1.msra.mxu0 0.0
  %1858 = vmatprep.subr.mxu0 0.0
  %1859 = vmatpush1.msra.mxu0 0.0
  %1860 = vmatprep.subr.mxu0 0.0
  %1861 = vmatpush1.msra.mxu0 0.0
  %1862 = vmatprep.subr.mxu0 0.0
  %1863 = vmatpush1.msra.mxu0 0.0
  %1864 = vmatprep.subr.mxu0 0.0
  %1865 = vmatpush1.msra.mxu0 0.0
  %1866 = vmatprep.subr.mxu0 0.0
  %1867 = vmatpush1.msra.mxu0 0.0
  %1868 = vmatprep.subr.mxu0 0.0
  %1869 = vmatpush1.msra.mxu0 0.0
  %1870 = vmatprep.subr.mxu0 0.0
  %1871 = vmatpush1.msra.mxu0 0.0
  %1872 = vmatprep.subr.mxu0 0.0
  %1873 = vmatpush1.msra.mxu0 0.0
  %1874 = vmatprep.subr.mxu0 0.0
  %1875 = vmatpush1.msra.mxu0 0.0
  %1876 = vmatprep.subr.mxu0 0.0
  %1877 = vmatpush1.msra.mxu0 0.0
  %1878 = vmatprep.subr.mxu0 0.0
  %1879 = vmatpush1.msra.mxu0 0.0
  %1880 = vmatprep.subr.mxu0 0.0
  %1881 = vmatpush1.msra.mxu0 0.0
  %1882 = vmatprep.subr.mxu0 0.0
  %1883 = vmatpush1.msra.mxu0 0.0
  %1884 = vmatprep.mubr.f32.mxu0 0.0
  %1885 = vmatmul.mubr.f32.gmra.mrb[0].mxu0 %v1818
  %v1886 = vpop.f32.mrb[0].mxu0
  %v1887 = vadd.f32 0.0, %v1886
  %v1888 = vpop.f32.mrb[0].mxu0
  %1889 = vdwg.mxu0
  %v1890 = vadd.f32 %v1817, %v1887
  %v1891 = vxor.u32 %v1890, 2147483648
  %v1892 = vmul.f32 %v1891, 1.442695
  %v1893 = vpow.pop %v1892
  %v1894 = vadd.f32 %v1893, 1.0
  %v1895 = vrcp.pop %v1894
  %v1896 = vmul.f32 1.0, %v1895
  %v1897 = vtanh.pop %v1890
  %v1898 = vmul.f32 %v1896, %v1805
  %1900 = vrot.lane.b32.xlu0 %v1897, 64
  %v1901 = vpop.permute.xlu0 %1900
  %v1903 = vmul.f32 %v1896, %v1901
  %1905 = vrot.lane.b32.xlu0 %v1903, 32
  %v1906 = vpop.permute.xlu0 %1905
  %v1908 = vadd.f32 %v1898, %v1906
  %v1909 = vtanh.pop %v1908
  %1911 = vrot.lane.b32.xlu0 %v1909, 64
  %v1912 = vpop.permute.xlu0 %1911
  %v1914 = vmul.f32 %v1896, %v1912
  %1916 = vrot.lane.b32.xlu0 %v1914, 32
  %v1917 = vpop.permute.xlu0 %1916
  %1919 = vst.msk [vmem:[#allocation3 + $0x30] sm:$0xff] %vm216, %v1917
  %v1920 = vld [vmem:[#allocation2 + $0x38] sm:$0xff]
  %v1921 = vsel %vm216, %v1917, 0
  %1923 = vmatprep.subr.mxu0 0.0
  %1924 = vmatpush1.msra.mxu0 %v1197
  %1925 = vmatprep.subr.mxu0 0.0
  %1926 = vmatpush1.msra.mxu0 %v1198
  %1927 = vmatprep.subr.mxu0 0.0
  %1928 = vmatpush1.msra.mxu0 %v1199
  %1929 = vmatprep.subr.mxu0 0.0
  %1930 = vmatpush1.msra.mxu0 %v1200
  %1931 = vmatprep.subr.mxu0 0.0
  %1932 = vmatpush1.msra.mxu0 0.0
  %1933 = vmatprep.subr.mxu0 0.0
  %1934 = vmatpush1.msra.mxu0 0.0
  %1935 = vmatprep.subr.mxu0 0.0
  %1936 = vmatpush1.msra.mxu0 0.0
  %1937 = vmatprep.subr.mxu0 0.0
  %1938 = vmatpush1.msra.mxu0 0.0
  %1939 = vmatprep.subr.mxu0 0.0
  %1940 = vmatpush1.msra.mxu0 0.0
  %1941 = vmatprep.subr.mxu0 0.0
  %1942 = vmatpush1.msra.mxu0 0.0
  %1943 = vmatprep.subr.mxu0 0.0
  %1944 = vmatpush1.msra.mxu0 0.0
  %1945 = vmatprep.subr.mxu0 0.0
  %1946 = vmatpush1.msra.mxu0 0.0
  %1947 = vmatprep.subr.mxu0 0.0
  %1948 = vmatpush1.msra.mxu0 0.0
  %1949 = vmatprep.subr.mxu0 0.0
  %1950 = vmatpush1.msra.mxu0 0.0
  %1951 = vmatprep.subr.mxu0 0.0
  %1952 = vmatpush1.msra.mxu0 0.0
  %1953 = vmatprep.subr.mxu0 0.0
  %1954 = vmatpush1.msra.mxu0 0.0
  %1955 = vmatprep.subr.mxu0 0.0
  %1956 = vmatpush1.msra.mxu0 0.0
  %1957 = vmatprep.subr.mxu0 0.0
  %1958 = vmatpush1.msra.mxu0 0.0
  %1959 = vmatprep.subr.mxu0 0.0
  %1960 = vmatpush1.msra.mxu0 0.0
  %1961 = vmatprep.subr.mxu0 0.0
  %1962 = vmatpush1.msra.mxu0 0.0
  %1963 = vmatprep.subr.mxu0 0.0
  %1964 = vmatpush1.msra.mxu0 0.0
  %1965 = vmatprep.subr.mxu0 0.0
  %1966 = vmatpush1.msra.mxu0 0.0
  %1967 = vmatprep.subr.mxu0 0.0
  %1968 = vmatpush1.msra.mxu0 0.0
  %1969 = vmatprep.subr.mxu0 0.0
  %1970 = vmatpush1.msra.mxu0 0.0
  %1971 = vmatprep.subr.mxu0 0.0
  %1972 = vmatpush1.msra.mxu0 0.0
  %1973 = vmatprep.subr.mxu0 0.0
  %1974 = vmatpush1.msra.mxu0 0.0
  %1975 = vmatprep.subr.mxu0 0.0
  %1976 = vmatpush1.msra.mxu0 0.0
  %1977 = vmatprep.subr.mxu0 0.0
  %1978 = vmatpush1.msra.mxu0 0.0
  %1979 = vmatprep.subr.mxu0 0.0
  %1980 = vmatpush1.msra.mxu0 0.0
  %1981 = vmatprep.subr.mxu0 0.0
  %1982 = vmatpush1.msra.mxu0 0.0
  %1983 = vmatprep.subr.mxu0 0.0
  %1984 = vmatpush1.msra.mxu0 0.0
  %1985 = vmatprep.subr.mxu0 0.0
  %1986 = vmatpush1.msra.mxu0 0.0
  %1987 = vmatprep.mubr.f32.mxu0 0.0
  %1988 = vmatmul.mubr.f32.gmra.mrb[0].mxu0 %v1921
  %v1989 = vpop.f32.mrb[0].mxu0
  %v1990 = vadd.f32 0.0, %v1989
  %v1991 = vpop.f32.mrb[0].mxu0
  %1992 = vdwg.mxu0
  %v1993 = vadd.f32 %v1920, %v1990
  %v1994 = vxor.u32 %v1993, 2147483648
  %v1995 = vmul.f32 %v1994, 1.442695
  %v1996 = vpow.pop %v1995
  %v1997 = vadd.f32 %v1996, 1.0
  %v1998 = vrcp.pop %v1997
  %v1999 = vmul.f32 1.0, %v1998
  %v2000 = vtanh.pop %v1993
  %v2001 = vmul.f32 %v1999, %v1908
  %2003 = vrot.lane.b32.xlu0 %v2000, 64
  %v2004 = vpop.permute.xlu0 %2003
  %v2006 = vmul.f32 %v1999, %v2004
  %2008 = vrot.lane.b32.xlu0 %v2006, 32
  %v2009 = vpop.permute.xlu0 %2008
  %v2011 = vadd.f32 %v2001, %v2009
  %v2012 = vtanh.pop %v2011
  %2014 = vrot.lane.b32.xlu0 %v2012, 64
  %v2015 = vpop.permute.xlu0 %2014
  %v2017 = vmul.f32 %v1999, %v2015
  %2019 = vrot.lane.b32.xlu0 %v2017, 32
  %v2020 = vpop.permute.xlu0 %2019
  %2022 = vst.msk [vmem:[#allocation3 + $0x38] sm:$0xff] %vm216, %v2020
  %v2023 = vld [vmem:[%s1] sm:$0xff]
  %v2024 = vld [vmem:[%s1 + $0x8] sm:$0xff]
  %v2025 = vld [vmem:[%s1 + $0x10] sm:$0xff]
  %v2026 = vld [vmem:[%s1 + $0x18] sm:$0xff]
  %v2027 = vld [vmem:[%s1 + $0x20] sm:$0xff]
  %v2028 = vld [vmem:[%s1 + $0x28] sm:$0xff]
  %v2029 = vld [vmem:[%s1 + $0x30] sm:$0xff]
  %v2030 = vld [vmem:[%s1 + $0x38] sm:$0xff]
  %v2031 = vld [vmem:[%s8] sm:$0xf]
  %v2032 = vld [vmem:[%s10] sm:$0x1]
  %v2034 = vlaneseq
  %v2035 = vshrl.u32 %v2034, 7
  %v2036 = vsub.s32 0, %v2035
  %v2037 = vrot.slane %v2032, %v2036
  %vm2039 = vcmask 31744
  %v2041 = vsel %vm2039, %v2023, 0
  %v2044 = vsel %vm2039, %v2024, 0
  %v2047 = vsel %vm2039, %v2025, 0
  %v2050 = vsel %vm2039, %v2026, 0
  %v2053 = vsel %vm2039, %v2027, 0
  %v2056 = vsel %vm2039, %v2028, 0
  %v2059 = vsel %vm2039, %v2029, 0
  %v2062 = vsel %vm2039, %v2030, 0
  %vm2064 = vcmask 1043456
  %v2066 = vsel %vm2064, %v2031, 0
  %2068 = vmatprep.subr.mxu0 0.0
  %2069 = vmatpush1.msra.mxu0 %v2066
  %2070 = vmatprep.subr.mxu0 0.0
  %2071 = vmatpush1.msra.mxu0 0.0
  %2072 = vmatprep.subr.mxu0 0.0
  %2073 = vmatpush1.msra.mxu0 0.0
  %2074 = vmatprep.subr.mxu0 0.0
  %2075 = vmatpush1.msra.mxu0 0.0
  %2076 = vmatprep.subr.mxu0 0.0
  %2077 = vmatpush1.msra.mxu0 0.0
  %2078 = vmatprep.subr.mxu0 0.0
  %2079 = vmatpush1.msra.mxu0 0.0
  %2080 = vmatprep.subr.mxu0 0.0
  %2081 = vmatpush1.msra.mxu0 0.0
  %2082 = vmatprep.subr.mxu0 0.0
  %2083 = vmatpush1.msra.mxu0 0.0
  %2084 = vmatprep.subr.mxu0 0.0
  %2085 = vmatpush1.msra.mxu0 0.0
  %2086 = vmatprep.subr.mxu0 0.0
  %2087 = vmatpush1.msra.mxu0 0.0
  %2088 = vmatprep.subr.mxu0 0.0
  %2089 = vmatpush1.msra.mxu0 0.0
  %2090 = vmatprep.subr.mxu0 0.0
  %2091 = vmatpush1.msra.mxu0 0.0
  %2092 = vmatprep.subr.mxu0 0.0
  %2093 = vmatpush1.msra.mxu0 0.0
  %2094 = vmatprep.subr.mxu0 0.0
  %2095 = vmatpush1.msra.mxu0 0.0
  %2096 = vmatprep.subr.mxu0 0.0
  %2097 = vmatpush1.msra.mxu0 0.0
  %2098 = vmatprep.subr.mxu0 0.0
  %2099 = vmatpush1.msra.mxu0 0.0
  %2100 = vmatprep.subr.mxu0 0.0
  %2101 = vmatpush1.msra.mxu0 0.0
  %2102 = vmatprep.subr.mxu0 0.0
  %2103 = vmatpush1.msra.mxu0 0.0
  %2104 = vmatprep.subr.mxu0 0.0
  %2105 = vmatpush1.msra.mxu0 0.0
  %2106 = vmatprep.subr.mxu0 0.0
  %2107 = vmatpush1.msra.mxu0 0.0
  %2108 = vmatprep.subr.mxu0 0.0
  %2109 = vmatpush1.msra.mxu0 0.0
  %2110 = vmatprep.subr.mxu0 0.0
  %2111 = vmatpush1.msra.mxu0 0.0
  %2112 = vmatprep.subr.mxu0 0.0
  %2113 = vmatpush1.msra.mxu0 0.0
  %2114 = vmatprep.subr.mxu0 0.0
  %2115 = vmatpush1.msra.mxu0 0.0
  %2116 = vmatprep.subr.mxu0 0.0
  %2117 = vmatpush1.msra.mxu0 0.0
  %2118 = vmatprep.subr.mxu0 0.0
  %2119 = vmatpush1.msra.mxu0 0.0
  %2120 = vmatprep.subr.mxu0 0.0
  %2121 = vmatpush1.msra.mxu0 0.0
  %2122 = vmatprep.subr.mxu0 0.0
  %2123 = vmatpush1.msra.mxu0 0.0
  %2124 = vmatprep.subr.mxu0 0.0
  %2125 = vmatpush1.msra.mxu0 0.0
  %2126 = vmatprep.subr.mxu0 0.0
  %2127 = vmatpush1.msra.mxu0 0.0
  %2128 = vmatprep.subr.mxu0 0.0
  %2129 = vmatpush1.msra.mxu0 0.0
  %2130 = vmatprep.subr.mxu0 0.0
  %2131 = vmatpush1.msra.mxu0 0.0
  %2132 = vmatprep.mubr.f32.mxu0 0.0
  %2133 = vmatmul.mubr.f32.gmra.mrb[0].mxu0 %v2041
  %v2134 = vpop.f32.mrb[0].mxu0
  %v2135 = vadd.f32 %v2037, %v2134
  %v2136 = vpop.f32.mrb[0].mxu0
  %2137 = vmatprep.mubr.f32.mxu0 0.0
  %2138 = vmatmul.mubr.f32.gmra.mrb[0].mxu0 %v2044
  %v2139 = vpop.f32.mrb[0].mxu0
  %v2140 = vadd.f32 %v2037, %v2139
  %v2141 = vpop.f32.mrb[0].mxu0
  %2142 = vmatprep.mubr.f32.mxu0 0.0
  %2143 = vmatmul.mubr.f32.gmra.mrb[0].mxu0 %v2047
  %v2144 = vpop.f32.mrb[0].mxu0
  %v2145 = vadd.f32 %v2037, %v2144
  %v2146 = vpop.f32.mrb[0].mxu0
  %2147 = vmatprep.mubr.f32.mxu0 0.0
  %2148 = vmatmul.mubr.f32.gmra.mrb[0].mxu0 %v2050
  %v2149 = vpop.f32.mrb[0].mxu0
  %v2150 = vadd.f32 %v2037, %v2149
  %v2151 = vpop.f32.mrb[0].mxu0
  %2152 = vmatprep.mubr.f32.mxu0 0.0
  %2153 = vmatmul.mubr.f32.gmra.mrb[0].mxu0 %v2053
  %v2154 = vpop.f32.mrb[0].mxu0
  %v2155 = vadd.f32 %v2037, %v2154
  %v2156 = vpop.f32.mrb[0].mxu0
  %2157 = vmatprep.mubr.f32.mxu0 0.0
  %2158 = vmatmul.mubr.f32.gmra.mrb[0].mxu0 %v2056
  %v2159 = vpop.f32.mrb[0].mxu0
  %v2160 = vadd.f32 %v2037, %v2159
  %v2161 = vpop.f32.mrb[0].mxu0
  %2162 = vmatprep.mubr.f32.mxu0 0.0
  %2163 = vmatmul.mubr.f32.gmra.mrb[0].mxu0 %v2059
  %v2164 = vpop.f32.mrb[0].mxu0
  %v2165 = vadd.f32 %v2037, %v2164
  %v2166 = vpop.f32.mrb[0].mxu0
  %2167 = vmatprep.mubr.f32.mxu0 0.0
  %2168 = vmatmul.mubr.f32.gmra.mrb[0].mxu0 %v2062
  %v2169 = vpop.f32.mrb[0].mxu0
  %v2170 = vadd.f32 %v2037, %v2169
  %v2171 = vpop.f32.mrb[0].mxu0
  %2172 = vdwg.mxu0
  %2173 = vst [vmem:[#allocation2] sm:$0xff] %v2135
  %2174 = vst [vmem:[#allocation2 + $0x8] sm:$0xff] %v2140
  %2175 = vst [vmem:[#allocation2 + $0x10] sm:$0xff] %v2145
  %2176 = vst [vmem:[#allocation2 + $0x18] sm:$0xff] %v2150
  %2177 = vst [vmem:[#allocation2 + $0x20] sm:$0xff] %v2155
  %2178 = vst [vmem:[#allocation2 + $0x28] sm:$0xff] %v2160
  %2179 = vst [vmem:[#allocation2 + $0x30] sm:$0xff] %v2165
  %2180 = vst [vmem:[#allocation2 + $0x38] sm:$0xff] %v2170
  %v2181 = vld [vmem:[%s9] sm:$0xff]
  %v2182 = vld [vmem:[%s9 + $0x8] sm:$0xff]
  %v2183 = vld [vmem:[%s9 + $0x10] sm:$0xff]
  %v2184 = vld [vmem:[%s9 + $0x18] sm:$0xff]
  %v2185 = vld [vmem:[#allocation2] sm:$0xff]
  %v2186 = vsel %vm216, %v1038, 0
  %2188 = vmatprep.subr.mxu0 0.0
  %2189 = vmatpush1.msra.mxu0 %v2181
  %2190 = vmatprep.subr.mxu0 0.0
  %2191 = vmatpush1.msra.mxu0 %v2182
  %2192 = vmatprep.subr.mxu0 0.0
  %2193 = vmatpush1.msra.mxu0 %v2183
  %2194 = vmatprep.subr.mxu0 0.0
  %2195 = vmatpush1.msra.mxu0 %v2184
  %2196 = vmatprep.subr.mxu0 0.0
  %2197 = vmatpush1.msra.mxu0 0.0
  %2198 = vmatprep.subr.mxu0 0.0
  %2199 = vmatpush1.msra.mxu0 0.0
  %2200 = vmatprep.subr.mxu0 0.0
  %2201 = vmatpush1.msra.mxu0 0.0
  %2202 = vmatprep.subr.mxu0 0.0
  %2203 = vmatpush1.msra.mxu0 0.0
  %2204 = vmatprep.subr.mxu0 0.0
  %2205 = vmatpush1.msra.mxu0 0.0
  %2206 = vmatprep.subr.mxu0 0.0
  %2207 = vmatpush1.msra.mxu0 0.0
  %2208 = vmatprep.subr.mxu0 0.0
  %2209 = vmatpush1.msra.mxu0 0.0
  %2210 = vmatprep.subr.mxu0 0.0
  %2211 = vmatpush1.msra.mxu0 0.0
  %2212 = vmatprep.subr.mxu0 0.0
  %2213 = vmatpush1.msra.mxu0 0.0
  %2214 = vmatprep.subr.mxu0 0.0
  %2215 = vmatpush1.msra.mxu0 0.0
  %2216 = vmatprep.subr.mxu0 0.0
  %2217 = vmatpush1.msra.mxu0 0.0
  %2218 = vmatprep.subr.mxu0 0.0
  %2219 = vmatpush1.msra.mxu0 0.0
  %2220 = vmatprep.subr.mxu0 0.0
  %2221 = vmatpush1.msra.mxu0 0.0
  %2222 = vmatprep.subr.mxu0 0.0
  %2223 = vmatpush1.msra.mxu0 0.0
  %2224 = vmatprep.subr.mxu0 0.0
  %2225 = vmatpush1.msra.mxu0 0.0
  %2226 = vmatprep.subr.mxu0 0.0
  %2227 = vmatpush1.msra.mxu0 0.0
  %2228 = vmatprep.subr.mxu0 0.0
  %2229 = vmatpush1.msra.mxu0 0.0
  %2230 = vmatprep.subr.mxu0 0.0
  %2231 = vmatpush1.msra.mxu0 0.0
  %2232 = vmatprep.subr.mxu0 0.0
  %2233 = vmatpush1.msra.mxu0 0.0
  %2234 = vmatprep.subr.mxu0 0.0
  %2235 = vmatpush1.msra.mxu0 0.0
  %2236 = vmatprep.subr.mxu0 0.0
  %2237 = vmatpush1.msra.mxu0 0.0
  %2238 = vmatprep.subr.mxu0 0.0
  %2239 = vmatpush1.msra.mxu0 0.0
  %2240 = vmatprep.subr.mxu0 0.0
  %2241 = vmatpush1.msra.mxu0 0.0
  %2242 = vmatprep.subr.mxu0 0.0
  %2243 = vmatpush1.msra.mxu0 0.0
  %2244 = vmatprep.subr.mxu0 0.0
  %2245 = vmatpush1.msra.mxu0 0.0
  %2246 = vmatprep.subr.mxu0 0.0
  %2247 = vmatpush1.msra.mxu0 0.0
  %2248 = vmatprep.subr.mxu0 0.0
  %2249 = vmatpush1.msra.mxu0 0.0
  %2250 = vmatprep.subr.mxu0 0.0
  %2251 = vmatpush1.msra.mxu0 0.0
  %2252 = vmatprep.mubr.f32.mxu0 0.0
  %2253 = vmatmul.mubr.f32.gmra.mrb[0].mxu0 %v2186
  %v2254 = vpop.f32.mrb[0].mxu0
  %v2255 = vadd.f32 0.0, %v2254
  %v2256 = vpop.f32.mrb[0].mxu0
  %2257 = vdwg.mxu0
  %v2258 = vadd.f32 %v2185, %v2255
  %v2259 = vxor.u32 %v2258, 2147483648
  %v2260 = vmul.f32 %v2259, 1.442695
  %v2261 = vpow.pop %v2260
  %v2262 = vadd.f32 %v2261, 1.0
  %v2263 = vrcp.pop %v2262
  %v2264 = vmul.f32 1.0, %v2263
  %v2265 = vtanh.pop %v2258
  %v2266 = vmul.f32 %v2264, %v1029
  %2268 = vrot.lane.b32.xlu0 %v2265, 64
  %v2269 = vpop.permute.xlu0 %2268
  %v2271 = vmul.f32 %v2264, %v2269
  %2273 = vrot.lane.b32.xlu0 %v2271, 32
  %v2274 = vpop.permute.xlu0 %2273
  %v2276 = vadd.f32 %v2266, %v2274
  %v2277 = vtanh.pop %v2276
  %2279 = vrot.lane.b32.xlu0 %v2277, 64
  %v2280 = vpop.permute.xlu0 %2279
  %v2282 = vmul.f32 %v2264, %v2280
  %2284 = vrot.lane.b32.xlu0 %v2282, 32
  %v2285 = vpop.permute.xlu0 %2284
  %2287 = vst.msk [vmem:[#allocation3] sm:$0xff] %vm216, %v2285
  %v2288 = vld [vmem:[#allocation2 + $0x8] sm:$0xff]
  %v2289 = vsel %vm216, %v2285, 0
  %2291 = vmatprep.subr.mxu0 0.0
  %2292 = vmatpush1.msra.mxu0 %v2181
  %2293 = vmatprep.subr.mxu0 0.0
  %2294 = vmatpush1.msra.mxu0 %v2182
  %2295 = vmatprep.subr.mxu0 0.0
  %2296 = vmatpush1.msra.mxu0 %v2183
  %2297 = vmatprep.subr.mxu0 0.0
  %2298 = vmatpush1.msra.mxu0 %v2184
  %2299 = vmatprep.subr.mxu0 0.0
  %2300 = vmatpush1.msra.mxu0 0.0
  %2301 = vmatprep.subr.mxu0 0.0
  %2302 = vmatpush1.msra.mxu0 0.0
  %2303 = vmatprep.subr.mxu0 0.0
  %2304 = vmatpush1.msra.mxu0 0.0
  %2305 = vmatprep.subr.mxu0 0.0
  %2306 = vmatpush1.msra.mxu0 0.0
  %2307 = vmatprep.subr.mxu0 0.0
  %2308 = vmatpush1.msra.mxu0 0.0
  %2309 = vmatprep.subr.mxu0 0.0
  %2310 = vmatpush1.msra.mxu0 0.0
  %2311 = vmatprep.subr.mxu0 0.0
  %2312 = vmatpush1.msra.mxu0 0.0
  %2313 = vmatprep.subr.mxu0 0.0
  %2314 = vmatpush1.msra.mxu0 0.0
  %2315 = vmatprep.subr.mxu0 0.0
  %2316 = vmatpush1.msra.mxu0 0.0
  %2317 = vmatprep.subr.mxu0 0.0
  %2318 = vmatpush1.msra.mxu0 0.0
  %2319 = vmatprep.subr.mxu0 0.0
  %2320 = vmatpush1.msra.mxu0 0.0
  %2321 = vmatprep.subr.mxu0 0.0
  %2322 = vmatpush1.msra.mxu0 0.0
  %2323 = vmatprep.subr.mxu0 0.0
  %2324 = vmatpush1.msra.mxu0 0.0
  %2325 = vmatprep.subr.mxu0 0.0
  %2326 = vmatpush1.msra.mxu0 0.0
  %2327 = vmatprep.subr.mxu0 0.0
  %2328 = vmatpush1.msra.mxu0 0.0
  %2329 = vmatprep.subr.mxu0 0.0
  %2330 = vmatpush1.msra.mxu0 0.0
  %2331 = vmatprep.subr.mxu0 0.0
  %2332 = vmatpush1.msra.mxu0 0.0
  %2333 = vmatprep.subr.mxu0 0.0
  %2334 = vmatpush1.msra.mxu0 0.0
  %2335 = vmatprep.subr.mxu0 0.0
  %2336 = vmatpush1.msra.mxu0 0.0
  %2337 = vmatprep.subr.mxu0 0.0
  %2338 = vmatpush1.msra.mxu0 0.0
  %2339 = vmatprep.subr.mxu0 0.0
  %2340 = vmatpush1.msra.mxu0 0.0
  %2341 = vmatprep.subr.mxu0 0.0
  %2342 = vmatpush1.msra.mxu0 0.0
  %2343 = vmatprep.subr.mxu0 0.0
  %2344 = vmatpush1.msra.mxu0 0.0
  %2345 = vmatprep.subr.mxu0 0.0
  %2346 = vmatpush1.msra.mxu0 0.0
  %2347 = vmatprep.subr.mxu0 0.0
  %2348 = vmatpush1.msra.mxu0 0.0
  %2349 = vmatprep.subr.mxu0 0.0
  %2350 = vmatpush1.msra.mxu0 0.0
  %2351 = vmatprep.subr.mxu0 0.0
  %2352 = vmatpush1.msra.mxu0 0.0
  %2353 = vmatprep.subr.mxu0 0.0
  %2354 = vmatpush1.msra.mxu0 0.0
  %2355 = vmatprep.mubr.f32.mxu0 0.0
  %2356 = vmatmul.mubr.f32.gmra.mrb[0].mxu0 %v2289
  %v2357 = vpop.f32.mrb[0].mxu0
  %v2358 = vadd.f32 0.0, %v2357
  %v2359 = vpop.f32.mrb[0].mxu0
  %2360 = vdwg.mxu0
  %v2361 = vadd.f32 %v2288, %v2358
  %v2362 = vxor.u32 %v2361, 2147483648
  %v2363 = vmul.f32 %v2362, 1.442695
  %v2364 = vpow.pop %v2363
  %v2365 = vadd.f32 %v2364, 1.0
  %v2366 = vrcp.pop %v2365
  %v2367 = vmul.f32 1.0, %v2366
  %v2368 = vtanh.pop %v2361
  %v2369 = vmul.f32 %v2367, %v2276
  %2371 = vrot.lane.b32.xlu0 %v2368, 64
  %v2372 = vpop.permute.xlu0 %2371
  %v2374 = vmul.f32 %v2367, %v2372
  %2376 = vrot.lane.b32.xlu0 %v2374, 32
  %v2377 = vpop.permute.xlu0 %2376
  %v2379 = vadd.f32 %v2369, %v2377
  %v2380 = vtanh.pop %v2379
  %2382 = vrot.lane.b32.xlu0 %v2380, 64
  %v2383 = vpop.permute.xlu0 %2382
  %v2385 = vmul.f32 %v2367, %v2383
  %2387 = vrot.lane.b32.xlu0 %v2385, 32
  %v2388 = vpop.permute.xlu0 %2387
  %2390 = vst.msk [vmem:[#allocation3 + $0x8] sm:$0xff] %vm216, %v2388
  %v2391 = vld [vmem:[#allocation2 + $0x10] sm:$0xff]
  %v2392 = vsel %vm216, %v2388, 0
  %2394 = vmatprep.subr.mxu0 0.0
  %2395 = vmatpush1.msra.mxu0 %v2181
  %2396 = vmatprep.subr.mxu0 0.0
  %2397 = vmatpush1.msra.mxu0 %v2182
  %2398 = vmatprep.subr.mxu0 0.0
  %2399 = vmatpush1.msra.mxu0 %v2183
  %2400 = vmatprep.subr.mxu0 0.0
  %2401 = vmatpush1.msra.mxu0 %v2184
  %2402 = vmatprep.subr.mxu0 0.0
  %2403 = vmatpush1.msra.mxu0 0.0
  %2404 = vmatprep.subr.mxu0 0.0
  %2405 = vmatpush1.msra.mxu0 0.0
  %2406 = vmatprep.subr.mxu0 0.0
  %2407 = vmatpush1.msra.mxu0 0.0
  %2408 = vmatprep.subr.mxu0 0.0
  %2409 = vmatpush1.msra.mxu0 0.0
  %2410 = vmatprep.subr.mxu0 0.0
  %2411 = vmatpush1.msra.mxu0 0.0
  %2412 = vmatprep.subr.mxu0 0.0
  %2413 = vmatpush1.msra.mxu0 0.0
  %2414 = vmatprep.subr.mxu0 0.0
  %2415 = vmatpush1.msra.mxu0 0.0
  %2416 = vmatprep.subr.mxu0 0.0
  %2417 = vmatpush1.msra.mxu0 0.0
  %2418 = vmatprep.subr.mxu0 0.0
  %2419 = vmatpush1.msra.mxu0 0.0
  %2420 = vmatprep.subr.mxu0 0.0
  %2421 = vmatpush1.msra.mxu0 0.0
  %2422 = vmatprep.subr.mxu0 0.0
  %2423 = vmatpush1.msra.mxu0 0.0
  %2424 = vmatprep.subr.mxu0 0.0
  %2425 = vmatpush1.msra.mxu0 0.0
  %2426 = vmatprep.subr.mxu0 0.0
  %2427 = vmatpush1.msra.mxu0 0.0
  %2428 = vmatprep.subr.mxu0 0.0
  %2429 = vmatpush1.msra.mxu0 0.0
  %2430 = vmatprep.subr.mxu0 0.0
  %2431 = vmatpush1.msra.mxu0 0.0
  %2432 = vmatprep.subr.mxu0 0.0
  %2433 = vmatpush1.msra.mxu0 0.0
  %2434 = vmatprep.subr.mxu0 0.0
  %2435 = vmatpush1.msra.mxu0 0.0
  %2436 = vmatprep.subr.mxu0 0.0
  %2437 = vmatpush1.msra.mxu0 0.0
  %2438 = vmatprep.subr.mxu0 0.0
  %2439 = vmatpush1.msra.mxu0 0.0
  %2440 = vmatprep.subr.mxu0 0.0
  %2441 = vmatpush1.msra.mxu0 0.0
  %2442 = vmatprep.subr.mxu0 0.0
  %2443 = vmatpush1.msra.mxu0 0.0
  %2444 = vmatprep.subr.mxu0 0.0
  %2445 = vmatpush1.msra.mxu0 0.0
  %2446 = vmatprep.subr.mxu0 0.0
  %2447 = vmatpush1.msra.mxu0 0.0
  %2448 = vmatprep.subr.mxu0 0.0
  %2449 = vmatpush1.msra.mxu0 0.0
  %2450 = vmatprep.subr.mxu0 0.0
  %2451 = vmatpush1.msra.mxu0 0.0
  %2452 = vmatprep.subr.mxu0 0.0
  %2453 = vmatpush1.msra.mxu0 0.0
  %2454 = vmatprep.subr.mxu0 0.0
  %2455 = vmatpush1.msra.mxu0 0.0
  %2456 = vmatprep.subr.mxu0 0.0
  %2457 = vmatpush1.msra.mxu0 0.0
  %2458 = vmatprep.mubr.f32.mxu0 0.0
  %2459 = vmatmul.mubr.f32.gmra.mrb[0].mxu0 %v2392
  %v2460 = vpop.f32.mrb[0].mxu0
  %v2461 = vadd.f32 0.0, %v2460
  %v2462 = vpop.f32.mrb[0].mxu0
  %2463 = vdwg.mxu0
  %v2464 = vadd.f32 %v2391, %v2461
  %v2465 = vxor.u32 %v2464, 2147483648
  %v2466 = vmul.f32 %v2465, 1.442695
  %v2467 = vpow.pop %v2466
  %v2468 = vadd.f32 %v2467, 1.0
  %v2469 = vrcp.pop %v2468
  %v2470 = vmul.f32 1.0, %v2469
  %v2471 = vtanh.pop %v2464
  %v2472 = vmul.f32 %v2470, %v2379
  %2474 = vrot.lane.b32.xlu0 %v2471, 64
  %v2475 = vpop.permute.xlu0 %2474
  %v2477 = vmul.f32 %v2470, %v2475
  %2479 = vrot.lane.b32.xlu0 %v2477, 32
  %v2480 = vpop.permute.xlu0 %2479
  %v2482 = vadd.f32 %v2472, %v2480
  %v2483 = vtanh.pop %v2482
  %2485 = vrot.lane.b32.xlu0 %v2483, 64
  %v2486 = vpop.permute.xlu0 %2485
  %v2488 = vmul.f32 %v2470, %v2486
  %2490 = vrot.lane.b32.xlu0 %v2488, 32
  %v2491 = vpop.permute.xlu0 %2490
  %2493 = vst.msk [vmem:[#allocation3 + $0x10] sm:$0xff] %vm216, %v2491
  %v2494 = vld [vmem:[#allocation2 + $0x18] sm:$0xff]
  %v2495 = vsel %vm216, %v2491, 0
  %2497 = vmatprep.subr.mxu0 0.0
  %2498 = vmatpush1.msra.mxu0 %v2181
  %2499 = vmatprep.subr.mxu0 0.0
  %2500 = vmatpush1.msra.mxu0 %v2182
  %2501 = vmatprep.subr.mxu0 0.0
  %2502 = vmatpush1.msra.mxu0 %v2183
  %2503 = vmatprep.subr.mxu0 0.0
  %2504 = vmatpush1.msra.mxu0 %v2184
  %2505 = vmatprep.subr.mxu0 0.0
  %2506 = vmatpush1.msra.mxu0 0.0
  %2507 = vmatprep.subr.mxu0 0.0
  %2508 = vmatpush1.msra.mxu0 0.0
  %2509 = vmatprep.subr.mxu0 0.0
  %2510 = vmatpush1.msra.mxu0 0.0
  %2511 = vmatprep.subr.mxu0 0.0
  %2512 = vmatpush1.msra.mxu0 0.0
  %2513 = vmatprep.subr.mxu0 0.0
  %2514 = vmatpush1.msra.mxu0 0.0
  %2515 = vmatprep.subr.mxu0 0.0
  %2516 = vmatpush1.msra.mxu0 0.0
  %2517 = vmatprep.subr.mxu0 0.0
  %2518 = vmatpush1.msra.mxu0 0.0
  %2519 = vmatprep.subr.mxu0 0.0
  %2520 = vmatpush1.msra.mxu0 0.0
  %2521 = vmatprep.subr.mxu0 0.0
  %2522 = vmatpush1.msra.mxu0 0.0
  %2523 = vmatprep.subr.mxu0 0.0
  %2524 = vmatpush1.msra.mxu0 0.0
  %2525 = vmatprep.subr.mxu0 0.0
  %2526 = vmatpush1.msra.mxu0 0.0
  %2527 = vmatprep.subr.mxu0 0.0
  %2528 = vmatpush1.msra.mxu0 0.0
  %2529 = vmatprep.subr.mxu0 0.0
  %2530 = vmatpush1.msra.mxu0 0.0
  %2531 = vmatprep.subr.mxu0 0.0
  %2532 = vmatpush1.msra.mxu0 0.0
  %2533 = vmatprep.subr.mxu0 0.0
  %2534 = vmatpush1.msra.mxu0 0.0
  %2535 = vmatprep.subr.mxu0 0.0
  %2536 = vmatpush1.msra.mxu0 0.0
  %2537 = vmatprep.subr.mxu0 0.0
  %2538 = vmatpush1.msra.mxu0 0.0
  %2539 = vmatprep.subr.mxu0 0.0
  %2540 = vmatpush1.msra.mxu0 0.0
  %2541 = vmatprep.subr.mxu0 0.0
  %2542 = vmatpush1.msra.mxu0 0.0
  %2543 = vmatprep.subr.mxu0 0.0
  %2544 = vmatpush1.msra.mxu0 0.0
  %2545 = vmatprep.subr.mxu0 0.0
  %2546 = vmatpush1.msra.mxu0 0.0
  %2547 = vmatprep.subr.mxu0 0.0
  %2548 = vmatpush1.msra.mxu0 0.0
  %2549 = vmatprep.subr.mxu0 0.0
  %2550 = vmatpush1.msra.mxu0 0.0
  %2551 = vmatprep.subr.mxu0 0.0
  %2552 = vmatpush1.msra.mxu0 0.0
  %2553 = vmatprep.subr.mxu0 0.0
  %2554 = vmatpush1.msra.mxu0 0.0
  %2555 = vmatprep.subr.mxu0 0.0
  %2556 = vmatpush1.msra.mxu0 0.0
  %2557 = vmatprep.subr.mxu0 0.0
  %2558 = vmatpush1.msra.mxu0 0.0
  %2559 = vmatprep.subr.mxu0 0.0
  %2560 = vmatpush1.msra.mxu0 0.0
  %2561 = vmatprep.mubr.f32.mxu0 0.0
  %2562 = vmatmul.mubr.f32.gmra.mrb[0].mxu0 %v2495
  %v2563 = vpop.f32.mrb[0].mxu0
  %v2564 = vadd.f32 0.0, %v2563
  %v2565 = vpop.f32.mrb[0].mxu0
  %2566 = vdwg.mxu0
  %v2567 = vadd.f32 %v2494, %v2564
  %v2568 = vxor.u32 %v2567, 2147483648
  %v2569 = vmul.f32 %v2568, 1.442695
  %v2570 = vpow.pop %v2569
  %v2571 = vadd.f32 %v2570, 1.0
  %v2572 = vrcp.pop %v2571
  %v2573 = vmul.f32 1.0, %v2572
  %v2574 = vtanh.pop %v2567
  %v2575 = vmul.f32 %v2573, %v2482
  %2577 = vrot.lane.b32.xlu0 %v2574, 64
  %v2578 = vpop.permute.xlu0 %2577
  %v2580 = vmul.f32 %v2573, %v2578
  %2582 = vrot.lane.b32.xlu0 %v2580, 32
  %v2583 = vpop.permute.xlu0 %2582
  %v2585 = vadd.f32 %v2575, %v2583
  %v2586 = vtanh.pop %v2585
  %2588 = vrot.lane.b32.xlu0 %v2586, 64
  %v2589 = vpop.permute.xlu0 %2588
  %v2591 = vmul.f32 %v2573, %v2589
  %2593 = vrot.lane.b32.xlu0 %v2591, 32
  %v2594 = vpop.permute.xlu0 %2593
  %2596 = vst.msk [vmem:[#allocation3 + $0x18] sm:$0xff] %vm216, %v2594
  %v2597 = vld [vmem:[#allocation2 + $0x20] sm:$0xff]
  %v2598 = vsel %vm216, %v2594, 0
  %2600 = vmatprep.subr.mxu0 0.0
  %2601 = vmatpush1.msra.mxu0 %v2181
  %2602 = vmatprep.subr.mxu0 0.0
  %2603 = vmatpush1.msra.mxu0 %v2182
  %2604 = vmatprep.subr.mxu0 0.0
  %2605 = vmatpush1.msra.mxu0 %v2183
  %2606 = vmatprep.subr.mxu0 0.0
  %2607 = vmatpush1.msra.mxu0 %v2184
  %2608 = vmatprep.subr.mxu0 0.0
  %2609 = vmatpush1.msra.mxu0 0.0
  %2610 = vmatprep.subr.mxu0 0.0
  %2611 = vmatpush1.msra.mxu0 0.0
  %2612 = vmatprep.subr.mxu0 0.0
  %2613 = vmatpush1.msra.mxu0 0.0
  %2614 = vmatprep.subr.mxu0 0.0
  %2615 = vmatpush1.msra.mxu0 0.0
  %2616 = vmatprep.subr.mxu0 0.0
  %2617 = vmatpush1.msra.mxu0 0.0
  %2618 = vmatprep.subr.mxu0 0.0
  %2619 = vmatpush1.msra.mxu0 0.0
  %2620 = vmatprep.subr.mxu0 0.0
  %2621 = vmatpush1.msra.mxu0 0.0
  %2622 = vmatprep.subr.mxu0 0.0
  %2623 = vmatpush1.msra.mxu0 0.0
  %2624 = vmatprep.subr.mxu0 0.0
  %2625 = vmatpush1.msra.mxu0 0.0
  %2626 = vmatprep.subr.mxu0 0.0
  %2627 = vmatpush1.msra.mxu0 0.0
  %2628 = vmatprep.subr.mxu0 0.0
  %2629 = vmatpush1.msra.mxu0 0.0
  %2630 = vmatprep.subr.mxu0 0.0
  %2631 = vmatpush1.msra.mxu0 0.0
  %2632 = vmatprep.subr.mxu0 0.0
  %2633 = vmatpush1.msra.mxu0 0.0
  %2634 = vmatprep.subr.mxu0 0.0
  %2635 = vmatpush1.msra.mxu0 0.0
  %2636 = vmatprep.subr.mxu0 0.0
  %2637 = vmatpush1.msra.mxu0 0.0
  %2638 = vmatprep.subr.mxu0 0.0
  %2639 = vmatpush1.msra.mxu0 0.0
  %2640 = vmatprep.subr.mxu0 0.0
  %2641 = vmatpush1.msra.mxu0 0.0
  %2642 = vmatprep.subr.mxu0 0.0
  %2643 = vmatpush1.msra.mxu0 0.0
  %2644 = vmatprep.subr.mxu0 0.0
  %2645 = vmatpush1.msra.mxu0 0.0
  %2646 = vmatprep.subr.mxu0 0.0
  %2647 = vmatpush1.msra.mxu0 0.0
  %2648 = vmatprep.subr.mxu0 0.0
  %2649 = vmatpush1.msra.mxu0 0.0
  %2650 = vmatprep.subr.mxu0 0.0
  %2651 = vmatpush1.msra.mxu0 0.0
  %2652 = vmatprep.subr.mxu0 0.0
  %2653 = vmatpush1.msra.mxu0 0.0
  %2654 = vmatprep.subr.mxu0 0.0
  %2655 = vmatpush1.msra.mxu0 0.0
  %2656 = vmatprep.subr.mxu0 0.0
  %2657 = vmatpush1.msra.mxu0 0.0
  %2658 = vmatprep.subr.mxu0 0.0
  %2659 = vmatpush1.msra.mxu0 0.0
  %2660 = vmatprep.subr.mxu0 0.0
  %2661 = vmatpush1.msra.mxu0 0.0
  %2662 = vmatprep.subr.mxu0 0.0
  %2663 = vmatpush1.msra.mxu0 0.0
  %2664 = vmatprep.mubr.f32.mxu0 0.0
  %2665 = vmatmul.mubr.f32.gmra.mrb[0].mxu0 %v2598
  %v2666 = vpop.f32.mrb[0].mxu0
  %v2667 = vadd.f32 0.0, %v2666
  %v2668 = vpop.f32.mrb[0].mxu0
  %2669 = vdwg.mxu0
  %v2670 = vadd.f32 %v2597, %v2667
  %v2671 = vxor.u32 %v2670, 2147483648
  %v2672 = vmul.f32 %v2671, 1.442695
  %v2673 = vpow.pop %v2672
  %v2674 = vadd.f32 %v2673, 1.0
  %v2675 = vrcp.pop %v2674
  %v2676 = vmul.f32 1.0, %v2675
  %v2677 = vtanh.pop %v2670
  %v2678 = vmul.f32 %v2676, %v2585
  %2680 = vrot.lane.b32.xlu0 %v2677, 64
  %v2681 = vpop.permute.xlu0 %2680
  %v2683 = vmul.f32 %v2676, %v2681
  %2685 = vrot.lane.b32.xlu0 %v2683, 32
  %v2686 = vpop.permute.xlu0 %2685
  %v2688 = vadd.f32 %v2678, %v2686
  %v2689 = vtanh.pop %v2688
  %2691 = vrot.lane.b32.xlu0 %v2689, 64
  %v2692 = vpop.permute.xlu0 %2691
  %v2694 = vmul.f32 %v2676, %v2692
  %2696 = vrot.lane.b32.xlu0 %v2694, 32
  %v2697 = vpop.permute.xlu0 %2696
  %2699 = vst.msk [vmem:[#allocation3 + $0x20] sm:$0xff] %vm216, %v2697
  %v2700 = vld [vmem:[#allocation2 + $0x28] sm:$0xff]
  %v2701 = vsel %vm216, %v2697, 0
  %2703 = vmatprep.subr.mxu0 0.0
  %2704 = vmatpush1.msra.mxu0 %v2181
  %2705 = vmatprep.subr.mxu0 0.0
  %2706 = vmatpush1.msra.mxu0 %v2182
  %2707 = vmatprep.subr.mxu0 0.0
  %2708 = vmatpush1.msra.mxu0 %v2183
  %2709 = vmatprep.subr.mxu0 0.0
  %2710 = vmatpush1.msra.mxu0 %v2184
  %2711 = vmatprep.subr.mxu0 0.0
  %2712 = vmatpush1.msra.mxu0 0.0
  %2713 = vmatprep.subr.mxu0 0.0
  %2714 = vmatpush1.msra.mxu0 0.0
  %2715 = vmatprep.subr.mxu0 0.0
  %2716 = vmatpush1.msra.mxu0 0.0
  %2717 = vmatprep.subr.mxu0 0.0
  %2718 = vmatpush1.msra.mxu0 0.0
  %2719 = vmatprep.subr.mxu0 0.0
  %2720 = vmatpush1.msra.mxu0 0.0
  %2721 = vmatprep.subr.mxu0 0.0
  %2722 = vmatpush1.msra.mxu0 0.0
  %2723 = vmatprep.subr.mxu0 0.0
  %2724 = vmatpush1.msra.mxu0 0.0
  %2725 = vmatprep.subr.mxu0 0.0
  %2726 = vmatpush1.msra.mxu0 0.0
  %2727 = vmatprep.subr.mxu0 0.0
  %2728 = vmatpush1.msra.mxu0 0.0
  %2729 = vmatprep.subr.mxu0 0.0
  %2730 = vmatpush1.msra.mxu0 0.0
  %2731 = vmatprep.subr.mxu0 0.0
  %2732 = vmatpush1.msra.mxu0 0.0
  %2733 = vmatprep.subr.mxu0 0.0
  %2734 = vmatpush1.msra.mxu0 0.0
  %2735 = vmatprep.subr.mxu0 0.0
  %2736 = vmatpush1.msra.mxu0 0.0
  %2737 = vmatprep.subr.mxu0 0.0
  %2738 = vmatpush1.msra.mxu0 0.0
  %2739 = vmatprep.subr.mxu0 0.0
  %2740 = vmatpush1.msra.mxu0 0.0
  %2741 = vmatprep.subr.mxu0 0.0
  %2742 = vmatpush1.msra.mxu0 0.0
  %2743 = vmatprep.subr.mxu0 0.0
  %2744 = vmatpush1.msra.mxu0 0.0
  %2745 = vmatprep.subr.mxu0 0.0
  %2746 = vmatpush1.msra.mxu0 0.0
  %2747 = vmatprep.subr.mxu0 0.0
  %2748 = vmatpush1.msra.mxu0 0.0
  %2749 = vmatprep.subr.mxu0 0.0
  %2750 = vmatpush1.msra.mxu0 0.0
  %2751 = vmatprep.subr.mxu0 0.0
  %2752 = vmatpush1.msra.mxu0 0.0
  %2753 = vmatprep.subr.mxu0 0.0
  %2754 = vmatpush1.msra.mxu0 0.0
  %2755 = vmatprep.subr.mxu0 0.0
  %2756 = vmatpush1.msra.mxu0 0.0
  %2757 = vmatprep.subr.mxu0 0.0
  %2758 = vmatpush1.msra.mxu0 0.0
  %2759 = vmatprep.subr.mxu0 0.0
  %2760 = vmatpush1.msra.mxu0 0.0
  %2761 = vmatprep.subr.mxu0 0.0
  %2762 = vmatpush1.msra.mxu0 0.0
  %2763 = vmatprep.subr.mxu0 0.0
  %2764 = vmatpush1.msra.mxu0 0.0
  %2765 = vmatprep.subr.mxu0 0.0
  %2766 = vmatpush1.msra.mxu0 0.0
  %2767 = vmatprep.mubr.f32.mxu0 0.0
  %2768 = vmatmul.mubr.f32.gmra.mrb[0].mxu0 %v2701
  %v2769 = vpop.f32.mrb[0].mxu0
  %v2770 = vadd.f32 0.0, %v2769
  %v2771 = vpop.f32.mrb[0].mxu0
  %2772 = vdwg.mxu0
  %v2773 = vadd.f32 %v2700, %v2770
  %v2774 = vxor.u32 %v2773, 2147483648
  %v2775 = vmul.f32 %v2774, 1.442695
  %v2776 = vpow.pop %v2775
  %v2777 = vadd.f32 %v2776, 1.0
  %v2778 = vrcp.pop %v2777
  %v2779 = vmul.f32 1.0, %v2778
  %v2780 = vtanh.pop %v2773
  %v2781 = vmul.f32 %v2779, %v2688
  %2783 = vrot.lane.b32.xlu0 %v2780, 64
  %v2784 = vpop.permute.xlu0 %2783
  %v2786 = vmul.f32 %v2779, %v2784
  %2788 = vrot.lane.b32.xlu0 %v2786, 32
  %v2789 = vpop.permute.xlu0 %2788
  %v2791 = vadd.f32 %v2781, %v2789
  %v2792 = vtanh.pop %v2791
  %2794 = vrot.lane.b32.xlu0 %v2792, 64
  %v2795 = vpop.permute.xlu0 %2794
  %v2797 = vmul.f32 %v2779, %v2795
  %2799 = vrot.lane.b32.xlu0 %v2797, 32
  %v2800 = vpop.permute.xlu0 %2799
  %2802 = vst.msk [vmem:[#allocation3 + $0x28] sm:$0xff] %vm216, %v2800
  %v2803 = vld [vmem:[#allocation2 + $0x30] sm:$0xff]
  %v2804 = vsel %vm216, %v2800, 0
  %2806 = vmatprep.subr.mxu0 0.0
  %2807 = vmatpush1.msra.mxu0 %v2181
  %2808 = vmatprep.subr.mxu0 0.0
  %2809 = vmatpush1.msra.mxu0 %v2182
  %2810 = vmatprep.subr.mxu0 0.0
  %2811 = vmatpush1.msra.mxu0 %v2183
  %2812 = vmatprep.subr.mxu0 0.0
  %2813 = vmatpush1.msra.mxu0 %v2184
  %2814 = vmatprep.subr.mxu0 0.0
  %2815 = vmatpush1.msra.mxu0 0.0
  %2816 = vmatprep.subr.mxu0 0.0
  %2817 = vmatpush1.msra.mxu0 0.0
  %2818 = vmatprep.subr.mxu0 0.0
  %2819 = vmatpush1.msra.mxu0 0.0
  %2820 = vmatprep.subr.mxu0 0.0
  %2821 = vmatpush1.msra.mxu0 0.0
  %2822 = vmatprep.subr.mxu0 0.0
  %2823 = vmatpush1.msra.mxu0 0.0
  %2824 = vmatprep.subr.mxu0 0.0
  %2825 = vmatpush1.msra.mxu0 0.0
  %2826 = vmatprep.subr.mxu0 0.0
  %2827 = vmatpush1.msra.mxu0 0.0
  %2828 = vmatprep.subr.mxu0 0.0
  %2829 = vmatpush1.msra.mxu0 0.0
  %2830 = vmatprep.subr.mxu0 0.0
  %2831 = vmatpush1.msra.mxu0 0.0
  %2832 = vmatprep.subr.mxu0 0.0
  %2833 = vmatpush1.msra.mxu0 0.0
  %2834 = vmatprep.subr.mxu0 0.0
  %2835 = vmatpush1.msra.mxu0 0.0
  %2836 = vmatprep.subr.mxu0 0.0
  %2837 = vmatpush1.msra.mxu0 0.0
  %2838 = vmatprep.subr.mxu0 0.0
  %2839 = vmatpush1.msra.mxu0 0.0
  %2840 = vmatprep.subr.mxu0 0.0
  %2841 = vmatpush1.msra.mxu0 0.0
  %2842 = vmatprep.subr.mxu0 0.0
  %2843 = vmatpush1.msra.mxu0 0.0
  %2844 = vmatprep.subr.mxu0 0.0
  %2845 = vmatpush1.msra.mxu0 0.0
  %2846 = vmatprep.subr.mxu0 0.0
  %2847 = vmatpush1.msra.mxu0 0.0
  %2848 = vmatprep.subr.mxu0 0.0
  %2849 = vmatpush1.msra.mxu0 0.0
  %2850 = vmatprep.subr.mxu0 0.0
  %2851 = vmatpush1.msra.mxu0 0.0
  %2852 = vmatprep.subr.mxu0 0.0
  %2853 = vmatpush1.msra.mxu0 0.0
  %2854 = vmatprep.subr.mxu0 0.0
  %2855 = vmatpush1.msra.mxu0 0.0
  %2856 = vmatprep.subr.mxu0 0.0
  %2857 = vmatpush1.msra.mxu0 0.0
  %2858 = vmatprep.subr.mxu0 0.0
  %2859 = vmatpush1.msra.mxu0 0.0
  %2860 = vmatprep.subr.mxu0 0.0
  %2861 = vmatpush1.msra.mxu0 0.0
  %2862 = vmatprep.subr.mxu0 0.0
  %2863 = vmatpush1.msra.mxu0 0.0
  %2864 = vmatprep.subr.mxu0 0.0
  %2865 = vmatpush1.msra.mxu0 0.0
  %2866 = vmatprep.subr.mxu0 0.0
  %2867 = vmatpush1.msra.mxu0 0.0
  %2868 = vmatprep.subr.mxu0 0.0
  %2869 = vmatpush1.msra.mxu0 0.0
  %2870 = vmatprep.mubr.f32.mxu0 0.0
  %2871 = vmatmul.mubr.f32.gmra.mrb[0].mxu0 %v2804
  %v2872 = vpop.f32.mrb[0].mxu0
  %v2873 = vadd.f32 0.0, %v2872
  %v2874 = vpop.f32.mrb[0].mxu0
  %2875 = vdwg.mxu0
  %v2876 = vadd.f32 %v2803, %v2873
  %v2877 = vxor.u32 %v2876, 2147483648
  %v2878 = vmul.f32 %v2877, 1.442695
  %v2879 = vpow.pop %v2878
  %v2880 = vadd.f32 %v2879, 1.0
  %v2881 = vrcp.pop %v2880
  %v2882 = vmul.f32 1.0, %v2881
  %v2883 = vtanh.pop %v2876
  %v2884 = vmul.f32 %v2882, %v2791
  %2886 = vrot.lane.b32.xlu0 %v2883, 64
  %v2887 = vpop.permute.xlu0 %2886
  %v2889 = vmul.f32 %v2882, %v2887
  %2891 = vrot.lane.b32.xlu0 %v2889, 32
  %v2892 = vpop.permute.xlu0 %2891
  %v2894 = vadd.f32 %v2884, %v2892
  %v2895 = vtanh.pop %v2894
  %2897 = vrot.lane.b32.xlu0 %v2895, 64
  %v2898 = vpop.permute.xlu0 %2897
  %v2900 = vmul.f32 %v2882, %v2898
  %2902 = vrot.lane.b32.xlu0 %v2900, 32
  %v2903 = vpop.permute.xlu0 %2902
  %2905 = vst.msk [vmem:[#allocation3 + $0x30] sm:$0xff] %vm216, %v2903
  %v2906 = vld [vmem:[#allocation2 + $0x38] sm:$0xff]
  %v2907 = vsel %vm216, %v2903, 0
  %2909 = vmatprep.subr.mxu0 0.0
  %2910 = vmatpush1.msra.mxu0 %v2181
  %2911 = vmatprep.subr.mxu0 0.0
  %2912 = vmatpush1.msra.mxu0 %v2182
  %2913 = vmatprep.subr.mxu0 0.0
  %2914 = vmatpush1.msra.mxu0 %v2183
  %2915 = vmatprep.subr.mxu0 0.0
  %2916 = vmatpush1.msra.mxu0 %v2184
  %2917 = vmatprep.subr.mxu0 0.0
  %2918 = vmatpush1.msra.mxu0 0.0
  %2919 = vmatprep.subr.mxu0 0.0
  %2920 = vmatpush1.msra.mxu0 0.0
  %2921 = vmatprep.subr.mxu0 0.0
  %2922 = vmatpush1.msra.mxu0 0.0
  %2923 = vmatprep.subr.mxu0 0.0
  %2924 = vmatpush1.msra.mxu0 0.0
  %2925 = vmatprep.subr.mxu0 0.0
  %2926 = vmatpush1.msra.mxu0 0.0
  %2927 = vmatprep.subr.mxu0 0.0
  %2928 = vmatpush1.msra.mxu0 0.0
  %2929 = vmatprep.subr.mxu0 0.0
  %2930 = vmatpush1.msra.mxu0 0.0
  %2931 = vmatprep.subr.mxu0 0.0
  %2932 = vmatpush1.msra.mxu0 0.0
  %2933 = vmatprep.subr.mxu0 0.0
  %2934 = vmatpush1.msra.mxu0 0.0
  %2935 = vmatprep.subr.mxu0 0.0
  %2936 = vmatpush1.msra.mxu0 0.0
  %2937 = vmatprep.subr.mxu0 0.0
  %2938 = vmatpush1.msra.mxu0 0.0
  %2939 = vmatprep.subr.mxu0 0.0
  %2940 = vmatpush1.msra.mxu0 0.0
  %2941 = vmatprep.subr.mxu0 0.0
  %2942 = vmatpush1.msra.mxu0 0.0
  %2943 = vmatprep.subr.mxu0 0.0
  %2944 = vmatpush1.msra.mxu0 0.0
  %2945 = vmatprep.subr.mxu0 0.0
  %2946 = vmatpush1.msra.mxu0 0.0
  %2947 = vmatprep.subr.mxu0 0.0
  %2948 = vmatpush1.msra.mxu0 0.0
  %2949 = vmatprep.subr.mxu0 0.0
  %2950 = vmatpush1.msra.mxu0 0.0
  %2951 = vmatprep.subr.mxu0 0.0
  %2952 = vmatpush1.msra.mxu0 0.0
  %2953 = vmatprep.subr.mxu0 0.0
  %2954 = vmatpush1.msra.mxu0 0.0
  %2955 = vmatprep.subr.mxu0 0.0
  %2956 = vmatpush1.msra.mxu0 0.0
  %2957 = vmatprep.subr.mxu0 0.0
  %2958 = vmatpush1.msra.mxu0 0.0
  %2959 = vmatprep.subr.mxu0 0.0
  %2960 = vmatpush1.msra.mxu0 0.0
  %2961 = vmatprep.subr.mxu0 0.0
  %2962 = vmatpush1.msra.mxu0 0.0
  %2963 = vmatprep.subr.mxu0 0.0
  %2964 = vmatpush1.msra.mxu0 0.0
  %2965 = vmatprep.subr.mxu0 0.0
  %2966 = vmatpush1.msra.mxu0 0.0
  %2967 = vmatprep.subr.mxu0 0.0
  %2968 = vmatpush1.msra.mxu0 0.0
  %2969 = vmatprep.subr.mxu0 0.0
  %2970 = vmatpush1.msra.mxu0 0.0
  %2971 = vmatprep.subr.mxu0 0.0
  %2972 = vmatpush1.msra.mxu0 0.0
  %2973 = vmatprep.mubr.f32.mxu0 0.0
  %2974 = vmatmul.mubr.f32.gmra.mrb[0].mxu0 %v2907
  %v2975 = vpop.f32.mrb[0].mxu0
  %v2976 = vadd.f32 0.0, %v2975
  %v2977 = vpop.f32.mrb[0].mxu0
  %2978 = vdwg.mxu0
  %v2979 = vadd.f32 %v2906, %v2976
  %v2980 = vxor.u32 %v2979, 2147483648
  %v2981 = vmul.f32 %v2980, 1.442695
  %v2982 = vpow.pop %v2981
  %v2983 = vadd.f32 %v2982, 1.0
  %v2984 = vrcp.pop %v2983
  %v2985 = vmul.f32 1.0, %v2984
  %v2986 = vtanh.pop %v2979
  %v2987 = vmul.f32 %v2985, %v2894
  %2989 = vrot.lane.b32.xlu0 %v2986, 64
  %v2990 = vpop.permute.xlu0 %2989
  %v2992 = vmul.f32 %v2985, %v2990
  %2994 = vrot.lane.b32.xlu0 %v2992, 32
  %v2995 = vpop.permute.xlu0 %2994
  %v2997 = vadd.f32 %v2987, %v2995
  %v2998 = vtanh.pop %v2997
  %3000 = vrot.lane.b32.xlu0 %v2998, 64
  %v3001 = vpop.permute.xlu0 %3000
  %v3003 = vmul.f32 %v2985, %v3001
  %3005 = vrot.lane.b32.xlu0 %v3003, 32
  %v3006 = vpop.permute.xlu0 %3005
  %3008 = vst.msk [vmem:[#allocation3 + $0x38] sm:$0xff] %vm216, %v3006
  %v3009 = vld [vmem:[#allocation3] sm:$0xff]
  %v3010 = vld [vmem:[#allocation3 + $0x8] sm:$0xff]
  %v3011 = vld [vmem:[#allocation3 + $0x10] sm:$0xff]
  %v3012 = vld [vmem:[#allocation3 + $0x18] sm:$0xff]
  %v3013 = vld [vmem:[#allocation3 + $0x20] sm:$0xff]
  %v3014 = vld [vmem:[#allocation3 + $0x28] sm:$0xff]
  %v3015 = vld [vmem:[#allocation3 + $0x30] sm:$0xff]
  %v3016 = vld [vmem:[#allocation3 + $0x38] sm:$0xff]
  %v3017 = vld [vmem:[%s11] sm:$0xff]
  %v3018 = vld [vmem:[%s11 + $0x8] sm:$0xff]
  %v3019 = vld [vmem:[%s11 + $0x10] sm:$0xff]
  %v3020 = vld [vmem:[%s11 + $0x18] sm:$0xff]
  %v3021 = vld [vmem:[%s13] sm:$0x1]
  %v3023 = vlaneseq
  %v3024 = vshrl.u32 %v3023, 7
  %v3025 = vsub.s32 0, %v3024
  %v3026 = vrot.slane %v3021, %v3025
  %v3029 = vsel %vm216, %v3009, 0
  %v3032 = vsel %vm216, %v3010, 0
  %v3035 = vsel %vm216, %v3011, 0
  %v3038 = vsel %vm216, %v3012, 0
  %v3041 = vsel %vm216, %v3013, 0
  %v3044 = vsel %vm216, %v3014, 0
  %v3047 = vsel %vm216, %v3015, 0
  %v3050 = vsel %vm216, %v3016, 0
  %3052 = vmatprep.subr.mxu0 0.0
  %3053 = vmatpush1.msra.mxu0 %v3017
  %3054 = vmatprep.subr.mxu0 0.0
  %3055 = vmatpush1.msra.mxu0 %v3018
  %3056 = vmatprep.subr.mxu0 0.0
  %3057 = vmatpush1.msra.mxu0 %v3019
  %3058 = vmatprep.subr.mxu0 0.0
  %3059 = vmatpush1.msra.mxu0 %v3020
  %3060 = vmatprep.subr.mxu0 0.0
  %3061 = vmatpush1.msra.mxu0 0.0
  %3062 = vmatprep.subr.mxu0 0.0
  %3063 = vmatpush1.msra.mxu0 0.0
  %3064 = vmatprep.subr.mxu0 0.0
  %3065 = vmatpush1.msra.mxu0 0.0
  %3066 = vmatprep.subr.mxu0 0.0
  %3067 = vmatpush1.msra.mxu0 0.0
  %3068 = vmatprep.subr.mxu0 0.0
  %3069 = vmatpush1.msra.mxu0 0.0
  %3070 = vmatprep.subr.mxu0 0.0
  %3071 = vmatpush1.msra.mxu0 0.0
  %3072 = vmatprep.subr.mxu0 0.0
  %3073 = vmatpush1.msra.mxu0 0.0
  %3074 = vmatprep.subr.mxu0 0.0
  %3075 = vmatpush1.msra.mxu0 0.0
  %3076 = vmatprep.subr.mxu0 0.0
  %3077 = vmatpush1.msra.mxu0 0.0
  %3078 = vmatprep.subr.mxu0 0.0
  %3079 = vmatpush1.msra.mxu0 0.0
  %3080 = vmatprep.subr.mxu0 0.0
  %3081 = vmatpush1.msra.mxu0 0.0
  %3082 = vmatprep.subr.mxu0 0.0
  %3083 = vmatpush1.msra.mxu0 0.0
  %3084 = vmatprep.subr.mxu0 0.0
  %3085 = vmatpush1.msra.mxu0 0.0
  %3086 = vmatprep.subr.mxu0 0.0
  %3087 = vmatpush1.msra.mxu0 0.0
  %3088 = vmatprep.subr.mxu0 0.0
  %3089 = vmatpush1.msra.mxu0 0.0
  %3090 = vmatprep.subr.mxu0 0.0
  %3091 = vmatpush1.msra.mxu0 0.0
  %3092 = vmatprep.subr.mxu0 0.0
  %3093 = vmatpush1.msra.mxu0 0.0
  %3094 = vmatprep.subr.mxu0 0.0
  %3095 = vmatpush1.msra.mxu0 0.0
  %3096 = vmatprep.subr.mxu0 0.0
  %3097 = vmatpush1.msra.mxu0 0.0
  %3098 = vmatprep.subr.mxu0 0.0
  %3099 = vmatpush1.msra.mxu0 0.0
  %3100 = vmatprep.subr.mxu0 0.0
  %3101 = vmatpush1.msra.mxu0 0.0
  %3102 = vmatprep.subr.mxu0 0.0
  %3103 = vmatpush1.msra.mxu0 0.0
  %3104 = vmatprep.subr.mxu0 0.0
  %3105 = vmatpush1.msra.mxu0 0.0
  %3106 = vmatprep.subr.mxu0 0.0
  %3107 = vmatpush1.msra.mxu0 0.0
  %3108 = vmatprep.subr.mxu0 0.0
  %3109 = vmatpush1.msra.mxu0 0.0
  %3110 = vmatprep.subr.mxu0 0.0
  %3111 = vmatpush1.msra.mxu0 0.0
  %3112 = vmatprep.subr.mxu0 0.0
  %3113 = vmatpush1.msra.mxu0 0.0
  %3114 = vmatprep.subr.mxu0 0.0
  %3115 = vmatpush1.msra.mxu0 0.0
  %3116 = vmatprep.mubr.f32.mxu0 0.0
  %3117 = vmatmul.mubr.f32.gmra.mrb[0].mxu0 %v3029
  %v3118 = vpop.f32.mrb[0].mxu0
  %v3119 = vadd.f32 %v3026, %v3118
  %v3120 = vpop.f32.mrb[0].mxu0
  %3121 = vmatprep.mubr.f32.mxu0 0.0
  %3122 = vmatmul.mubr.f32.gmra.mrb[0].mxu0 %v3032
  %v3123 = vpop.f32.mrb[0].mxu0
  %v3124 = vadd.f32 %v3026, %v3123
  %v3125 = vpop.f32.mrb[0].mxu0
  %3126 = vmatprep.mubr.f32.mxu0 0.0
  %3127 = vmatmul.mubr.f32.gmra.mrb[0].mxu0 %v3035
  %v3128 = vpop.f32.mrb[0].mxu0
  %v3129 = vadd.f32 %v3026, %v3128
  %v3130 = vpop.f32.mrb[0].mxu0
  %3131 = vmatprep.mubr.f32.mxu0 0.0
  %3132 = vmatmul.mubr.f32.gmra.mrb[0].mxu0 %v3038
  %v3133 = vpop.f32.mrb[0].mxu0
  %v3134 = vadd.f32 %v3026, %v3133
  %v3135 = vpop.f32.mrb[0].mxu0
  %3136 = vmatprep.mubr.f32.mxu0 0.0
  %3137 = vmatmul.mubr.f32.gmra.mrb[0].mxu0 %v3041
  %v3138 = vpop.f32.mrb[0].mxu0
  %v3139 = vadd.f32 %v3026, %v3138
  %v3140 = vpop.f32.mrb[0].mxu0
  %3141 = vmatprep.mubr.f32.mxu0 0.0
  %3142 = vmatmul.mubr.f32.gmra.mrb[0].mxu0 %v3044
  %v3143 = vpop.f32.mrb[0].mxu0
  %v3144 = vadd.f32 %v3026, %v3143
  %v3145 = vpop.f32.mrb[0].mxu0
  %3146 = vmatprep.mubr.f32.mxu0 0.0
  %3147 = vmatmul.mubr.f32.gmra.mrb[0].mxu0 %v3047
  %v3148 = vpop.f32.mrb[0].mxu0
  %v3149 = vadd.f32 %v3026, %v3148
  %v3150 = vpop.f32.mrb[0].mxu0
  %3151 = vmatprep.mubr.f32.mxu0 0.0
  %3152 = vmatmul.mubr.f32.gmra.mrb[0].mxu0 %v3050
  %v3153 = vpop.f32.mrb[0].mxu0
  %v3154 = vadd.f32 %v3026, %v3153
  %v3155 = vpop.f32.mrb[0].mxu0
  %3156 = vdwg.mxu0
  %3157 = vst [vmem:[#allocation2] sm:$0xff] %v3119
  %3158 = vst [vmem:[#allocation2 + $0x8] sm:$0xff] %v3124
  %3159 = vst [vmem:[#allocation2 + $0x10] sm:$0xff] %v3129
  %3160 = vst [vmem:[#allocation2 + $0x18] sm:$0xff] %v3134
  %3161 = vst [vmem:[#allocation2 + $0x20] sm:$0xff] %v3139
  %3162 = vst [vmem:[#allocation2 + $0x28] sm:$0xff] %v3144
  %3163 = vst [vmem:[#allocation2 + $0x30] sm:$0xff] %v3149
  %3164 = vst [vmem:[#allocation2 + $0x38] sm:$0xff] %v3154
  %v3165 = vld [vmem:[%s12] sm:$0xff]
  %v3166 = vld [vmem:[%s12 + $0x8] sm:$0xff]
  %v3167 = vld [vmem:[%s12 + $0x10] sm:$0xff]
  %v3168 = vld [vmem:[%s12 + $0x18] sm:$0xff]
  %v3169 = vld [vmem:[#allocation2] sm:$0xff]
  %v3170 = vsel %vm216, %v2020, 0
  %3172 = vmatprep.subr.mxu0 0.0
  %3173 = vmatpush1.msra.mxu0 %v3165
  %3174 = vmatprep.subr.mxu0 0.0
  %3175 = vmatpush1.msra.mxu0 %v3166
  %3176 = vmatprep.subr.mxu0 0.0
  %3177 = vmatpush1.msra.mxu0 %v3167
  %3178 = vmatprep.subr.mxu0 0.0
  %3179 = vmatpush1.msra.mxu0 %v3168
  %3180 = vmatprep.subr.mxu0 0.0
  %3181 = vmatpush1.msra.mxu0 0.0
  %3182 = vmatprep.subr.mxu0 0.0
  %3183 = vmatpush1.msra.mxu0 0.0
  %3184 = vmatprep.subr.mxu0 0.0
  %3185 = vmatpush1.msra.mxu0 0.0
  %3186 = vmatprep.subr.mxu0 0.0
  %3187 = vmatpush1.msra.mxu0 0.0
  %3188 = vmatprep.subr.mxu0 0.0
  %3189 = vmatpush1.msra.mxu0 0.0
  %3190 = vmatprep.subr.mxu0 0.0
  %3191 = vmatpush1.msra.mxu0 0.0
  %3192 = vmatprep.subr.mxu0 0.0
  %3193 = vmatpush1.msra.mxu0 0.0
  %3194 = vmatprep.subr.mxu0 0.0
  %3195 = vmatpush1.msra.mxu0 0.0
  %3196 = vmatprep.subr.mxu0 0.0
  %3197 = vmatpush1.msra.mxu0 0.0
  %3198 = vmatprep.subr.mxu0 0.0
  %3199 = vmatpush1.msra.mxu0 0.0
  %3200 = vmatprep.subr.mxu0 0.0
  %3201 = vmatpush1.msra.mxu0 0.0
  %3202 = vmatprep.subr.mxu0 0.0
  %3203 = vmatpush1.msra.mxu0 0.0
  %3204 = vmatprep.subr.mxu0 0.0
  %3205 = vmatpush1.msra.mxu0 0.0
  %3206 = vmatprep.subr.mxu0 0.0
  %3207 = vmatpush1.msra.mxu0 0.0
  %3208 = vmatprep.subr.mxu0 0.0
  %3209 = vmatpush1.msra.mxu0 0.0
  %3210 = vmatprep.subr.mxu0 0.0
  %3211 = vmatpush1.msra.mxu0 0.0
  %3212 = vmatprep.subr.mxu0 0.0
  %3213 = vmatpush1.msra.mxu0 0.0
  %3214 = vmatprep.subr.mxu0 0.0
  %3215 = vmatpush1.msra.mxu0 0.0
  %3216 = vmatprep.subr.mxu0 0.0
  %3217 = vmatpush1.msra.mxu0 0.0
  %3218 = vmatprep.subr.mxu0 0.0
  %3219 = vmatpush1.msra.mxu0 0.0
  %3220 = vmatprep.subr.mxu0 0.0
  %3221 = vmatpush1.msra.mxu0 0.0
  %3222 = vmatprep.subr.mxu0 0.0
  %3223 = vmatpush1.msra.mxu0 0.0
  %3224 = vmatprep.subr.mxu0 0.0
  %3225 = vmatpush1.msra.mxu0 0.0
  %3226 = vmatprep.subr.mxu0 0.0
  %3227 = vmatpush1.msra.mxu0 0.0
  %3228 = vmatprep.subr.mxu0 0.0
  %3229 = vmatpush1.msra.mxu0 0.0
  %3230 = vmatprep.subr.mxu0 0.0
  %3231 = vmatpush1.msra.mxu0 0.0
  %3232 = vmatprep.subr.mxu0 0.0
  %3233 = vmatpush1.msra.mxu0 0.0
  %3234 = vmatprep.subr.mxu0 0.0
  %3235 = vmatpush1.msra.mxu0 0.0
  %3236 = vmatprep.mubr.f32.mxu0 0.0
  %3237 = vmatmul.mubr.f32.gmra.mrb[0].mxu0 %v3170
  %v3238 = vpop.f32.mrb[0].mxu0
  %v3239 = vadd.f32 0.0, %v3238
  %v3240 = vpop.f32.mrb[0].mxu0
  %3241 = vdwg.mxu0
  %v3242 = vadd.f32 %v3169, %v3239
  %v3243 = vxor.u32 %v3242, 2147483648
  %v3244 = vmul.f32 %v3243, 1.442695
  %v3245 = vpow.pop %v3244
  %v3246 = vadd.f32 %v3245, 1.0
  %v3247 = vrcp.pop %v3246
  %v3248 = vmul.f32 1.0, %v3247
  %v3249 = vtanh.pop %v3242
  %v3250 = vmul.f32 %v3248, %v2011
  %3252 = vrot.lane.b32.xlu0 %v3249, 64
  %v3253 = vpop.permute.xlu0 %3252
  %v3255 = vmul.f32 %v3248, %v3253
  %3257 = vrot.lane.b32.xlu0 %v3255, 32
  %v3258 = vpop.permute.xlu0 %3257
  %v3260 = vadd.f32 %v3250, %v3258
  %v3261 = vtanh.pop %v3260
  %3263 = vrot.lane.b32.xlu0 %v3261, 64
  %v3264 = vpop.permute.xlu0 %3263
  %v3266 = vmul.f32 %v3248, %v3264
  %3268 = vrot.lane.b32.xlu0 %v3266, 32
  %v3269 = vpop.permute.xlu0 %3268
  %3271 = vst.msk [vmem:[#allocation3] sm:$0xff] %vm216, %v3269
  %v3272 = vld [vmem:[#allocation2 + $0x8] sm:$0xff]
  %v3273 = vsel %vm216, %v3269, 0
  %3275 = vmatprep.subr.mxu0 0.0
  %3276 = vmatpush1.msra.mxu0 %v3165
  %3277 = vmatprep.subr.mxu0 0.0
  %3278 = vmatpush1.msra.mxu0 %v3166
  %3279 = vmatprep.subr.mxu0 0.0
  %3280 = vmatpush1.msra.mxu0 %v3167
  %3281 = vmatprep.subr.mxu0 0.0
  %3282 = vmatpush1.msra.mxu0 %v3168
  %3283 = vmatprep.subr.mxu0 0.0
  %3284 = vmatpush1.msra.mxu0 0.0
  %3285 = vmatprep.subr.mxu0 0.0
  %3286 = vmatpush1.msra.mxu0 0.0
  %3287 = vmatprep.subr.mxu0 0.0
  %3288 = vmatpush1.msra.mxu0 0.0
  %3289 = vmatprep.subr.mxu0 0.0
  %3290 = vmatpush1.msra.mxu0 0.0
  %3291 = vmatprep.subr.mxu0 0.0
  %3292 = vmatpush1.msra.mxu0 0.0
  %3293 = vmatprep.subr.mxu0 0.0
  %3294 = vmatpush1.msra.mxu0 0.0
  %3295 = vmatprep.subr.mxu0 0.0
  %3296 = vmatpush1.msra.mxu0 0.0
  %3297 = vmatprep.subr.mxu0 0.0
  %3298 = vmatpush1.msra.mxu0 0.0
  %3299 = vmatprep.subr.mxu0 0.0
  %3300 = vmatpush1.msra.mxu0 0.0
  %3301 = vmatprep.subr.mxu0 0.0
  %3302 = vmatpush1.msra.mxu0 0.0
  %3303 = vmatprep.subr.mxu0 0.0
  %3304 = vmatpush1.msra.mxu0 0.0
  %3305 = vmatprep.subr.mxu0 0.0
  %3306 = vmatpush1.msra.mxu0 0.0
  %3307 = vmatprep.subr.mxu0 0.0
  %3308 = vmatpush1.msra.mxu0 0.0
  %3309 = vmatprep.subr.mxu0 0.0
  %3310 = vmatpush1.msra.mxu0 0.0
  %3311 = vmatprep.subr.mxu0 0.0
  %3312 = vmatpush1.msra.mxu0 0.0
  %3313 = vmatprep.subr.mxu0 0.0
  %3314 = vmatpush1.msra.mxu0 0.0
  %3315 = vmatprep.subr.mxu0 0.0
  %3316 = vmatpush1.msra.mxu0 0.0
  %3317 = vmatprep.subr.mxu0 0.0
  %3318 = vmatpush1.msra.mxu0 0.0
  %3319 = vmatprep.subr.mxu0 0.0
  %3320 = vmatpush1.msra.mxu0 0.0
  %3321 = vmatprep.subr.mxu0 0.0
  %3322 = vmatpush1.msra.mxu0 0.0
  %3323 = vmatprep.subr.mxu0 0.0
  %3324 = vmatpush1.msra.mxu0 0.0
  %3325 = vmatprep.subr.mxu0 0.0
  %3326 = vmatpush1.msra.mxu0 0.0
  %3327 = vmatprep.subr.mxu0 0.0
  %3328 = vmatpush1.msra.mxu0 0.0
  %3329 = vmatprep.subr.mxu0 0.0
  %3330 = vmatpush1.msra.mxu0 0.0
  %3331 = vmatprep.subr.mxu0 0.0
  %3332 = vmatpush1.msra.mxu0 0.0
  %3333 = vmatprep.subr.mxu0 0.0
  %3334 = vmatpush1.msra.mxu0 0.0
  %3335 = vmatprep.subr.mxu0 0.0
  %3336 = vmatpush1.msra.mxu0 0.0
  %3337 = vmatprep.subr.mxu0 0.0
  %3338 = vmatpush1.msra.mxu0 0.0
  %3339 = vmatprep.mubr.f32.mxu0 0.0
  %3340 = vmatmul.mubr.f32.gmra.mrb[0].mxu0 %v3273
  %v3341 = vpop.f32.mrb[0].mxu0
  %v3342 = vadd.f32 0.0, %v3341
  %v3343 = vpop.f32.mrb[0].mxu0
  %3344 = vdwg.mxu0
  %v3345 = vadd.f32 %v3272, %v3342
  %v3346 = vxor.u32 %v3345, 2147483648
  %v3347 = vmul.f32 %v3346, 1.442695
  %v3348 = vpow.pop %v3347
  %v3349 = vadd.f32 %v3348, 1.0
  %v3350 = vrcp.pop %v3349
  %v3351 = vmul.f32 1.0, %v3350
  %v3352 = vtanh.pop %v3345
  %v3353 = vmul.f32 %v3351, %v3260
  %3355 = vrot.lane.b32.xlu0 %v3352, 64
  %v3356 = vpop.permute.xlu0 %3355
  %v3358 = vmul.f32 %v3351, %v3356
  %3360 = vrot.lane.b32.xlu0 %v3358, 32
  %v3361 = vpop.permute.xlu0 %3360
  %v3363 = vadd.f32 %v3353, %v3361
  %v3364 = vtanh.pop %v3363
  %3366 = vrot.lane.b32.xlu0 %v3364, 64
  %v3367 = vpop.permute.xlu0 %3366
  %v3369 = vmul.f32 %v3351, %v3367
  %3371 = vrot.lane.b32.xlu0 %v3369, 32
  %v3372 = vpop.permute.xlu0 %3371
  %3374 = vst.msk [vmem:[#allocation3 + $0x8] sm:$0xff] %vm216, %v3372
  %v3375 = vld [vmem:[#allocation2 + $0x10] sm:$0xff]
  %v3376 = vsel %vm216, %v3372, 0
  %3378 = vmatprep.subr.mxu0 0.0
  %3379 = vmatpush1.msra.mxu0 %v3165
  %3380 = vmatprep.subr.mxu0 0.0
  %3381 = vmatpush1.msra.mxu0 %v3166
  %3382 = vmatprep.subr.mxu0 0.0
  %3383 = vmatpush1.msra.mxu0 %v3167
  %3384 = vmatprep.subr.mxu0 0.0
  %3385 = vmatpush1.msra.mxu0 %v3168
  %3386 = vmatprep.subr.mxu0 0.0
  %3387 = vmatpush1.msra.mxu0 0.0
  %3388 = vmatprep.subr.mxu0 0.0
  %3389 = vmatpush1.msra.mxu0 0.0
  %3390 = vmatprep.subr.mxu0 0.0
  %3391 = vmatpush1.msra.mxu0 0.0
  %3392 = vmatprep.subr.mxu0 0.0
  %3393 = vmatpush1.msra.mxu0 0.0
  %3394 = vmatprep.subr.mxu0 0.0
  %3395 = vmatpush1.msra.mxu0 0.0
  %3396 = vmatprep.subr.mxu0 0.0
  %3397 = vmatpush1.msra.mxu0 0.0
  %3398 = vmatprep.subr.mxu0 0.0
  %3399 = vmatpush1.msra.mxu0 0.0
  %3400 = vmatprep.subr.mxu0 0.0
  %3401 = vmatpush1.msra.mxu0 0.0
  %3402 = vmatprep.subr.mxu0 0.0
  %3403 = vmatpush1.msra.mxu0 0.0
  %3404 = vmatprep.subr.mxu0 0.0
  %3405 = vmatpush1.msra.mxu0 0.0
  %3406 = vmatprep.subr.mxu0 0.0
  %3407 = vmatpush1.msra.mxu0 0.0
  %3408 = vmatprep.subr.mxu0 0.0
  %3409 = vmatpush1.msra.mxu0 0.0
  %3410 = vmatprep.subr.mxu0 0.0
  %3411 = vmatpush1.msra.mxu0 0.0
  %3412 = vmatprep.subr.mxu0 0.0
  %3413 = vmatpush1.msra.mxu0 0.0
  %3414 = vmatprep.subr.mxu0 0.0
  %3415 = vmatpush1.msra.mxu0 0.0
  %3416 = vmatprep.subr.mxu0 0.0
  %3417 = vmatpush1.msra.mxu0 0.0
  %3418 = vmatprep.subr.mxu0 0.0
  %3419 = vmatpush1.msra.mxu0 0.0
  %3420 = vmatprep.subr.mxu0 0.0
  %3421 = vmatpush1.msra.mxu0 0.0
  %3422 = vmatprep.subr.mxu0 0.0
  %3423 = vmatpush1.msra.mxu0 0.0
  %3424 = vmatprep.subr.mxu0 0.0
  %3425 = vmatpush1.msra.mxu0 0.0
  %3426 = vmatprep.subr.mxu0 0.0
  %3427 = vmatpush1.msra.mxu0 0.0
  %3428 = vmatprep.subr.mxu0 0.0
  %3429 = vmatpush1.msra.mxu0 0.0
  %3430 = vmatprep.subr.mxu0 0.0
  %3431 = vmatpush1.msra.mxu0 0.0
  %3432 = vmatprep.subr.mxu0 0.0
  %3433 = vmatpush1.msra.mxu0 0.0
  %3434 = vmatprep.subr.mxu0 0.0
  %3435 = vmatpush1.msra.mxu0 0.0
  %3436 = vmatprep.subr.mxu0 0.0
  %3437 = vmatpush1.msra.mxu0 0.0
  %3438 = vmatprep.subr.mxu0 0.0
  %3439 = vmatpush1.msra.mxu0 0.0
  %3440 = vmatprep.subr.mxu0 0.0
  %3441 = vmatpush1.msra.mxu0 0.0
  %3442 = vmatprep.mubr.f32.mxu0 0.0
  %3443 = vmatmul.mubr.f32.gmra.mrb[0].mxu0 %v3376
  %v3444 = vpop.f32.mrb[0].mxu0
  %v3445 = vadd.f32 0.0, %v3444
  %v3446 = vpop.f32.mrb[0].mxu0
  %3447 = vdwg.mxu0
  %v3448 = vadd.f32 %v3375, %v3445
  %v3449 = vxor.u32 %v3448, 2147483648
  %v3450 = vmul.f32 %v3449, 1.442695
  %v3451 = vpow.pop %v3450
  %v3452 = vadd.f32 %v3451, 1.0
  %v3453 = vrcp.pop %v3452
  %v3454 = vmul.f32 1.0, %v3453
  %v3455 = vtanh.pop %v3448
  %v3456 = vmul.f32 %v3454, %v3363
  %3458 = vrot.lane.b32.xlu0 %v3455, 64
  %v3459 = vpop.permute.xlu0 %3458
  %v3461 = vmul.f32 %v3454, %v3459
  %3463 = vrot.lane.b32.xlu0 %v3461, 32
  %v3464 = vpop.permute.xlu0 %3463
  %v3466 = vadd.f32 %v3456, %v3464
  %v3467 = vtanh.pop %v3466
  %3469 = vrot.lane.b32.xlu0 %v3467, 64
  %v3470 = vpop.permute.xlu0 %3469
  %v3472 = vmul.f32 %v3454, %v3470
  %3474 = vrot.lane.b32.xlu0 %v3472, 32
  %v3475 = vpop.permute.xlu0 %3474
  %3477 = vst.msk [vmem:[#allocation3 + $0x10] sm:$0xff] %vm216, %v3475
  %v3478 = vld [vmem:[#allocation2 + $0x18] sm:$0xff]
  %v3479 = vsel %vm216, %v3475, 0
  %3481 = vmatprep.subr.mxu0 0.0
  %3482 = vmatpush1.msra.mxu0 %v3165
  %3483 = vmatprep.subr.mxu0 0.0
  %3484 = vmatpush1.msra.mxu0 %v3166
  %3485 = vmatprep.subr.mxu0 0.0
  %3486 = vmatpush1.msra.mxu0 %v3167
  %3487 = vmatprep.subr.mxu0 0.0
  %3488 = vmatpush1.msra.mxu0 %v3168
  %3489 = vmatprep.subr.mxu0 0.0
  %3490 = vmatpush1.msra.mxu0 0.0
  %3491 = vmatprep.subr.mxu0 0.0
  %3492 = vmatpush1.msra.mxu0 0.0
  %3493 = vmatprep.subr.mxu0 0.0
  %3494 = vmatpush1.msra.mxu0 0.0
  %3495 = vmatprep.subr.mxu0 0.0
  %3496 = vmatpush1.msra.mxu0 0.0
  %3497 = vmatprep.subr.mxu0 0.0
  %3498 = vmatpush1.msra.mxu0 0.0
  %3499 = vmatprep.subr.mxu0 0.0
  %3500 = vmatpush1.msra.mxu0 0.0
  %3501 = vmatprep.subr.mxu0 0.0
  %3502 = vmatpush1.msra.mxu0 0.0
  %3503 = vmatprep.subr.mxu0 0.0
  %3504 = vmatpush1.msra.mxu0 0.0
  %3505 = vmatprep.subr.mxu0 0.0
  %3506 = vmatpush1.msra.mxu0 0.0
  %3507 = vmatprep.subr.mxu0 0.0
  %3508 = vmatpush1.msra.mxu0 0.0
  %3509 = vmatprep.subr.mxu0 0.0
  %3510 = vmatpush1.msra.mxu0 0.0
  %3511 = vmatprep.subr.mxu0 0.0
  %3512 = vmatpush1.msra.mxu0 0.0
  %3513 = vmatprep.subr.mxu0 0.0
  %3514 = vmatpush1.msra.mxu0 0.0
  %3515 = vmatprep.subr.mxu0 0.0
  %3516 = vmatpush1.msra.mxu0 0.0
  %3517 = vmatprep.subr.mxu0 0.0
  %3518 = vmatpush1.msra.mxu0 0.0
  %3519 = vmatprep.subr.mxu0 0.0
  %3520 = vmatpush1.msra.mxu0 0.0
  %3521 = vmatprep.subr.mxu0 0.0
  %3522 = vmatpush1.msra.mxu0 0.0
  %3523 = vmatprep.subr.mxu0 0.0
  %3524 = vmatpush1.msra.mxu0 0.0
  %3525 = vmatprep.subr.mxu0 0.0
  %3526 = vmatpush1.msra.mxu0 0.0
  %3527 = vmatprep.subr.mxu0 0.0
  %3528 = vmatpush1.msra.mxu0 0.0
  %3529 = vmatprep.subr.mxu0 0.0
  %3530 = vmatpush1.msra.mxu0 0.0
  %3531 = vmatprep.subr.mxu0 0.0
  %3532 = vmatpush1.msra.mxu0 0.0
  %3533 = vmatprep.subr.mxu0 0.0
  %3534 = vmatpush1.msra.mxu0 0.0
  %3535 = vmatprep.subr.mxu0 0.0
  %3536 = vmatpush1.msra.mxu0 0.0
  %3537 = vmatprep.subr.mxu0 0.0
  %3538 = vmatpush1.msra.mxu0 0.0
  %3539 = vmatprep.subr.mxu0 0.0
  %3540 = vmatpush1.msra.mxu0 0.0
  %3541 = vmatprep.subr.mxu0 0.0
  %3542 = vmatpush1.msra.mxu0 0.0
  %3543 = vmatprep.subr.mxu0 0.0
  %3544 = vmatpush1.msra.mxu0 0.0
  %3545 = vmatprep.mubr.f32.mxu0 0.0
  %3546 = vmatmul.mubr.f32.gmra.mrb[0].mxu0 %v3479
  %v3547 = vpop.f32.mrb[0].mxu0
  %v3548 = vadd.f32 0.0, %v3547
  %v3549 = vpop.f32.mrb[0].mxu0
  %3550 = vdwg.mxu0
  %v3551 = vadd.f32 %v3478, %v3548
  %v3552 = vxor.u32 %v3551, 2147483648
  %v3553 = vmul.f32 %v3552, 1.442695
  %v3554 = vpow.pop %v3553
  %v3555 = vadd.f32 %v3554, 1.0
  %v3556 = vrcp.pop %v3555
  %v3557 = vmul.f32 1.0, %v3556
  %v3558 = vtanh.pop %v3551
  %v3559 = vmul.f32 %v3557, %v3466
  %3561 = vrot.lane.b32.xlu0 %v3558, 64
  %v3562 = vpop.permute.xlu0 %3561
  %v3564 = vmul.f32 %v3557, %v3562
  %3566 = vrot.lane.b32.xlu0 %v3564, 32
  %v3567 = vpop.permute.xlu0 %3566
  %v3569 = vadd.f32 %v3559, %v3567
  %v3570 = vtanh.pop %v3569
  %3572 = vrot.lane.b32.xlu0 %v3570, 64
  %v3573 = vpop.permute.xlu0 %3572
  %v3575 = vmul.f32 %v3557, %v3573
  %3577 = vrot.lane.b32.xlu0 %v3575, 32
  %v3578 = vpop.permute.xlu0 %3577
  %3580 = vst.msk [vmem:[#allocation3 + $0x18] sm:$0xff] %vm216, %v3578
  %v3581 = vld [vmem:[#allocation2 + $0x20] sm:$0xff]
  %v3582 = vsel %vm216, %v3578, 0
  %3584 = vmatprep.subr.mxu0 0.0
  %3585 = vmatpush1.msra.mxu0 %v3165
  %3586 = vmatprep.subr.mxu0 0.0
  %3587 = vmatpush1.msra.mxu0 %v3166
  %3588 = vmatprep.subr.mxu0 0.0
  %3589 = vmatpush1.msra.mxu0 %v3167
  %3590 = vmatprep.subr.mxu0 0.0
  %3591 = vmatpush1.msra.mxu0 %v3168
  %3592 = vmatprep.subr.mxu0 0.0
  %3593 = vmatpush1.msra.mxu0 0.0
  %3594 = vmatprep.subr.mxu0 0.0
  %3595 = vmatpush1.msra.mxu0 0.0
  %3596 = vmatprep.subr.mxu0 0.0
  %3597 = vmatpush1.msra.mxu0 0.0
  %3598 = vmatprep.subr.mxu0 0.0
  %3599 = vmatpush1.msra.mxu0 0.0
  %3600 = vmatprep.subr.mxu0 0.0
  %3601 = vmatpush1.msra.mxu0 0.0
  %3602 = vmatprep.subr.mxu0 0.0
  %3603 = vmatpush1.msra.mxu0 0.0
  %3604 = vmatprep.subr.mxu0 0.0
  %3605 = vmatpush1.msra.mxu0 0.0
  %3606 = vmatprep.subr.mxu0 0.0
  %3607 = vmatpush1.msra.mxu0 0.0
  %3608 = vmatprep.subr.mxu0 0.0
  %3609 = vmatpush1.msra.mxu0 0.0
  %3610 = vmatprep.subr.mxu0 0.0
  %3611 = vmatpush1.msra.mxu0 0.0
  %3612 = vmatprep.subr.mxu0 0.0
  %3613 = vmatpush1.msra.mxu0 0.0
  %3614 = vmatprep.subr.mxu0 0.0
  %3615 = vmatpush1.msra.mxu0 0.0
  %3616 = vmatprep.subr.mxu0 0.0
  %3617 = vmatpush1.msra.mxu0 0.0
  %3618 = vmatprep.subr.mxu0 0.0
  %3619 = vmatpush1.msra.mxu0 0.0
  %3620 = vmatprep.subr.mxu0 0.0
  %3621 = vmatpush1.msra.mxu0 0.0
  %3622 = vmatprep.subr.mxu0 0.0
  %3623 = vmatpush1.msra.mxu0 0.0
  %3624 = vmatprep.subr.mxu0 0.0
  %3625 = vmatpush1.msra.mxu0 0.0
  %3626 = vmatprep.subr.mxu0 0.0
  %3627 = vmatpush1.msra.mxu0 0.0
  %3628 = vmatprep.subr.mxu0 0.0
  %3629 = vmatpush1.msra.mxu0 0.0
  %3630 = vmatprep.subr.mxu0 0.0
  %3631 = vmatpush1.msra.mxu0 0.0
  %3632 = vmatprep.subr.mxu0 0.0
  %3633 = vmatpush1.msra.mxu0 0.0
  %3634 = vmatprep.subr.mxu0 0.0
  %3635 = vmatpush1.msra.mxu0 0.0
  %3636 = vmatprep.subr.mxu0 0.0
  %3637 = vmatpush1.msra.mxu0 0.0
  %3638 = vmatprep.subr.mxu0 0.0
  %3639 = vmatpush1.msra.mxu0 0.0
  %3640 = vmatprep.subr.mxu0 0.0
  %3641 = vmatpush1.msra.mxu0 0.0
  %3642 = vmatprep.subr.mxu0 0.0
  %3643 = vmatpush1.msra.mxu0 0.0
  %3644 = vmatprep.subr.mxu0 0.0
  %3645 = vmatpush1.msra.mxu0 0.0
  %3646 = vmatprep.subr.mxu0 0.0
  %3647 = vmatpush1.msra.mxu0 0.0
  %3648 = vmatprep.mubr.f32.mxu0 0.0
  %3649 = vmatmul.mubr.f32.gmra.mrb[0].mxu0 %v3582
  %v3650 = vpop.f32.mrb[0].mxu0
  %v3651 = vadd.f32 0.0, %v3650
  %v3652 = vpop.f32.mrb[0].mxu0
  %3653 = vdwg.mxu0
  %v3654 = vadd.f32 %v3581, %v3651
  %v3655 = vxor.u32 %v3654, 2147483648
  %v3656 = vmul.f32 %v3655, 1.442695
  %v3657 = vpow.pop %v3656
  %v3658 = vadd.f32 %v3657, 1.0
  %v3659 = vrcp.pop %v3658
  %v3660 = vmul.f32 1.0, %v3659
  %v3661 = vtanh.pop %v3654
  %v3662 = vmul.f32 %v3660, %v3569
  %3664 = vrot.lane.b32.xlu0 %v3661, 64
  %v3665 = vpop.permute.xlu0 %3664
  %v3667 = vmul.f32 %v3660, %v3665
  %3669 = vrot.lane.b32.xlu0 %v3667, 32
  %v3670 = vpop.permute.xlu0 %3669
  %v3672 = vadd.f32 %v3662, %v3670
  %v3673 = vtanh.pop %v3672
  %3675 = vrot.lane.b32.xlu0 %v3673, 64
  %v3676 = vpop.permute.xlu0 %3675
  %v3678 = vmul.f32 %v3660, %v3676
  %3680 = vrot.lane.b32.xlu0 %v3678, 32
  %v3681 = vpop.permute.xlu0 %3680
  %3683 = vst.msk [vmem:[#allocation3 + $0x20] sm:$0xff] %vm216, %v3681
  %v3684 = vld [vmem:[#allocation2 + $0x28] sm:$0xff]
  %v3685 = vsel %vm216, %v3681, 0
  %3687 = vmatprep.subr.mxu0 0.0
  %3688 = vmatpush1.msra.mxu0 %v3165
  %3689 = vmatprep.subr.mxu0 0.0
  %3690 = vmatpush1.msra.mxu0 %v3166
  %3691 = vmatprep.subr.mxu0 0.0
  %3692 = vmatpush1.msra.mxu0 %v3167
  %3693 = vmatprep.subr.mxu0 0.0
  %3694 = vmatpush1.msra.mxu0 %v3168
  %3695 = vmatprep.subr.mxu0 0.0
  %3696 = vmatpush1.msra.mxu0 0.0
  %3697 = vmatprep.subr.mxu0 0.0
  %3698 = vmatpush1.msra.mxu0 0.0
  %3699 = vmatprep.subr.mxu0 0.0
  %3700 = vmatpush1.msra.mxu0 0.0
  %3701 = vmatprep.subr.mxu0 0.0
  %3702 = vmatpush1.msra.mxu0 0.0
  %3703 = vmatprep.subr.mxu0 0.0
  %3704 = vmatpush1.msra.mxu0 0.0
  %3705 = vmatprep.subr.mxu0 0.0
  %3706 = vmatpush1.msra.mxu0 0.0
  %3707 = vmatprep.subr.mxu0 0.0
  %3708 = vmatpush1.msra.mxu0 0.0
  %3709 = vmatprep.subr.mxu0 0.0
  %3710 = vmatpush1.msra.mxu0 0.0
  %3711 = vmatprep.subr.mxu0 0.0
  %3712 = vmatpush1.msra.mxu0 0.0
  %3713 = vmatprep.subr.mxu0 0.0
  %3714 = vmatpush1.msra.mxu0 0.0
  %3715 = vmatprep.subr.mxu0 0.0
  %3716 = vmatpush1.msra.mxu0 0.0
  %3717 = vmatprep.subr.mxu0 0.0
  %3718 = vmatpush1.msra.mxu0 0.0
  %3719 = vmatprep.subr.mxu0 0.0
  %3720 = vmatpush1.msra.mxu0 0.0
  %3721 = vmatprep.subr.mxu0 0.0
  %3722 = vmatpush1.msra.mxu0 0.0
  %3723 = vmatprep.subr.mxu0 0.0
  %3724 = vmatpush1.msra.mxu0 0.0
  %3725 = vmatprep.subr.mxu0 0.0
  %3726 = vmatpush1.msra.mxu0 0.0
  %3727 = vmatprep.subr.mxu0 0.0
  %3728 = vmatpush1.msra.mxu0 0.0
  %3729 = vmatprep.subr.mxu0 0.0
  %3730 = vmatpush1.msra.mxu0 0.0
  %3731 = vmatprep.subr.mxu0 0.0
  %3732 = vmatpush1.msra.mxu0 0.0
  %3733 = vmatprep.subr.mxu0 0.0
  %3734 = vmatpush1.msra.mxu0 0.0
  %3735 = vmatprep.subr.mxu0 0.0
  %3736 = vmatpush1.msra.mxu0 0.0
  %3737 = vmatprep.subr.mxu0 0.0
  %3738 = vmatpush1.msra.mxu0 0.0
  %3739 = vmatprep.subr.mxu0 0.0
  %3740 = vmatpush1.msra.mxu0 0.0
  %3741 = vmatprep.subr.mxu0 0.0
  %3742 = vmatpush1.msra.mxu0 0.0
  %3743 = vmatprep.subr.mxu0 0.0
  %3744 = vmatpush1.msra.mxu0 0.0
  %3745 = vmatprep.subr.mxu0 0.0
  %3746 = vmatpush1.msra.mxu0 0.0
  %3747 = vmatprep.subr.mxu0 0.0
  %3748 = vmatpush1.msra.mxu0 0.0
  %3749 = vmatprep.subr.mxu0 0.0
  %3750 = vmatpush1.msra.mxu0 0.0
  %3751 = vmatprep.mubr.f32.mxu0 0.0
  %3752 = vmatmul.mubr.f32.gmra.mrb[0].mxu0 %v3685
  %v3753 = vpop.f32.mrb[0].mxu0
  %v3754 = vadd.f32 0.0, %v3753
  %v3755 = vpop.f32.mrb[0].mxu0
  %3756 = vdwg.mxu0
  %v3757 = vadd.f32 %v3684, %v3754
  %v3758 = vxor.u32 %v3757, 2147483648
  %v3759 = vmul.f32 %v3758, 1.442695
  %v3760 = vpow.pop %v3759
  %v3761 = vadd.f32 %v3760, 1.0
  %v3762 = vrcp.pop %v3761
  %v3763 = vmul.f32 1.0, %v3762
  %v3764 = vtanh.pop %v3757
  %v3765 = vmul.f32 %v3763, %v3672
  %3767 = vrot.lane.b32.xlu0 %v3764, 64
  %v3768 = vpop.permute.xlu0 %3767
  %v3770 = vmul.f32 %v3763, %v3768
  %3772 = vrot.lane.b32.xlu0 %v3770, 32
  %v3773 = vpop.permute.xlu0 %3772
  %v3775 = vadd.f32 %v3765, %v3773
  %v3776 = vtanh.pop %v3775
  %3778 = vrot.lane.b32.xlu0 %v3776, 64
  %v3779 = vpop.permute.xlu0 %3778
  %v3781 = vmul.f32 %v3763, %v3779
  %3783 = vrot.lane.b32.xlu0 %v3781, 32
  %v3784 = vpop.permute.xlu0 %3783
  %3786 = vst.msk [vmem:[#allocation3 + $0x28] sm:$0xff] %vm216, %v3784
  %v3787 = vld [vmem:[#allocation2 + $0x30] sm:$0xff]
  %v3788 = vsel %vm216, %v3784, 0
  %3790 = vmatprep.subr.mxu0 0.0
  %3791 = vmatpush1.msra.mxu0 %v3165
  %3792 = vmatprep.subr.mxu0 0.0
  %3793 = vmatpush1.msra.mxu0 %v3166
  %3794 = vmatprep.subr.mxu0 0.0
  %3795 = vmatpush1.msra.mxu0 %v3167
  %3796 = vmatprep.subr.mxu0 0.0
  %3797 = vmatpush1.msra.mxu0 %v3168
  %3798 = vmatprep.subr.mxu0 0.0
  %3799 = vmatpush1.msra.mxu0 0.0
  %3800 = vmatprep.subr.mxu0 0.0
  %3801 = vmatpush1.msra.mxu0 0.0
  %3802 = vmatprep.subr.mxu0 0.0
  %3803 = vmatpush1.msra.mxu0 0.0
  %3804 = vmatprep.subr.mxu0 0.0
  %3805 = vmatpush1.msra.mxu0 0.0
  %3806 = vmatprep.subr.mxu0 0.0
  %3807 = vmatpush1.msra.mxu0 0.0
  %3808 = vmatprep.subr.mxu0 0.0
  %3809 = vmatpush1.msra.mxu0 0.0
  %3810 = vmatprep.subr.mxu0 0.0
  %3811 = vmatpush1.msra.mxu0 0.0
  %3812 = vmatprep.subr.mxu0 0.0
  %3813 = vmatpush1.msra.mxu0 0.0
  %3814 = vmatprep.subr.mxu0 0.0
  %3815 = vmatpush1.msra.mxu0 0.0
  %3816 = vmatprep.subr.mxu0 0.0
  %3817 = vmatpush1.msra.mxu0 0.0
  %3818 = vmatprep.subr.mxu0 0.0
  %3819 = vmatpush1.msra.mxu0 0.0
  %3820 = vmatprep.subr.mxu0 0.0
  %3821 = vmatpush1.msra.mxu0 0.0
  %3822 = vmatprep.subr.mxu0 0.0
  %3823 = vmatpush1.msra.mxu0 0.0
  %3824 = vmatprep.subr.mxu0 0.0
  %3825 = vmatpush1.msra.mxu0 0.0
  %3826 = vmatprep.subr.mxu0 0.0
  %3827 = vmatpush1.msra.mxu0 0.0
  %3828 = vmatprep.subr.mxu0 0.0
  %3829 = vmatpush1.msra.mxu0 0.0
  %3830 = vmatprep.subr.mxu0 0.0
  %3831 = vmatpush1.msra.mxu0 0.0
  %3832 = vmatprep.subr.mxu0 0.0
  %3833 = vmatpush1.msra.mxu0 0.0
  %3834 = vmatprep.subr.mxu0 0.0
  %3835 = vmatpush1.msra.mxu0 0.0
  %3836 = vmatprep.subr.mxu0 0.0
  %3837 = vmatpush1.msra.mxu0 0.0
  %3838 = vmatprep.subr.mxu0 0.0
  %3839 = vmatpush1.msra.mxu0 0.0
  %3840 = vmatprep.subr.mxu0 0.0
  %3841 = vmatpush1.msra.mxu0 0.0
  %3842 = vmatprep.subr.mxu0 0.0
  %3843 = vmatpush1.msra.mxu0 0.0
  %3844 = vmatprep.subr.mxu0 0.0
  %3845 = vmatpush1.msra.mxu0 0.0
  %3846 = vmatprep.subr.mxu0 0.0
  %3847 = vmatpush1.msra.mxu0 0.0
  %3848 = vmatprep.subr.mxu0 0.0
  %3849 = vmatpush1.msra.mxu0 0.0
  %3850 = vmatprep.subr.mxu0 0.0
  %3851 = vmatpush1.msra.mxu0 0.0
  %3852 = vmatprep.subr.mxu0 0.0
  %3853 = vmatpush1.msra.mxu0 0.0
  %3854 = vmatprep.mubr.f32.mxu0 0.0
  %3855 = vmatmul.mubr.f32.gmra.mrb[0].mxu0 %v3788
  %v3856 = vpop.f32.mrb[0].mxu0
  %v3857 = vadd.f32 0.0, %v3856
  %v3858 = vpop.f32.mrb[0].mxu0
  %3859 = vdwg.mxu0
  %v3860 = vadd.f32 %v3787, %v3857
  %v3861 = vxor.u32 %v3860, 2147483648
  %v3862 = vmul.f32 %v3861, 1.442695
  %v3863 = vpow.pop %v3862
  %v3864 = vadd.f32 %v3863, 1.0
  %v3865 = vrcp.pop %v3864
  %v3866 = vmul.f32 1.0, %v3865
  %v3867 = vtanh.pop %v3860
  %v3868 = vmul.f32 %v3866, %v3775
  %3870 = vrot.lane.b32.xlu0 %v3867, 64
  %v3871 = vpop.permute.xlu0 %3870
  %v3873 = vmul.f32 %v3866, %v3871
  %3875 = vrot.lane.b32.xlu0 %v3873, 32
  %v3876 = vpop.permute.xlu0 %3875
  %v3878 = vadd.f32 %v3868, %v3876
  %v3879 = vtanh.pop %v3878
  %3881 = vrot.lane.b32.xlu0 %v3879, 64
  %v3882 = vpop.permute.xlu0 %3881
  %v3884 = vmul.f32 %v3866, %v3882
  %3886 = vrot.lane.b32.xlu0 %v3884, 32
  %v3887 = vpop.permute.xlu0 %3886
  %3889 = vst.msk [vmem:[#allocation3 + $0x30] sm:$0xff] %vm216, %v3887
  %v3890 = vld [vmem:[#allocation2 + $0x38] sm:$0xff]
  %v3891 = vsel %vm216, %v3887, 0
  %3893 = vmatprep.subr.mxu0 0.0
  %3894 = vmatpush1.msra.mxu0 %v3165
  %3895 = vmatprep.subr.mxu0 0.0
  %3896 = vmatpush1.msra.mxu0 %v3166
  %3897 = vmatprep.subr.mxu0 0.0
  %3898 = vmatpush1.msra.mxu0 %v3167
  %3899 = vmatprep.subr.mxu0 0.0
  %3900 = vmatpush1.msra.mxu0 %v3168
  %3901 = vmatprep.subr.mxu0 0.0
  %3902 = vmatpush1.msra.mxu0 0.0
  %3903 = vmatprep.subr.mxu0 0.0
  %3904 = vmatpush1.msra.mxu0 0.0
  %3905 = vmatprep.subr.mxu0 0.0
  %3906 = vmatpush1.msra.mxu0 0.0
  %3907 = vmatprep.subr.mxu0 0.0
  %3908 = vmatpush1.msra.mxu0 0.0
  %3909 = vmatprep.subr.mxu0 0.0
  %3910 = vmatpush1.msra.mxu0 0.0
  %3911 = vmatprep.subr.mxu0 0.0
  %3912 = vmatpush1.msra.mxu0 0.0
  %3913 = vmatprep.subr.mxu0 0.0
  %3914 = vmatpush1.msra.mxu0 0.0
  %3915 = vmatprep.subr.mxu0 0.0
  %3916 = vmatpush1.msra.mxu0 0.0
  %3917 = vmatprep.subr.mxu0 0.0
  %3918 = vmatpush1.msra.mxu0 0.0
  %3919 = vmatprep.subr.mxu0 0.0
  %3920 = vmatpush1.msra.mxu0 0.0
  %3921 = vmatprep.subr.mxu0 0.0
  %3922 = vmatpush1.msra.mxu0 0.0
  %3923 = vmatprep.subr.mxu0 0.0
  %3924 = vmatpush1.msra.mxu0 0.0
  %3925 = vmatprep.subr.mxu0 0.0
  %3926 = vmatpush1.msra.mxu0 0.0
  %3927 = vmatprep.subr.mxu0 0.0
  %3928 = vmatpush1.msra.mxu0 0.0
  %3929 = vmatprep.subr.mxu0 0.0
  %3930 = vmatpush1.msra.mxu0 0.0
  %3931 = vmatprep.subr.mxu0 0.0
  %3932 = vmatpush1.msra.mxu0 0.0
  %3933 = vmatprep.subr.mxu0 0.0
  %3934 = vmatpush1.msra.mxu0 0.0
  %3935 = vmatprep.subr.mxu0 0.0
  %3936 = vmatpush1.msra.mxu0 0.0
  %3937 = vmatprep.subr.mxu0 0.0
  %3938 = vmatpush1.msra.mxu0 0.0
  %3939 = vmatprep.subr.mxu0 0.0
  %3940 = vmatpush1.msra.mxu0 0.0
  %3941 = vmatprep.subr.mxu0 0.0
  %3942 = vmatpush1.msra.mxu0 0.0
  %3943 = vmatprep.subr.mxu0 0.0
  %3944 = vmatpush1.msra.mxu0 0.0
  %3945 = vmatprep.subr.mxu0 0.0
  %3946 = vmatpush1.msra.mxu0 0.0
  %3947 = vmatprep.subr.mxu0 0.0
  %3948 = vmatpush1.msra.mxu0 0.0
  %3949 = vmatprep.subr.mxu0 0.0
  %3950 = vmatpush1.msra.mxu0 0.0
  %3951 = vmatprep.subr.mxu0 0.0
  %3952 = vmatpush1.msra.mxu0 0.0
  %3953 = vmatprep.subr.mxu0 0.0
  %3954 = vmatpush1.msra.mxu0 0.0
  %3955 = vmatprep.subr.mxu0 0.0
  %3956 = vmatpush1.msra.mxu0 0.0
  %3957 = vmatprep.mubr.f32.mxu0 0.0
  %3958 = vmatmul.mubr.f32.gmra.mrb[0].mxu0 %v3891
  %v3959 = vpop.f32.mrb[0].mxu0
  %v3960 = vadd.f32 0.0, %v3959
  %v3961 = vpop.f32.mrb[0].mxu0
  %3962 = vdwg.mxu0
  %v3963 = vadd.f32 %v3890, %v3960
  %v3964 = vxor.u32 %v3963, 2147483648
  %v3965 = vmul.f32 %v3964, 1.442695
  %v3966 = vpow.pop %v3965
  %v3967 = vadd.f32 %v3966, 1.0
  %v3968 = vrcp.pop %v3967
  %v3969 = vmul.f32 1.0, %v3968
  %v3970 = vtanh.pop %v3963
  %v3971 = vmul.f32 %v3969, %v3878
  %3973 = vrot.lane.b32.xlu0 %v3970, 64
  %v3974 = vpop.permute.xlu0 %3973
  %v3976 = vmul.f32 %v3969, %v3974
  %3978 = vrot.lane.b32.xlu0 %v3976, 32
  %v3979 = vpop.permute.xlu0 %3978
  %v3981 = vadd.f32 %v3971, %v3979
  %v3982 = vtanh.pop %v3981
  %3984 = vrot.lane.b32.xlu0 %v3982, 64
  %v3985 = vpop.permute.xlu0 %3984
  %v3987 = vmul.f32 %v3969, %v3985
  %3989 = vrot.lane.b32.xlu0 %v3987, 32
  %v3990 = vpop.permute.xlu0 %3989
  %3992 = vst.msk [vmem:[#allocation3 + $0x38] sm:$0xff] %vm216, %v3990
  %v3993 = vld [vmem:[#allocation3] sm:$0xff]
  %v3994 = vld [vmem:[#allocation3 + $0x8] sm:$0xff]
  %v3995 = vld [vmem:[#allocation3 + $0x10] sm:$0xff]
  %v3996 = vld [vmem:[#allocation3 + $0x18] sm:$0xff]
  %v3997 = vld [vmem:[#allocation3 + $0x20] sm:$0xff]
  %v3998 = vld [vmem:[#allocation3 + $0x28] sm:$0xff]
  %v3999 = vld [vmem:[#allocation3 + $0x30] sm:$0xff]
  %v4000 = vld [vmem:[#allocation3 + $0x38] sm:$0xff]
  %v4001 = vld [vmem:[%s14] sm:$0xff]
  %v4002 = vld [vmem:[%s14 + $0x8] sm:$0xff]
  %v4003 = vld [vmem:[%s14 + $0x10] sm:$0xff]
  %v4004 = vld [vmem:[%s14 + $0x18] sm:$0xff]
  %v4005 = vld [vmem:[%s15] sm:$0x1]
  %v4007 = vlaneseq
  %v4008 = vshrl.u32 %v4007, 7
  %v4009 = vsub.s32 0, %v4008
  %v4010 = vrot.slane %v4005, %v4009
  %v4013 = vsel %vm216, %v3993, 0
  %v4016 = vsel %vm216, %v3994, 0
  %v4019 = vsel %vm216, %v3995, 0
  %v4022 = vsel %vm216, %v3996, 0
  %v4025 = vsel %vm216, %v3997, 0
  %v4028 = vsel %vm216, %v3998, 0
  %v4031 = vsel %vm216, %v3999, 0
  %v4034 = vsel %vm216, %v4000, 0
  %4036 = vmatprep.subr.mxu0 0.0
  %4037 = vmatpush1.msra.mxu0 %v4001
  %4038 = vmatprep.subr.mxu0 0.0
  %4039 = vmatpush1.msra.mxu0 %v4002
  %4040 = vmatprep.subr.mxu0 0.0
  %4041 = vmatpush1.msra.mxu0 %v4003
  %4042 = vmatprep.subr.mxu0 0.0
  %4043 = vmatpush1.msra.mxu0 %v4004
  %4044 = vmatprep.subr.mxu0 0.0
  %4045 = vmatpush1.msra.mxu0 0.0
  %4046 = vmatprep.subr.mxu0 0.0
  %4047 = vmatpush1.msra.mxu0 0.0
  %4048 = vmatprep.subr.mxu0 0.0
  %4049 = vmatpush1.msra.mxu0 0.0
  %4050 = vmatprep.subr.mxu0 0.0
  %4051 = vmatpush1.msra.mxu0 0.0
  %4052 = vmatprep.subr.mxu0 0.0
  %4053 = vmatpush1.msra.mxu0 0.0
  %4054 = vmatprep.subr.mxu0 0.0
  %4055 = vmatpush1.msra.mxu0 0.0
  %4056 = vmatprep.subr.mxu0 0.0
  %4057 = vmatpush1.msra.mxu0 0.0
  %4058 = vmatprep.subr.mxu0 0.0
  %4059 = vmatpush1.msra.mxu0 0.0
  %4060 = vmatprep.subr.mxu0 0.0
  %4061 = vmatpush1.msra.mxu0 0.0
  %4062 = vmatprep.subr.mxu0 0.0
  %4063 = vmatpush1.msra.mxu0 0.0
  %4064 = vmatprep.subr.mxu0 0.0
  %4065 = vmatpush1.msra.mxu0 0.0
  %4066 = vmatprep.subr.mxu0 0.0
  %4067 = vmatpush1.msra.mxu0 0.0
  %4068 = vmatprep.subr.mxu0 0.0
  %4069 = vmatpush1.msra.mxu0 0.0
  %4070 = vmatprep.subr.mxu0 0.0
  %4071 = vmatpush1.msra.mxu0 0.0
  %4072 = vmatprep.subr.mxu0 0.0
  %4073 = vmatpush1.msra.mxu0 0.0
  %4074 = vmatprep.subr.mxu0 0.0
  %4075 = vmatpush1.msra.mxu0 0.0
  %4076 = vmatprep.subr.mxu0 0.0
  %4077 = vmatpush1.msra.mxu0 0.0
  %4078 = vmatprep.subr.mxu0 0.0
  %4079 = vmatpush1.msra.mxu0 0.0
  %4080 = vmatprep.subr.mxu0 0.0
  %4081 = vmatpush1.msra.mxu0 0.0
  %4082 = vmatprep.subr.mxu0 0.0
  %4083 = vmatpush1.msra.mxu0 0.0
  %4084 = vmatprep.subr.mxu0 0.0
  %4085 = vmatpush1.msra.mxu0 0.0
  %4086 = vmatprep.subr.mxu0 0.0
  %4087 = vmatpush1.msra.mxu0 0.0
  %4088 = vmatprep.subr.mxu0 0.0
  %4089 = vmatpush1.msra.mxu0 0.0
  %4090 = vmatprep.subr.mxu0 0.0
  %4091 = vmatpush1.msra.mxu0 0.0
  %4092 = vmatprep.subr.mxu0 0.0
  %4093 = vmatpush1.msra.mxu0 0.0
  %4094 = vmatprep.subr.mxu0 0.0
  %4095 = vmatpush1.msra.mxu0 0.0
  %4096 = vmatprep.subr.mxu0 0.0
  %4097 = vmatpush1.msra.mxu0 0.0
  %4098 = vmatprep.subr.mxu0 0.0
  %4099 = vmatpush1.msra.mxu0 0.0
  %4100 = vmatprep.mubr.f32.mxu0 0.0
  %4101 = vmatmul.mubr.f32.gmra.mrb[0].mxu0 %v4013
  %v4102 = vpop.f32.mrb[0].mxu0
  %v4103 = vadd.f32 %v4010, %v4102
  %v4104 = vpop.f32.mrb[0].mxu0
  %4105 = vmatprep.mubr.f32.mxu0 0.0
  %4106 = vmatmul.mubr.f32.gmra.mrb[0].mxu0 %v4016
  %v4107 = vpop.f32.mrb[0].mxu0
  %v4108 = vadd.f32 %v4010, %v4107
  %v4109 = vpop.f32.mrb[0].mxu0
  %4110 = vmatprep.mubr.f32.mxu0 0.0
  %4111 = vmatmul.mubr.f32.gmra.mrb[0].mxu0 %v4019
  %v4112 = vpop.f32.mrb[0].mxu0
  %v4113 = vadd.f32 %v4010, %v4112
  %v4114 = vpop.f32.mrb[0].mxu0
  %4115 = vmatprep.mubr.f32.mxu0 0.0
  %4116 = vmatmul.mubr.f32.gmra.mrb[0].mxu0 %v4022
  %v4117 = vpop.f32.mrb[0].mxu0
  %v4118 = vadd.f32 %v4010, %v4117
  %v4119 = vpop.f32.mrb[0].mxu0
  %4120 = vmatprep.mubr.f32.mxu0 0.0
  %4121 = vmatmul.mubr.f32.gmra.mrb[0].mxu0 %v4025
  %v4122 = vpop.f32.mrb[0].mxu0
  %v4123 = vadd.f32 %v4010, %v4122
  %v4124 = vpop.f32.mrb[0].mxu0
  %4125 = vmatprep.mubr.f32.mxu0 0.0
  %4126 = vmatmul.mubr.f32.gmra.mrb[0].mxu0 %v4028
  %v4127 = vpop.f32.mrb[0].mxu0
  %v4128 = vadd.f32 %v4010, %v4127
  %v4129 = vpop.f32.mrb[0].mxu0
  %4130 = vmatprep.mubr.f32.mxu0 0.0
  %4131 = vmatmul.mubr.f32.gmra.mrb[0].mxu0 %v4031
  %v4132 = vpop.f32.mrb[0].mxu0
  %v4133 = vadd.f32 %v4010, %v4132
  %v4134 = vpop.f32.mrb[0].mxu0
  %4135 = vmatprep.mubr.f32.mxu0 0.0
  %4136 = vmatmul.mubr.f32.gmra.mrb[0].mxu0 %v4034
  %v4137 = vpop.f32.mrb[0].mxu0
  %v4138 = vadd.f32 %v4010, %v4137
  %v4139 = vpop.f32.mrb[0].mxu0
  %4140 = vdwg.mxu0
  %v4141 = vmax.f32 %v4103, 0.0
  %v4142 = vmax.f32 %v4108, 0.0
  %v4143 = vmax.f32 %v4113, 0.0
  %v4144 = vmax.f32 %v4118, 0.0
  %v4145 = vmax.f32 %v4123, 0.0
  %v4146 = vmax.f32 %v4128, 0.0
  %v4147 = vmax.f32 %v4133, 0.0
  %v4148 = vmax.f32 %v4138, 0.0
  %v4149 = vand.u32 2147483647, %v4103
  %v4150 = vand.u32 2147483647, %v4108
  %v4151 = vand.u32 2147483647, %v4113
  %v4152 = vand.u32 2147483647, %v4118
  %v4153 = vand.u32 2147483647, %v4123
  %v4154 = vand.u32 2147483647, %v4128
  %v4155 = vand.u32 2147483647, %v4133
  %v4156 = vand.u32 2147483647, %v4138
  %v4157 = vsub.f32 0.0, %v4149
  %v4158 = vsub.f32 0.0, %v4150
  %v4159 = vsub.f32 0.0, %v4151
  %v4160 = vsub.f32 0.0, %v4152
  %v4161 = vsub.f32 0.0, %v4153
  %v4162 = vsub.f32 0.0, %v4154
  %v4163 = vsub.f32 0.0, %v4155
  %v4164 = vsub.f32 0.0, %v4156
  %v4165 = vmul.f32 %v4157, 1.442695
  %v4166 = vpow.pop %v4165
  %v4167 = vmul.f32 %v4158, 1.442695
  %v4168 = vpow.pop %v4167
  %v4169 = vmul.f32 %v4159, 1.442695
  %v4170 = vpow.pop %v4169
  %v4171 = vmul.f32 %v4160, 1.442695
  %v4172 = vpow.pop %v4171
  %v4173 = vmul.f32 %v4161, 1.442695
  %v4174 = vpow.pop %v4173
  %v4175 = vmul.f32 %v4162, 1.442695
  %v4176 = vpow.pop %v4175
  %v4177 = vmul.f32 %v4163, 1.442695
  %v4178 = vpow.pop %v4177
  %v4179 = vmul.f32 %v4164, 1.442695
  %v4180 = vpow.pop %v4179
  %v4181 = vadd.f32 %v4166, 1.0
  %v4182 = vlog2.pop %v4181
  %v4183 = vmul.f32 %v4182, 0.6931472
  %v4184 = vmul.f32 -0.5, %v4166
  %v4185 = vadd.f32 %v4184, 1.0
  %v4186 = vmul.f32 %v4185, %v4166
  %v4187 = vand.u32 2147483647, %v4166
  %vm4188 = vcmp.lt.f32.partialorder %v4187, 0.0004427343
  %v4189 = vsel %vm4188, %v4186, %v4183
  %v4190 = vadd.f32 %v4168, 1.0
  %v4191 = vlog2.pop %v4190
  %v4192 = vmul.f32 %v4191, 0.6931472
  %v4193 = vmul.f32 -0.5, %v4168
  %v4194 = vadd.f32 %v4193, 1.0
  %v4195 = vmul.f32 %v4194, %v4168
  %v4196 = vand.u32 2147483647, %v4168
  %vm4197 = vcmp.lt.f32.partialorder %v4196, 0.0004427343
  %v4198 = vsel %vm4197, %v4195, %v4192
  %v4199 = vadd.f32 %v4170, 1.0
  %v4200 = vlog2.pop %v4199
  %v4201 = vmul.f32 %v4200, 0.6931472
  %v4202 = vmul.f32 -0.5, %v4170
  %v4203 = vadd.f32 %v4202, 1.0
  %v4204 = vmul.f32 %v4203, %v4170
  %v4205 = vand.u32 2147483647, %v4170
  %vm4206 = vcmp.lt.f32.partialorder %v4205, 0.0004427343
  %v4207 = vsel %vm4206, %v4204, %v4201
  %v4208 = vadd.f32 %v4172, 1.0
  %v4209 = vlog2.pop %v4208
  %v4210 = vmul.f32 %v4209, 0.6931472
  %v4211 = vmul.f32 -0.5, %v4172
  %v4212 = vadd.f32 %v4211, 1.0
  %v4213 = vmul.f32 %v4212, %v4172
  %v4214 = vand.u32 2147483647, %v4172
  %vm4215 = vcmp.lt.f32.partialorder %v4214, 0.0004427343
  %v4216 = vsel %vm4215, %v4213, %v4210
  %v4217 = vadd.f32 %v4174, 1.0
  %v4218 = vlog2.pop %v4217
  %v4219 = vmul.f32 %v4218, 0.6931472
  %v4220 = vmul.f32 -0.5, %v4174
  %v4221 = vadd.f32 %v4220, 1.0
  %v4222 = vmul.f32 %v4221, %v4174
  %v4223 = vand.u32 2147483647, %v4174
  %vm4224 = vcmp.lt.f32.partialorder %v4223, 0.0004427343
  %v4225 = vsel %vm4224, %v4222, %v4219
  %v4226 = vadd.f32 %v4176, 1.0
  %v4227 = vlog2.pop %v4226
  %v4228 = vmul.f32 %v4227, 0.6931472
  %v4229 = vmul.f32 -0.5, %v4176
  %v4230 = vadd.f32 %v4229, 1.0
  %v4231 = vmul.f32 %v4230, %v4176
  %v4232 = vand.u32 2147483647, %v4176
  %vm4233 = vcmp.lt.f32.partialorder %v4232, 0.0004427343
  %v4234 = vsel %vm4233, %v4231, %v4228
  %v4235 = vadd.f32 %v4178, 1.0
  %v4236 = vlog2.pop %v4235
  %v4237 = vmul.f32 %v4236, 0.6931472
  %v4238 = vmul.f32 -0.5, %v4178
  %v4239 = vadd.f32 %v4238, 1.0
  %v4240 = vmul.f32 %v4239, %v4178
  %v4241 = vand.u32 2147483647, %v4178
  %vm4242 = vcmp.lt.f32.partialorder %v4241, 0.0004427343
  %v4243 = vsel %vm4242, %v4240, %v4237
  %v4244 = vadd.f32 %v4180, 1.0
  %v4245 = vlog2.pop %v4244
  %v4246 = vmul.f32 %v4245, 0.6931472
  %v4247 = vmul.f32 -0.5, %v4180
  %v4248 = vadd.f32 %v4247, 1.0
  %v4249 = vmul.f32 %v4248, %v4180
  %v4250 = vand.u32 2147483647, %v4180
  %vm4251 = vcmp.lt.f32.partialorder %v4250, 0.0004427343
  %v4252 = vsel %vm4251, %v4249, %v4246
  %v4253 = vadd.f32 %v4141, %v4189
  %v4254 = vadd.f32 %v4142, %v4198
  %v4255 = vadd.f32 %v4143, %v4207
  %v4256 = vadd.f32 %v4144, %v4216
  %v4257 = vadd.f32 %v4145, %v4225
  %v4258 = vadd.f32 %v4146, %v4234
  %v4259 = vadd.f32 %v4147, %v4243
  %v4260 = vadd.f32 %v4148, %v4252
  %v4261 = vlaneseq
  %v4262 = vand.u32 %v4261, 127
  %vm4263 = vcmp.lt.s32.totalorder %v4262, 2
  %v4264 = vmul.f32 %v4253, 0.95
  %v4265 = vmul.f32 %v4254, 0.95
  %v4266 = vmul.f32 %v4255, 0.95
  %v4267 = vmul.f32 %v4256, 0.95
  %v4268 = vmul.f32 %v4257, 0.95
  %v4269 = vmul.f32 %v4258, 0.95
  %v4270 = vmul.f32 %v4259, 0.95
  %v4271 = vmul.f32 %v4260, 0.95
  %v4272 = vadd.f32 %v4264, 0.05
  %v4273 = vadd.f32 %v4265, 0.05
  %v4274 = vadd.f32 %v4266, 0.05
  %v4275 = vadd.f32 %v4267, 0.05
  %v4276 = vadd.f32 %v4268, 0.05
  %v4277 = vadd.f32 %v4269, 0.05
  %v4278 = vadd.f32 %v4270, 0.05
  %v4279 = vadd.f32 %v4271, 0.05
  %v4280 = vsel %vm4263, %v4103, %v4272
  %v4281 = vsel %vm4263, %v4108, %v4273
  %v4282 = vsel %vm4263, %v4113, %v4274
  %v4283 = vsel %vm4263, %v4118, %v4275
  %v4284 = vsel %vm4263, %v4123, %v4276
  %v4285 = vsel %vm4263, %v4128, %v4277
  %v4286 = vsel %vm4263, %v4133, %v4278
  %v4287 = vsel %vm4263, %v4138, %v4279
  %4288 = vst.msk [vmem:[%s16] sm:$0xff] %vm2039, %v4280
  %4289 = vst.msk [vmem:[%s16 + $0x8] sm:$0xff] %vm2039, %v4281
  %4290 = vst.msk [vmem:[%s16 + $0x10] sm:$0xff] %vm2039, %v4282
  %4291 = vst.msk [vmem:[%s16 + $0x18] sm:$0xff] %vm2039, %v4283
  %4292 = vst.msk [vmem:[%s16 + $0x20] sm:$0xff] %vm2039, %v4284
  %4293 = vst.msk [vmem:[%s16 + $0x28] sm:$0xff] %vm2039, %v4285
  %4294 = vst.msk [vmem:[%s16 + $0x30] sm:$0xff] %vm2039, %v4286
  %4295 = vst.msk [vmem:[%s16 + $0x38] sm:$0xff] %vm2039, %v4287
  // Predicated region
  $region66: #{lstm_seq2seq_forward.1} parent=0 // pred_check
    _
  $region67: #{lstm_seq2seq_forward.1} parent=0 // pred_check_branch
    %4297 = sbr.rel (0) target = $region69
  $region68: #{lstm_seq2seq_forward.1} parent=0 // pred_region
    _
  $region69: #{lstm_seq2seq_forward.1} parent=0 // pred_fallthru
    _
  // Predicated region
  $region70: #{lstm_seq2seq_forward.1} parent=0 // pred_check
    _
  $region71: #{lstm_seq2seq_forward.1} parent=0 // pred_check_branch
    %4299 = sbr.rel (0) target = $region73
  $region72: #{lstm_seq2seq_forward.1} parent=0 // pred_region
    _
  $region73: #{lstm_seq2seq_forward.1} parent=0 // pred_fallthru
    _

</llo_original>
